<compile_context>
chip_gen: v7x
topology: tpu7x:2x2x1
jax: 0.10.0
libtpu: 0.0.40
codegen_flags: <defaults>
</compile_context>

<pallas_src>
import functools

import jax
import jax.numpy as jnp
from jax.experimental import pallas as pl
from jax.experimental.pallas import tpu as pltpu


def _round_up(v, m):
    return (v + m - 1) // m * m


# ---------------------------------------------------------------------------
# Kernel
# ---------------------------------------------------------------------------
def _ggnn_kernel(num_layers, tm, hp, cdtype, a_resident,
                 h0_ref, a_ref, wf_ref, wh_ref, bi_ref, bh_ref, fcw_ref, fcb_ref,
                 out_ref, h_scr, dma_sem, *rest):
    """One grid step = (layer l, destination-row block i)."""
    a_scr = rest[0] if a_resident else None
    l = pl.program_id(0)
    i = pl.program_id(1)

    # One-time init: DMA the padded node features (initial hidden state) into the
    # parity-0 hidden buffer and, on the small-graph path, the whole int8 adjacency
    # into VMEM.  Neither occupies a pipelined (double-buffered) input slot.
    @pl.when(jnp.logical_and(l == 0, i == 0))
    def _init():
        h_cp = pltpu.make_async_copy(h0_ref, h_scr.at[0], dma_sem.at[0])
        h_cp.start()
        if a_resident:
            a_cp = pltpu.make_async_copy(a_ref, a_scr, dma_sem.at[1])
            a_cp.start()
            a_cp.wait()
        h_cp.wait()

    row0 = pl.multiple_of(i * tm, tm)

    def step(s, d):
        # s / d are *static* ping-pong slots: read layer-l hidden from slot s and
        # write the layer-(l+1) hidden into slot d, so blocks of the same layer
        # never observe partially-updated state.
        if a_resident:
            a_blk = a_scr[pl.ds(row0, tm), :]
        else:
            a_blk = a_ref[...]
        a_blk = a_blk.astype(cdtype)           # int8 -> bf16/f32 upcast (VPU, hidden)

        h_all = h_scr[s]                       # (NP, HP) f32  previous-layer hidden
        h_blk = h_scr[s, pl.ds(row0, tm), :]   # (tm, HP) f32

        # Reassociated message + aggregation:
        #   agg_raw = A_blk @ h_prev
        #   gi      = agg_raw @ (W[l] @ w_ih^T) + b_ih
        agg_raw = jnp.dot(a_blk, h_all.astype(cdtype),
                          preferred_element_type=jnp.float32)               # (tm, HP)
        gi = jnp.dot(agg_raw.astype(cdtype), wf_ref[...],
                     preferred_element_type=jnp.float32) + bi_ref[...]      # (tm, 3HP)
        gh = jnp.dot(h_blk.astype(cdtype), wh_ref[...],
                     preferred_element_type=jnp.float32) + bh_ref[...]      # (tm, 3HP)

        r = jax.nn.sigmoid(gi[:, 0 * hp:1 * hp] + gh[:, 0 * hp:1 * hp])
        z = jax.nn.sigmoid(gi[:, 1 * hp:2 * hp] + gh[:, 1 * hp:2 * hp])
        n = jnp.tanh(gi[:, 2 * hp:3 * hp] + r * gh[:, 2 * hp:3 * hp])
        h_new = (1.0 - z) * n + z * h_blk
        h_scr[d, pl.ds(row0, tm), :] = h_new

        # Final layer: Linear(hidden, 1) lane-padded to 128 output columns + clamp.
        @pl.when(l == num_layers - 1)
        def _head():
            y = jnp.dot(h_new.astype(cdtype), fcw_ref[...],
                        preferred_element_type=jnp.float32) + fcb_ref[...]
            out_ref[...] = jnp.clip(y, 0.01, 1.0)

    parity0 = (l % 2) == 0

    @pl.when(parity0)
    def _even():
        step(0, 1)

    @pl.when(jnp.logical_not(parity0))
    def _odd():
        step(1, 0)


# ---------------------------------------------------------------------------
# Parameter packing (PyTorch layout -> lane-aligned, folded kernel layout)
# ---------------------------------------------------------------------------
def _pack_kernel_params(raw, hidden_dim, num_layers, compute_dtype):
    H, L = hidden_dim, num_layers
    HP = _round_up(H, 128)
    f32 = jnp.float32

    w_ih = raw["w_ih"].astype(f32)          # (3H, H) torch GRUCell layout
    w_hh = raw["w_hh"].astype(f32)
    b_ih = raw["b_ih"].astype(f32)
    b_hh = raw["b_hh"].astype(f32)

    # Fold the per-layer GGNN message weight into the GRU input projection:
    #   (A @ h) @ (W[l] @ w_ih^T)  ==  (A @ (h @ W[l])) @ w_ih^T
    wfold = jnp.einsum("lij,kj->lik", raw["W"].astype(f32), w_ih)     # (L, H, 3H)
    w_hh_t = w_hh.T                                                   # (H, 3H)

    Wf = jnp.zeros((L, HP, 3 * HP), f32)
    Wh = jnp.zeros((HP, 3 * HP), f32)
    bi = jnp.zeros((1, 3 * HP), f32)
    bh = jnp.zeros((1, 3 * HP), f32)
    for g in range(3):                                                # r, z, n chunks
        Wf = Wf.at[:, :H, g * HP:g * HP + H].set(wfold[:, :, g * H:(g + 1) * H])
        Wh = Wh.at[:H, g * HP:g * HP + H].set(w_hh_t[:, g * H:(g + 1) * H])
        bi = bi.at[0, g * HP:g * HP + H].set(b_ih[g * H:(g + 1) * H])
        bh = bh.at[0, g * HP:g * HP + H].set(b_hh[g * H:(g + 1) * H])

    fcw = jnp.zeros((HP, 128), f32).at[:H, 0].set(raw["fc_w"][0].astype(f32))
    fcb = jnp.zeros((1, 128), f32).at[0, 0].set(raw["fc_b"][0].astype(f32))

    return {"Wf": Wf.astype(compute_dtype), "Wh": Wh.astype(compute_dtype),
            "bi": bi, "bh": bh,             # biases stay f32 (added post-matmul)
            "fcw": fcw.astype(compute_dtype), "fcb": fcb}


# ---------------------------------------------------------------------------
# Generation-aware tiling / VMEM budgeting
# ---------------------------------------------------------------------------
def _tpu_defaults():
    kind = ""
    try:
        kind = jax.devices()[0].device_kind.lower()
    except Exception:
        pass
    vmem_cap = None
    try:
        vmem_cap = int(pltpu.get_tpu_info().vmem_capacity_bytes)
    except Exception:
        vmem_cap = None
    if not vmem_cap or vmem_cap <= 0:
        vmem_cap = (64 << 20) if ("v7" in kind or "7x" in kind) else (128 << 20)
    return kind, vmem_cap


def _vmem_estimate(n_pad, hp, tm, cb, ab, a_resident):
    state = 2 * n_pad * hp * 4                                     # ping-pong f32 hidden
    adj = n_pad * n_pad * ab if a_resident else 2 * tm * n_pad * ab
    casts = tm * n_pad * cb + (n_pad * hp * cb if cb < 4 else 0)   # operand upcast temps
    weights = 2 * (2 * hp * 3 * hp * cb + hp * 128 * cb + 2 * 3 * hp * 4 + 128 * 4)
    out = 2 * tm * 128 * 4
    return state + adj + casts + weights + out


def _pick_config(n, hp, cb, ab, kind, vmem_cap, row_block, a_resident):
    budget = int(0.80 * vmem_cap)
    if row_block is not None:
        assert row_block % 128 == 0
        tm_opts = [int(row_block)]
    elif "v5" in kind:
        tm_opts = [128]            # matches v5e's 4x(128x128) MXU
    else:
        tm_opts = [256, 128]       # v6e/v7x 256-wide MXU when the budget allows
    res_opts = [True, False] if a_resident is None else [bool(a_resident)]
    for resident in res_opts:      # prefer resident A (1 fetch instead of L fetches)
        for tm in tm_opts:         # prefer the larger row block
            n_pad = _round_up(max(n, tm), tm)
            est = _vmem_estimate(n_pad, hp, tm, cb, ab, resident)
            if est <= budget:
                return tm, resident, n_pad, est
    tm = tm_opts[-1]
    resident = res_opts[-1]
    n_pad = _round_up(max(n, tm), tm)
    return tm, resident, n_pad, _vmem_estimate(n_pad, hp, tm, cb, ab, resident)


# ---------------------------------------------------------------------------
# Forward wrapper
# ---------------------------------------------------------------------------
def ggnn_forward(x, edge_index, raw_params, *, hidden_dim, num_layers,
                 compute_dtype=jnp.bfloat16, adjacency_dtype=jnp.int8,
                 row_block=None, a_resident=None):
    """x: (N, F) float, edge_index: (2, E) int32.  Returns (N, 1) float32."""
    N, F = x.shape
    H = hidden_dim
    assert F <= H, "GatedGraphConv requires num_features <= hidden_dim"
    HP = _round_up(H, 128)
    cb = jnp.dtype(compute_dtype).itemsize
    ab = jnp.dtype(adjacency_dtype).itemsize

    kind, vmem_cap = _tpu_defaults()
    TM, resident, NP, vmem_est = _pick_config(N, HP, cb, ab, kind, vmem_cap,
                                              row_block, a_resident)
    NB = NP // TM

    # ---- plain-JAX glue: pad features, densify the graph into A[dst, src] ----
    h0 = jnp.zeros((NP, HP), jnp.float32).at[:N, :F].set(x.astype(jnp.float32))
    src, dst = edge_index[0], edge_index[1]
    counts = jnp.zeros((NP, NP), jnp.int32).at[dst, src].add(1)
    A = counts.astype(adjacency_dtype)    # 8-bit stream; exact for multiplicity <= 127
    # TODO(synk): for sparse graphs (E << N^2) replace the dense A @ h aggregation with
    # a CSR scalar-prefetch gather (PrefetchScalarGridSpec); cache A / h0 across calls
    # for static graphs; use a wider adjacency_dtype for multigraphs with >127 parallel
    # edges; on v7x split destination rows across the two TensorCores (pl.core_map).

    p = _pack_kernel_params(raw_params, H, num_layers, compute_dtype)
    kernel = functools.partial(_ggnn_kernel, num_layers, TM, HP, compute_dtype, resident)

    a_spec = (pl.BlockSpec(memory_space=pl.ANY) if resident
              else pl.BlockSpec((TM, NP), lambda l, i: (i, 0)))
    last = num_layers - 1

    scratch = [
        pltpu.VMEM((2, NP, HP), jnp.float32),   # ping-pong hidden state (layer parity)
        pltpu.SemaphoreType.DMA((2,)),          # one-time h0 / A DMAs
    ]
    if resident:
        scratch.append(pltpu.VMEM((NP, NP), adjacency_dtype))

    grid_spec = pltpu.PrefetchScalarGridSpec(
        num_scalar_prefetch=0,
        grid=(num_layers, NB),
        in_specs=[
            pl.BlockSpec(memory_space=pl.ANY),                         # h0 (HBM, 1 DMA)
            a_spec,                                                    # A (resident/streamed)
            pl.BlockSpec((None, HP, 3 * HP), lambda l, i: (l, 0, 0)),  # W[l] @ w_ih^T
            pl.BlockSpec((HP, 3 * HP), lambda l, i: (0, 0)),           # w_hh^T
            pl.BlockSpec((1, 3 * HP), lambda l, i: (0, 0)),            # b_ih
            pl.BlockSpec((1, 3 * HP), lambda l, i: (0, 0)),            # b_hh
            pl.BlockSpec((HP, 128), lambda l, i: (0, 0)),              # fc weight (padded)
            pl.BlockSpec((1, 128), lambda l, i: (0, 0)),               # fc bias (padded)
        ],
        # Non-final layers all map to output block 0, so stale buffers are never
        # written back; only the last layer streams real (TM, 128) blocks to HBM.
        out_specs=pl.BlockSpec((TM, 128),
                               lambda l, i: (jnp.where(l == last, i, 0), 0)),
        scratch_shapes=scratch,
    )

    # Scoped-VMEM limit: generous margin over the estimate, clamped per generation
    # (v7x: 64 MiB physical VMEM; v5e/v6e: 128 MiB).
    vmem_limit = int(min(max(int(1.5 * vmem_est) + (2 << 20), 32 << 20),
                         int(0.92 * vmem_cap)))

    out = pl.pallas_call(
        kernel,
        out_shape=jax.ShapeDtypeStruct((NP, 128), jnp.float32),
        grid_spec=grid_spec,
        compiler_params=pltpu.CompilerParams(
            # Both grid axes carry VMEM-resident state -> must stay sequential.
            dimension_semantics=("arbitrary", "arbitrary"),
            vmem_limit_bytes=vmem_limit,
        ),
    )(h0, A, p["Wf"], p["Wh"], p["bi"], p["bh"], p["fcw"], p["fcb"])

    return out[:N, :1]


# ---------------------------------------------------------------------------
# Parameters + pure-JAX reference (PyTorch order)
# ---------------------------------------------------------------------------
def init_params(key, hidden_dim, num_layers):
    """PyTorch-layout parameters (GatedGraphConv weight, GRUCell, Linear)."""
    H = hidden_dim
    k = jax.random.split(key, 7)
    bound = 1.0 / jnp.sqrt(H)
    W = jax.random.uniform(k[0], (num_layers, H, H), jnp.float32, -bound, bound)
    w_ih = jax.random.uniform(k[1], (3 * H, H), jnp.float32, -bound, bound)
    w_hh = jax.random.uniform(k[2], (3 * H, H), jnp.float32, -bound, bound)
    b_ih = jax.random.uniform(k[3], (3 * H,), jnp.float32, -bound, bound)
    b_hh = jax.random.uniform(k[4], (3 * H,), jnp.float32, -bound, bound)
    xb = jnp.sqrt(6.0 / (H + 1))
    fc_w = jax.random.uniform(k[5], (1, H), jnp.float32, -xb, xb)    # xavier_uniform
    fc_b = jax.random.uniform(k[6], (1,), jnp.float32, -bound, bound)
    return {"W": W, "w_ih": w_ih, "w_hh": w_hh, "b_ih": b_ih, "b_hh": b_hh,
            "fc_w": fc_w, "fc_b": fc_b}


def ggnn_reference(x, edge_index, raw, *, hidden_dim, num_layers):
    """f32 reference mirroring PyG GatedGraphConv + torch GRUCell + Linear + clamp."""
    N, F = x.shape
    H = hidden_dim
    h = jnp.pad(x.astype(jnp.float32), ((0, 0), (0, H - F)))
    src, dst = edge_index[0], edge_index[1]
    A = jnp.zeros((N, N), jnp.float32).at[dst, src].add(1.0)
    for l in range(num_layers):
        m = h @ raw["W"][l]
        agg = A @ m
        gi = agg @ raw["w_ih"].T + raw["b_ih"][None, :]
        gh = h @ raw["w_hh"].T + raw["b_hh"][None, :]
        r = jax.nn.sigmoid(gi[:, :H] + gh[:, :H])
        z = jax.nn.sigmoid(gi[:, H:2 * H] + gh[:, H:2 * H])
        n = jnp.tanh(gi[:, 2 * H:] + r * gh[:, 2 * H:])
        h = (1.0 - z) * n + z * h
    y = h @ raw["fc_w"].T + raw["fc_b"][None, :]
    return jnp.clip(y, 0.01, 1.0)


if __name__ == "__main__":
    # nodes, in-features, hidden, layers, edges (small demo shapes)
    N, F, H, L, E = 200, 4, 32, 3, 512

    key = jax.random.PRNGKey(0)
    kx, ke, kp = jax.random.split(key, 3)
    x = jax.random.normal(kx, (N, F), jnp.float32)
    edge_index = jax.random.randint(ke, (2, E), 0, N, dtype=jnp.int32)
    raw = init_params(kp, H, L)

    ref = ggnn_reference(x, edge_index, raw, hidden_dim=H, num_layers=L)

    # Exact-semantics check: f32 matmul operands, resident-A path, multiple row blocks.
    out_f32 = jax.block_until_ready(
        ggnn_forward(x, edge_index, raw, hidden_dim=H, num_layers=L,
                     compute_dtype=jnp.float32, row_block=128))
    assert out_f32.shape == (N, 1)
    assert jnp.allclose(out_f32, ref, rtol=1e-3, atol=1e-3), "f32 kernel mismatch"

    # Fast path (default): bf16 matmul operands + int8 adjacency, auto tiling/residency.
    # Loose sanity bound only -- exact semantics are validated by the f32 run above.
    out_bf16 = jax.block_until_ready(
        ggnn_forward(x, edge_index, raw, hidden_dim=H, num_layers=L))
    assert out_bf16.shape == (N, 1)
    assert float(jnp.max(jnp.abs(out_bf16 - ref))) < 8e-2, "bf16 kernel mismatch"

    # Streamed-A (large-graph) path with the same fast-math settings.
    out_stream = jax.block_until_ready(
        ggnn_forward(x, edge_index, raw, hidden_dim=H, num_layers=L,
                     a_resident=False, row_block=128))
    assert out_stream.shape == (N, 1)
    assert float(jnp.max(jnp.abs(out_stream - ref))) < 8e-2, "streamed-A kernel mismatch"

    print("KERNEL_OK")
</pallas_src>

<mosaic_0001>
module attributes {stable_mosaic.version = 11 : i64} {
  func.func @_ggnn_kernel(%arg0: i32, %arg1: i32, %arg2: memref<256x128xf32, #tpu.memory_space<any>>, %arg3: memref<256x256xi8, #tpu.memory_space<any>>, %arg4: memref<1x128x384xf32, #tpu.memory_space<vmem>>, %arg5: memref<128x384xf32, #tpu.memory_space<vmem>>, %arg6: memref<1x384xf32, #tpu.memory_space<vmem>>, %arg7: memref<1x384xf32, #tpu.memory_space<vmem>>, %arg8: memref<128x128xf32, #tpu.memory_space<vmem>>, %arg9: memref<1x128xf32, #tpu.memory_space<vmem>>, %arg10: memref<128x128xf32, #tpu.memory_space<vmem>>, %arg11: memref<2x256x128xf32, #tpu.memory_space<vmem>>, %arg12: memref<2x!tpu.dma_semaphore, #tpu.memory_space<semaphore_mem>>, %arg13: memref<256x256xi8, #tpu.memory_space<vmem>>) attributes {dimension_semantics = [#tpu.dimension_semantics<arbitrary>, #tpu.dimension_semantics<arbitrary>], iteration_bounds = array<i64: 3, 2>, scalar_prefetch = 0 : i64, scratch_operands = 3 : i64, tpu.core_type = #tpu.core_type<tc>, window_params = [{}, {}, {transform_indices = @transform_2, window_bounds = array<i64: 1, 128, 384>}, {pipeline_mode = #tpu.pipeline_mode<synchronous>, transform_indices = @transform_3, window_bounds = array<i64: 128, 384>}, {pipeline_mode = #tpu.pipeline_mode<synchronous>, transform_indices = @transform_4, window_bounds = array<i64: 1, 384>}, {pipeline_mode = #tpu.pipeline_mode<synchronous>, transform_indices = @transform_5, window_bounds = array<i64: 1, 384>}, {pipeline_mode = #tpu.pipeline_mode<synchronous>, transform_indices = @transform_6, window_bounds = array<i64: 128, 128>}, {pipeline_mode = #tpu.pipeline_mode<synchronous>, transform_indices = @transform_7, window_bounds = array<i64: 1, 128>}, {transform_indices = @transform_8, window_bounds = array<i64: 128, 128>}]} {
    %c0_i32 = arith.constant 0 : i32
    %0 = arith.cmpi eq, %arg0, %c0_i32 : i32
    %c0_i32_0 = arith.constant 0 : i32
    %1 = arith.cmpi eq, %arg1, %c0_i32_0 : i32
    %2 = arith.andi %0, %1 : i1
    %3 = arith.extui %2 : i1 to i32
    %c0_i32_1 = arith.constant 0 : i32
    %4 = arith.cmpi ne, %3, %c0_i32_1 : i32
    scf.if %4 {
      %c0_i32_9 = arith.constant 0 : i32
      %c0_i32_10 = arith.constant 0 : i32
      %c0_i32_11 = arith.constant 0 : i32
      %c0_i32_12 = arith.constant 0 : i32
      %23 = tpu.memref_slice %arg11[%c0_i32_9, %c0_i32_11, %c0_i32_12] : memref<2x256x128xf32, #tpu.memory_space<vmem>> -> memref<1x256x128xf32, #tpu.memory_space<vmem>>
      %24 = tpu.memref_squeeze %23 : memref<1x256x128xf32, #tpu.memory_space<vmem>> -> memref<256x128xf32, #tpu.memory_space<vmem>>
      %25 = tpu.memref_slice %arg12[%c0_i32_10] : memref<2x!tpu.dma_semaphore, #tpu.memory_space<semaphore_mem>> -> memref<1x!tpu.dma_semaphore, #tpu.memory_space<semaphore_mem>>
      %26 = tpu.memref_squeeze %25 : memref<1x!tpu.dma_semaphore, #tpu.memory_space<semaphore_mem>> -> memref<!tpu.dma_semaphore, #tpu.memory_space<semaphore_mem>>
      tpu.enqueue_dma source(%arg2 : memref<256x128xf32, #tpu.memory_space<any>>) target(%24 : memref<256x128xf32, #tpu.memory_space<vmem>>) target_semaphore(%26 : memref<!tpu.dma_semaphore, #tpu.memory_space<semaphore_mem>>)
      %c1_i32_13 = arith.constant 1 : i32
      %27 = tpu.memref_slice %arg12[%c1_i32_13] : memref<2x!tpu.dma_semaphore, #tpu.memory_space<semaphore_mem>> -> memref<1x!tpu.dma_semaphore, #tpu.memory_space<semaphore_mem>>
      %28 = tpu.memref_squeeze %27 : memref<1x!tpu.dma_semaphore, #tpu.memory_space<semaphore_mem>> -> memref<!tpu.dma_semaphore, #tpu.memory_space<semaphore_mem>>
      tpu.enqueue_dma source(%arg3 : memref<256x256xi8, #tpu.memory_space<any>>) target(%arg13 : memref<256x256xi8, #tpu.memory_space<vmem>>) target_semaphore(%28 : memref<!tpu.dma_semaphore, #tpu.memory_space<semaphore_mem>>)
      %c1_i32_14 = arith.constant 1 : i32
      %29 = tpu.memref_slice %arg12[%c1_i32_14] : memref<2x!tpu.dma_semaphore, #tpu.memory_space<semaphore_mem>> -> memref<1x!tpu.dma_semaphore, #tpu.memory_space<semaphore_mem>>
      %30 = tpu.memref_squeeze %29 : memref<1x!tpu.dma_semaphore, #tpu.memory_space<semaphore_mem>> -> memref<!tpu.dma_semaphore, #tpu.memory_space<semaphore_mem>>
      tpu.wait_dma2 semaphore(%30 : memref<!tpu.dma_semaphore, #tpu.memory_space<semaphore_mem>>) src(%arg3 : memref<256x256xi8, #tpu.memory_space<any>>) dst(%arg13 : memref<256x256xi8, #tpu.memory_space<vmem>>)
      %c0_i32_15 = arith.constant 0 : i32
      %c0_i32_16 = arith.constant 0 : i32
      %c0_i32_17 = arith.constant 0 : i32
      %c0_i32_18 = arith.constant 0 : i32
      %31 = tpu.memref_slice %arg11[%c0_i32_15, %c0_i32_17, %c0_i32_18] : memref<2x256x128xf32, #tpu.memory_space<vmem>> -> memref<1x256x128xf32, #tpu.memory_space<vmem>>
      %32 = tpu.memref_squeeze %31 : memref<1x256x128xf32, #tpu.memory_space<vmem>> -> memref<256x128xf32, #tpu.memory_space<vmem>>
      %33 = tpu.memref_slice %arg12[%c0_i32_16] : memref<2x!tpu.dma_semaphore, #tpu.memory_space<semaphore_mem>> -> memref<1x!tpu.dma_semaphore, #tpu.memory_space<semaphore_mem>>
      %34 = tpu.memref_squeeze %33 : memref<1x!tpu.dma_semaphore, #tpu.memory_space<semaphore_mem>> -> memref<!tpu.dma_semaphore, #tpu.memory_space<semaphore_mem>>
      tpu.wait_dma2 semaphore(%34 : memref<!tpu.dma_semaphore, #tpu.memory_space<semaphore_mem>>) src(%arg2 : memref<256x128xf32, #tpu.memory_space<any>>) dst(%32 : memref<256x128xf32, #tpu.memory_space<vmem>>)
    } else {
    }
    %c128_i32 = arith.constant 128 : i32
    %5 = arith.muli %arg1, %c128_i32 : i32
    %6 = tpu.assume_multiple %5, 128 : i32
    %c2_i32 = arith.constant 2 : i32
    %c0_i32_2 = arith.constant 0 : i32
    %7 = arith.cmpi eq, %c2_i32, %c0_i32_2 : i32
    %c1_i32 = arith.constant 1 : i32
    %8 = arith.select %7, %c1_i32, %c2_i32 : i32
    %9 = arith.remsi %arg0, %8 : i32
    %c0_i32_3 = arith.constant 0 : i32
    %10 = arith.cmpi ne, %9, %c0_i32_3 : i32
    %c0_i32_4 = arith.constant 0 : i32
    %11 = arith.cmpi slt, %9, %c0_i32_4 : i32
    %c0_i32_5 = arith.constant 0 : i32
    %12 = arith.cmpi slt, %8, %c0_i32_5 : i32
    %13 = arith.xori %11, %12 : i1
    %14 = arith.andi %13, %10 : i1
    %15 = arith.addi %9, %8 : i32
    %16 = arith.select %14, %15, %9 : i32
    %c0_i32_6 = arith.constant 0 : i32
    %17 = arith.cmpi eq, %16, %c0_i32_6 : i32
    %18 = arith.extui %17 : i1 to i32
    %c0_i32_7 = arith.constant 0 : i32
    %19 = arith.cmpi ne, %18, %c0_i32_7 : i32
    scf.if %19 {
      %23 = arith.index_cast %6 : i32 to index
      %c0 = arith.constant 0 : index
      %24 = vector.load %arg13[%23, %c0] : memref<256x256xi8, #tpu.memory_space<vmem>>, vector<128x256xi8>
      %25 = arith.sitofp %24 : vector<128x256xi8> to vector<128x256xf32>
      %c0_9 = arith.constant 0 : index
      %c0_10 = arith.constant 0 : index
      %c0_11 = arith.constant 0 : index
      %26 = vector.load %arg11[%c0_9, %c0_10, %c0_11] : memref<2x256x128xf32, #tpu.memory_space<vmem>>, vector<1x256x128xf32>
      %27 = vector.shape_cast %26 : vector<1x256x128xf32> to vector<256x128xf32>
      %c0_12 = arith.constant 0 : index
      %28 = arith.index_cast %6 : i32 to index
      %c0_13 = arith.constant 0 : index
      %29 = vector.load %arg11[%c0_12, %28, %c0_13] : memref<2x256x128xf32, #tpu.memory_space<vmem>>, vector<1x128x128xf32>
      %30 = vector.shape_cast %29 : vector<1x128x128xf32> to vector<128x128xf32>
      %cst = arith.constant dense<0.000000e+00> : vector<128x128xf32>
      %31 = tpu.matmul %25, %27, %cst {dimension_numbers = #tpu.dot_dimension_numbers<[1], [0], [0], [1], [0, 0, 1, 1], [], []>} : vector<128x256xf32>, vector<256x128xf32>, vector<128x128xf32> -> vector<128x128xf32>
      %c0_14 = arith.constant 0 : index
      %c0_15 = arith.constant 0 : index
      %c0_16 = arith.constant 0 : index
      %32 = vector.load %arg4[%c0_14, %c0_15, %c0_16] : memref<1x128x384xf32, #tpu.memory_space<vmem>>, vector<1x128x384xf32>
      %33 = vector.shape_cast %32 : vector<1x128x384xf32> to vector<128x384xf32>
      %cst_17 = arith.constant dense<0.000000e+00> : vector<128x384xf32>
      %34 = tpu.matmul %31, %33, %cst_17 {dimension_numbers = #tpu.dot_dimension_numbers<[1], [0], [0], [1], [0, 0, 1, 1], [], []>} : vector<128x128xf32>, vector<128x384xf32>, vector<128x384xf32> -> vector<128x384xf32>
      %c0_18 = arith.constant 0 : index
      %c0_19 = arith.constant 0 : index
      %35 = vector.load %arg6[%c0_18, %c0_19] : memref<1x384xf32, #tpu.memory_space<vmem>>, vector<1x384xf32>
      %36 = vector.broadcast %35 : vector<1x384xf32> to vector<128x384xf32>
      %37 = arith.addf %34, %36 : vector<128x384xf32>
      %c0_20 = arith.constant 0 : index
      %c0_21 = arith.constant 0 : index
      %38 = vector.load %arg5[%c0_20, %c0_21] : memref<128x384xf32, #tpu.memory_space<vmem>>, vector<128x384xf32>
      %cst_22 = arith.constant dense<0.000000e+00> : vector<128x384xf32>
      %39 = tpu.matmul %30, %38, %cst_22 {dimension_numbers = #tpu.dot_dimension_numbers<[1], [0], [0], [1], [0, 0, 1, 1], [], []>} : vector<128x128xf32>, vector<128x384xf32>, vector<128x384xf32> -> vector<128x384xf32>
      %c0_23 = arith.constant 0 : index
      %c0_24 = arith.constant 0 : index
      %40 = vector.load %arg7[%c0_23, %c0_24] : memref<1x384xf32, #tpu.memory_space<vmem>>, vector<1x384xf32>
      %41 = vector.broadcast %40 : vector<1x384xf32> to vector<128x384xf32>
      %42 = arith.addf %39, %41 : vector<128x384xf32>
      %43 = vector.extract_strided_slice %37 {offsets = [0, 0], sizes = [128, 128], strides = [1, 1]} : vector<128x384xf32> to vector<128x128xf32>
      %44 = vector.extract_strided_slice %42 {offsets = [0, 0], sizes = [128, 128], strides = [1, 1]} : vector<128x384xf32> to vector<128x128xf32>
      %45 = arith.addf %43, %44 : vector<128x128xf32>
      %46 = arith.negf %45 : vector<128x128xf32>
      %47 = math.exp %46 : vector<128x128xf32>
      %cst_25 = arith.constant 1.000000e+00 : f32
      %48 = vector.broadcast %cst_25 : f32 to vector<128x128xf32>
      %49 = arith.addf %48, %47 : vector<128x128xf32>
      %50 = arith.divf %48, %49 : vector<128x128xf32>
      %51 = vector.extract_strided_slice %37 {offsets = [0, 128], sizes = [128, 128], strides = [1, 1]} : vector<128x384xf32> to vector<128x128xf32>
      %52 = vector.extract_strided_slice %42 {offsets = [0, 128], sizes = [128, 128], strides = [1, 1]} : vector<128x384xf32> to vector<128x128xf32>
      %53 = arith.addf %51, %52 : vector<128x128xf32>
      %54 = arith.negf %53 : vector<128x128xf32>
      %55 = math.exp %54 : vector<128x128xf32>
      %cst_26 = arith.constant 1.000000e+00 : f32
      %56 = vector.broadcast %cst_26 : f32 to vector<128x128xf32>
      %57 = arith.addf %56, %55 : vector<128x128xf32>
      %58 = arith.divf %56, %57 : vector<128x128xf32>
      %59 = vector.extract_strided_slice %37 {offsets = [0, 256], sizes = [128, 128], strides = [1, 1]} : vector<128x384xf32> to vector<128x128xf32>
      %60 = vector.extract_strided_slice %42 {offsets = [0, 256], sizes = [128, 128], strides = [1, 1]} : vector<128x384xf32> to vector<128x128xf32>
      %61 = arith.mulf %50, %60 : vector<128x128xf32>
      %62 = arith.addf %59, %61 : vector<128x128xf32>
      %63 = math.tanh %62 : vector<128x128xf32>
      %cst_27 = arith.constant 1.000000e+00 : f32
      %64 = vector.broadcast %cst_27 : f32 to vector<128x128xf32>
      %65 = arith.subf %64, %58 : vector<128x128xf32>
      %66 = arith.mulf %65, %63 : vector<128x128xf32>
      %67 = arith.mulf %58, %30 : vector<128x128xf32>
      %68 = arith.addf %66, %67 : vector<128x128xf32>
      %c1 = arith.constant 1 : index
      %69 = arith.index_cast %6 : i32 to index
      %c0_28 = arith.constant 0 : index
      %70 = vector.load %arg11[%c1, %69, %c0_28] : memref<2x256x128xf32, #tpu.memory_space<vmem>>, vector<1x128x128xf32>
      %71 = vector.shape_cast %70 : vector<1x128x128xf32> to vector<128x128xf32>
      %72 = vector.shape_cast %68 : vector<128x128xf32> to vector<1x128x128xf32>
      tpu.vector_store %arg11[%c1, %69, %c0_28], %72 {strides = array<i32>} : memref<2x256x128xf32, #tpu.memory_space<vmem>>, vector<1x128x128xf32>,
      %c2_i32_29 = arith.constant 2 : i32
      %73 = arith.cmpi eq, %arg0, %c2_i32_29 : i32
      %74 = arith.extui %73 : i1 to i32
      %c0_i32_30 = arith.constant 0 : i32
      %75 = arith.cmpi ne, %74, %c0_i32_30 : i32
      scf.if %75 {
        %c0_31 = arith.constant 0 : index
        %c0_32 = arith.constant 0 : index
        %76 = vector.load %arg8[%c0_31, %c0_32] : memref<128x128xf32, #tpu.memory_space<vmem>>, vector<128x128xf32>
        %cst_33 = arith.constant dense<0.000000e+00> : vector<128x128xf32>
        %77 = tpu.matmul %68, %76, %cst_33 {dimension_numbers = #tpu.dot_dimension_numbers<[1], [0], [0], [1], [0, 0, 1, 1], [], []>} : vector<128x128xf32>, vector<128x128xf32>, vector<128x128xf32> -> vector<128x128xf32>
        %c0_34 = arith.constant 0 : index
        %c0_35 = arith.constant 0 : index
        %78 = vector.load %arg9[%c0_34, %c0_35] : memref<1x128xf32, #tpu.memory_space<vmem>>, vector<1x128xf32>
        %79 = vector.broadcast %78 : vector<1x128xf32> to vector<128x128xf32>
        %80 = arith.addf %77, %79 : vector<128x128xf32>
        %cst_36 = arith.constant 0.00999999977 : f32
        %cst_37 = arith.constant 1.000000e+00 : f32
        %81 = vector.broadcast %cst_36 : f32 to vector<128x128xf32>
        %82 = arith.maximumf %81, %80 : vector<128x128xf32>
        %83 = vector.broadcast %cst_37 : f32 to vector<128x128xf32>
        %84 = arith.minimumf %83, %82 : vector<128x128xf32>
        %c0_38 = arith.constant 0 : index
        %c0_39 = arith.constant 0 : index
        %85 = vector.load %arg10[%c0_38, %c0_39] : memref<128x128xf32, #tpu.memory_space<vmem>>, vector<128x128xf32>
        tpu.vector_store %arg10[%c0_38, %c0_39], %84 {strides = array<i32>} : memref<128x128xf32, #tpu.memory_space<vmem>>, vector<128x128xf32>,
      } else {
      }
    } else {
    }
    %true = arith.constant true
    %20 = arith.xori %17, %true : i1
    %21 = arith.extui %20 : i1 to i32
    %c0_i32_8 = arith.constant 0 : i32
    %22 = arith.cmpi ne, %21, %c0_i32_8 : i32
    scf.if %22 {
      %23 = arith.index_cast %6 : i32 to index
      %c0 = arith.constant 0 : index
      %24 = vector.load %arg13[%23, %c0] : memref<256x256xi8, #tpu.memory_space<vmem>>, vector<128x256xi8>
      %25 = arith.sitofp %24 : vector<128x256xi8> to vector<128x256xf32>
      %c1 = arith.constant 1 : index
      %c0_9 = arith.constant 0 : index
      %c0_10 = arith.constant 0 : index
      %26 = vector.load %arg11[%c1, %c0_9, %c0_10] : memref<2x256x128xf32, #tpu.memory_space<vmem>>, vector<1x256x128xf32>
      %27 = vector.shape_cast %26 : vector<1x256x128xf32> to vector<256x128xf32>
      %c1_11 = arith.constant 1 : index
      %28 = arith.index_cast %6 : i32 to index
      %c0_12 = arith.constant 0 : index
      %29 = vector.load %arg11[%c1_11, %28, %c0_12] : memref<2x256x128xf32, #tpu.memory_space<vmem>>, vector<1x128x128xf32>
      %30 = vector.shape_cast %29 : vector<1x128x128xf32> to vector<128x128xf32>
      %cst = arith.constant dense<0.000000e+00> : vector<128x128xf32>
      %31 = tpu.matmul %25, %27, %cst {dimension_numbers = #tpu.dot_dimension_numbers<[1], [0], [0], [1], [0, 0, 1, 1], [], []>} : vector<128x256xf32>, vector<256x128xf32>, vector<128x128xf32> -> vector<128x128xf32>
      %c0_13 = arith.constant 0 : index
      %c0_14 = arith.constant 0 : index
      %c0_15 = arith.constant 0 : index
      %32 = vector.load %arg4[%c0_13, %c0_14, %c0_15] : memref<1x128x384xf32, #tpu.memory_space<vmem>>, vector<1x128x384xf32>
      %33 = vector.shape_cast %32 : vector<1x128x384xf32> to vector<128x384xf32>
      %cst_16 = arith.constant dense<0.000000e+00> : vector<128x384xf32>
      %34 = tpu.matmul %31, %33, %cst_16 {dimension_numbers = #tpu.dot_dimension_numbers<[1], [0], [0], [1], [0, 0, 1, 1], [], []>} : vector<128x128xf32>, vector<128x384xf32>, vector<128x384xf32> -> vector<128x384xf32>
      %c0_17 = arith.constant 0 : index
      %c0_18 = arith.constant 0 : index
      %35 = vector.load %arg6[%c0_17, %c0_18] : memref<1x384xf32, #tpu.memory_space<vmem>>, vector<1x384xf32>
      %36 = vector.broadcast %35 : vector<1x384xf32> to vector<128x384xf32>
      %37 = arith.addf %34, %36 : vector<128x384xf32>
      %c0_19 = arith.constant 0 : index
      %c0_20 = arith.constant 0 : index
      %38 = vector.load %arg5[%c0_19, %c0_20] : memref<128x384xf32, #tpu.memory_space<vmem>>, vector<128x384xf32>
      %cst_21 = arith.constant dense<0.000000e+00> : vector<128x384xf32>
      %39 = tpu.matmul %30, %38, %cst_21 {dimension_numbers = #tpu.dot_dimension_numbers<[1], [0], [0], [1], [0, 0, 1, 1], [], []>} : vector<128x128xf32>, vector<128x384xf32>, vector<128x384xf32> -> vector<128x384xf32>
      %c0_22 = arith.constant 0 : index
      %c0_23 = arith.constant 0 : index
      %40 = vector.load %arg7[%c0_22, %c0_23] : memref<1x384xf32, #tpu.memory_space<vmem>>, vector<1x384xf32>
      %41 = vector.broadcast %40 : vector<1x384xf32> to vector<128x384xf32>
      %42 = arith.addf %39, %41 : vector<128x384xf32>
      %43 = vector.extract_strided_slice %37 {offsets = [0, 0], sizes = [128, 128], strides = [1, 1]} : vector<128x384xf32> to vector<128x128xf32>
      %44 = vector.extract_strided_slice %42 {offsets = [0, 0], sizes = [128, 128], strides = [1, 1]} : vector<128x384xf32> to vector<128x128xf32>
      %45 = arith.addf %43, %44 : vector<128x128xf32>
      %46 = arith.negf %45 : vector<128x128xf32>
      %47 = math.exp %46 : vector<128x128xf32>
      %cst_24 = arith.constant 1.000000e+00 : f32
      %48 = vector.broadcast %cst_24 : f32 to vector<128x128xf32>
      %49 = arith.addf %48, %47 : vector<128x128xf32>
      %50 = arith.divf %48, %49 : vector<128x128xf32>
      %51 = vector.extract_strided_slice %37 {offsets = [0, 128], sizes = [128, 128], strides = [1, 1]} : vector<128x384xf32> to vector<128x128xf32>
      %52 = vector.extract_strided_slice %42 {offsets = [0, 128], sizes = [128, 128], strides = [1, 1]} : vector<128x384xf32> to vector<128x128xf32>
      %53 = arith.addf %51, %52 : vector<128x128xf32>
      %54 = arith.negf %53 : vector<128x128xf32>
      %55 = math.exp %54 : vector<128x128xf32>
      %cst_25 = arith.constant 1.000000e+00 : f32
      %56 = vector.broadcast %cst_25 : f32 to vector<128x128xf32>
      %57 = arith.addf %56, %55 : vector<128x128xf32>
      %58 = arith.divf %56, %57 : vector<128x128xf32>
      %59 = vector.extract_strided_slice %37 {offsets = [0, 256], sizes = [128, 128], strides = [1, 1]} : vector<128x384xf32> to vector<128x128xf32>
      %60 = vector.extract_strided_slice %42 {offsets = [0, 256], sizes = [128, 128], strides = [1, 1]} : vector<128x384xf32> to vector<128x128xf32>
      %61 = arith.mulf %50, %60 : vector<128x128xf32>
      %62 = arith.addf %59, %61 : vector<128x128xf32>
      %63 = math.tanh %62 : vector<128x128xf32>
      %cst_26 = arith.constant 1.000000e+00 : f32
      %64 = vector.broadcast %cst_26 : f32 to vector<128x128xf32>
      %65 = arith.subf %64, %58 : vector<128x128xf32>
      %66 = arith.mulf %65, %63 : vector<128x128xf32>
      %67 = arith.mulf %58, %30 : vector<128x128xf32>
      %68 = arith.addf %66, %67 : vector<128x128xf32>
      %c0_27 = arith.constant 0 : index
      %69 = arith.index_cast %6 : i32 to index
      %c0_28 = arith.constant 0 : index
      %70 = vector.load %arg11[%c0_27, %69, %c0_28] : memref<2x256x128xf32, #tpu.memory_space<vmem>>, vector<1x128x128xf32>
      %71 = vector.shape_cast %70 : vector<1x128x128xf32> to vector<128x128xf32>
      %72 = vector.shape_cast %68 : vector<128x128xf32> to vector<1x128x128xf32>
      tpu.vector_store %arg11[%c0_27, %69, %c0_28], %72 {strides = array<i32>} : memref<2x256x128xf32, #tpu.memory_space<vmem>>, vector<1x128x128xf32>,
      %c2_i32_29 = arith.constant 2 : i32
      %73 = arith.cmpi eq, %arg0, %c2_i32_29 : i32
      %74 = arith.extui %73 : i1 to i32
      %c0_i32_30 = arith.constant 0 : i32
      %75 = arith.cmpi ne, %74, %c0_i32_30 : i32
      scf.if %75 {
        %c0_31 = arith.constant 0 : index
        %c0_32 = arith.constant 0 : index
        %76 = vector.load %arg8[%c0_31, %c0_32] : memref<128x128xf32, #tpu.memory_space<vmem>>, vector<128x128xf32>
        %cst_33 = arith.constant dense<0.000000e+00> : vector<128x128xf32>
        %77 = tpu.matmul %68, %76, %cst_33 {dimension_numbers = #tpu.dot_dimension_numbers<[1], [0], [0], [1], [0, 0, 1, 1], [], []>} : vector<128x128xf32>, vector<128x128xf32>, vector<128x128xf32> -> vector<128x128xf32>
        %c0_34 = arith.constant 0 : index
        %c0_35 = arith.constant 0 : index
        %78 = vector.load %arg9[%c0_34, %c0_35] : memref<1x128xf32, #tpu.memory_space<vmem>>, vector<1x128xf32>
        %79 = vector.broadcast %78 : vector<1x128xf32> to vector<128x128xf32>
        %80 = arith.addf %77, %79 : vector<128x128xf32>
        %cst_36 = arith.constant 0.00999999977 : f32
        %cst_37 = arith.constant 1.000000e+00 : f32
        %81 = vector.broadcast %cst_36 : f32 to vector<128x128xf32>
        %82 = arith.maximumf %81, %80 : vector<128x128xf32>
        %83 = vector.broadcast %cst_37 : f32 to vector<128x128xf32>
        %84 = arith.minimumf %83, %82 : vector<128x128xf32>
        %c0_38 = arith.constant 0 : index
        %c0_39 = arith.constant 0 : index
        %85 = vector.load %arg10[%c0_38, %c0_39] : memref<128x128xf32, #tpu.memory_space<vmem>>, vector<128x128xf32>
        tpu.vector_store %arg10[%c0_38, %c0_39], %84 {strides = array<i32>} : memref<128x128xf32, #tpu.memory_space<vmem>>, vector<128x128xf32>,
      } else {
      }
    } else {
    }
    return
  }
  func.func @transform_2(%arg0: i32, %arg1: i32) -> (i32, i32, i32) {
    %c0_i32 = arith.constant 0 : i32
    %c0_i32_0 = arith.constant 0 : i32
    %c0_i32_1 = arith.constant 0 : i32
    return %arg0, %c0_i32, %c0_i32_0 : i32, i32, i32
  }
  func.func @transform_3(%arg0: i32, %arg1: i32) -> (i32, i32) {
    %c0_i32 = arith.constant 0 : i32
    %c0_i32_0 = arith.constant 0 : i32
    %c0_i32_1 = arith.constant 0 : i32
    return %c0_i32, %c0_i32_0 : i32, i32
  }
  func.func @transform_4(%arg0: i32, %arg1: i32) -> (i32, i32) {
    %c0_i32 = arith.constant 0 : i32
    %c0_i32_0 = arith.constant 0 : i32
    %c0_i32_1 = arith.constant 0 : i32
    return %c0_i32, %c0_i32_0 : i32, i32
  }
  func.func @transform_5(%arg0: i32, %arg1: i32) -> (i32, i32) {
    %c0_i32 = arith.constant 0 : i32
    %c0_i32_0 = arith.constant 0 : i32
    %c0_i32_1 = arith.constant 0 : i32
    return %c0_i32, %c0_i32_0 : i32, i32
  }
  func.func @transform_6(%arg0: i32, %arg1: i32) -> (i32, i32) {
    %c0_i32 = arith.constant 0 : i32
    %c0_i32_0 = arith.constant 0 : i32
    %c0_i32_1 = arith.constant 0 : i32
    return %c0_i32, %c0_i32_0 : i32, i32
  }
  func.func @transform_7(%arg0: i32, %arg1: i32) -> (i32, i32) {
    %c0_i32 = arith.constant 0 : i32
    %c0_i32_0 = arith.constant 0 : i32
    %c0_i32_1 = arith.constant 0 : i32
    return %c0_i32, %c0_i32_0 : i32, i32
  }
  func.func @transform_8(%arg0: i32, %arg1: i32) -> (i32, i32) {
    %c2_i32 = arith.constant 2 : i32
    %0 = arith.cmpi eq, %arg0, %c2_i32 : i32
    %c0_i32 = arith.constant 0 : i32
    %1 = arith.select %0, %arg1, %c0_i32 : i32
    %c0_i32_0 = arith.constant 0 : i32
    %c0_i32_1 = arith.constant 0 : i32
    return %1, %c0_i32_0 : i32, i32
  }
}

</mosaic_0001>

<llo_original>
// kernel: tpu_custom_call.1
$region0: #{tpu_custom_call.1}
  #allocation0 [shape = 'u32[]', space=smem, size = 0x4, offset = 0x4, fixed_abs, tag = 'smem constant byte address 0x4 - core index']
  #allocation1 [shape = 'u32[144,128]{1,0:T(1,128)}', space=vmem, size = 0x12000, scoped, tag = 'internal scratch']
  #allocation2 [shape = 'f32[2,256,128]{2,1,0:T(8,128)}', space=vmem, size = 0x40000, scoped, tag = 'scratch operand']
  #allocation3 [shape = 's32[2]{0}', space=sflag, size = 0x8, scoped, tag = 'scratch operand']
  #allocation4 [shape = 's8[256,256]{1,0:T(32,128)(4,1)}', space=vmem, size = 0x10000, scoped, tag = 'scratch operand']
  #allocation12 [shape = 's32[]', space=sflag, size = 0x4, offset = 0, fixed_abs, tag = 'sflag constant byte address 0x0 - dummy sync flag']
  #allocation13 [shape = 's32[]', space=sflag, size = 0x4, offset = 0, fixed_abs, tag = 'sflag constant byte address 0x0 - dummy sync flag']
  #allocation14 [shape = 'u32[]', space=smem, size = 0x4, offset = 0x44, fixed_abs, tag = 'smem constant byte address 0x44 - assertion arg 0']
  #allocation15 [shape = 'u32[]', space=smem, size = 0x4, offset = 0x48, fixed_abs, tag = 'smem constant byte address 0x48 - assertion arg 1']
  #allocation16 [shape = 's32[]', space=sflag, size = 0x4, offset = 0, fixed_abs, tag = 'sflag constant byte address 0x0 - dummy sync flag']
  #allocation17 [shape = 's32[]', space=sflag, size = 0x4, offset = 0, fixed_abs, tag = 'sflag constant byte address 0x0 - dummy sync flag']
  %s0 = inlined_call_operand.hbm [shape: f32[256,128], index: 0, kind: input, shape index: {}]
  %s1 = inlined_call_operand.hbm [shape: s8[256,256], index: 1, kind: input, shape index: {}]
  %s2 = inlined_call_operand.hbm [shape: f32[3,128,384], index: 2, kind: input, shape index: {}]
  %s3 = inlined_call_operand.hbm [shape: f32[128,384], index: 3, kind: input, shape index: {}]
  %s4 = inlined_call_operand.vmem [shape: f32[1,384], index: 4, kind: input, shape index: {}]
  %s5 = inlined_call_operand.vmem [shape: f32[1,384], index: 5, kind: input, shape index: {}]
  %s6 = inlined_call_operand.hbm [shape: f32[128,128], index: 6, kind: input, shape index: {}]
  %s7 = inlined_call_operand.vmem [shape: f32[1,128], index: 7, kind: input, shape index: {}]
  %s8 = inlined_call_operand.hbm [shape: f32[256,128], index: 8, kind: output, shape index: {}]
  %s9 = sld [smem:[#allocation0]]
  $region97: #{tpu_custom_call.1} parent=0
    _
  %s11 = ssub.s32 1, %s9
  %s12 = scalar_select 0, %s11, %s9
  $region1: #{tpu_custom_call.1} parent=0
    #allocation5 [shape = 'u8[393216]{0}', space=vmem, size = 0x60000, scoped, tag = 'input window, operand 2']
    #allocation6 [shape = 's32[2]{0}', space=sflag, size = 0x8, scoped, tag = 'scoped memory for tpu_custom_call.1']
    #allocation7 [shape = 's32[2]{0}', space=sflag, size = 0x8, scoped, tag = 'scoped memory for tpu_custom_call.1']
    #allocation8 [shape = 'u8[196608]{0}', space=vmem, size = 0x30000, scoped, tag = 'input window, operand 3, single buffered']
    #allocation9 [shape = 's32[1]{0}', space=sflag, size = 0x4, scoped, tag = 'scoped memory for tpu_custom_call.1']
    #allocation10 [shape = 'u8[65536]{0}', space=vmem, size = 0x10000, scoped, tag = 'input window, operand 6, single buffered']
    #allocation11 [shape = 'u8[131072]{0}', space=vmem, size = 0x20000, scoped, tag = 'output window, operand 0']
    %13 = vsyncpa [#allocation6], 0
    %s14 = scalar_lea.sflag [#allocation6], 1
    %15 = vsyncpa %s14, 0
    %16 = vsyncpa [#allocation9], 0
    %17 = vsyncpa [#allocation7], 0
    %s18 = scalar_lea.sflag [#allocation7], 1
    %19 = vsyncpa %s18, 0
    loop: start=0, step=1, limit=8
    $region2: #{tpu_custom_call.1} parent=1 // loop_pre_header
      _
    $region3: #{tpu_custom_call.1} parent=1 // loop_header
      %s21 = sphi 0, %s25
      %p22 = scmp.ge.s32.totalorder %s21, 8
      %s28 = sphi 0, %s40
      %s29 = sphi 0, %s36
      %s30 = sphi 0, %s28
      %s31 = sphi 0, %s29
      %s32 = sphi 0, %s30
      %s33 = sphi 0, %s31
      %s43 = sphi 0, %s45
      %s46 = sphi 0, %s43
      %s47 = sphi 0, %s46
      %s63 = sphi 0, %s47
      %s67 = sphi 0, %s67
      %s69 = sphi 0, %s67
      %s70 = sphi 0, %s69
      %s84 = sphi 0, %s70
      %s88 = sphi 0, %s88
      %s90 = sphi 0, %s88
      %s91 = sphi 0, %s90
      %s105 = sphi 0, %s91
      %s109 = sphi 0, %s109
      %s111 = sphi 0, %s109
      %s112 = sphi 0, %s111
      %s126 = sphi 0, %s112
      %s130 = sphi 0, %s130
      %s132 = sphi 0, %s130
      %s133 = sphi 0, %s132
      %s147 = sphi 0, %s133
      %s151 = sphi 0, %s151
      %s153 = sphi 0, %s151
      %s154 = sphi 0, %s153
      %s168 = sphi 0, %s154
      %s178 = sphi 0, %s180
      %s181 = sphi 0, %s178
      %s182 = sphi 0, %s181
      %s198 = sphi 0, %s182
    $region4: #{tpu_custom_call.1} parent=1 // loop_header_branch
      %24 = sbr.rel (%p22) target = $region8
    $region5: #{tpu_custom_call.1} parent=1 // loop_body
      %s26 = ssub.s32 %s21, 1
      %s27 = ssub.s32 %s21, 2
      %s34 = sadd.s32 1, %s29
      %p35 = scmp.ge.s32.totalorder %s34, 2
      %s36 = scalar_select %p35, 0, %s34
      %s37 = sadd.s32 1, %s28
      %s38 = scalar_select %p35, %s37, %s28
      %p39 = scmp.ge.s32.totalorder %s38, 3
      %s40 = scalar_select %p39, 0, %s38
      %s41 = ssub.s32 %s28, %s40
      %p42 = scmp.eq.s32.totalorder %s41, 0
      %s44 = sadd.s32 %s43, 1
      %s45 = scalar_select %p42, %s43, %s44
      %p48 = pneg %p42
      %p49 = scmp.eq.s32.totalorder %s21, 5
      %p50 = por %p48, %p49
      %p51 = scmp.ne.s32.totalorder %s43, %s46
      %p52 = scmp.eq.s32.totalorder %s21, 0
      %p53 = por %p51, %p52
      %p54 = scmp.ne.s32.totalorder %s43, %s46
      %p55 = scmp.eq.s32.totalorder %s26, 5
      %p56 = por %p54, %p55
      %p57 = scmp.ne.s32.totalorder %s46, %s47
      %p58 = scmp.eq.s32.totalorder %s26, 0
      %p59 = por %p57, %p58
      %p60 = scmp.ne.s32.totalorder %s46, %s47
      %p61 = scmp.eq.s32.totalorder %s27, 5
      %p62 = por %p60, %p61
      %p64 = scmp.ne.s32.totalorder %s47, %s63
      %p65 = scmp.eq.s32.totalorder %s27, 0
      %p66 = por %p64, %p65
      %s68 = sadd.s32 %s67, 1
      %p71 = scmp.eq.s32.totalorder %s21, 5
      %p72 = scmp.ne.s32.totalorder %s67, %s69
      %p73 = scmp.eq.s32.totalorder %s21, 0
      %p74 = por %p72, %p73
      %p75 = scmp.ne.s32.totalorder %s67, %s69
      %p76 = scmp.eq.s32.totalorder %s26, 5
      %p77 = por %p75, %p76
      %p78 = scmp.ne.s32.totalorder %s69, %s70
      %p79 = scmp.eq.s32.totalorder %s26, 0
      %p80 = por %p78, %p79
      %p81 = scmp.ne.s32.totalorder %s69, %s70
      %p82 = scmp.eq.s32.totalorder %s27, 5
      %p83 = por %p81, %p82
      %p85 = scmp.ne.s32.totalorder %s70, %s84
      %p86 = scmp.eq.s32.totalorder %s27, 0
      %p87 = por %p85, %p86
      %s89 = sadd.s32 %s88, 1
      %p92 = scmp.eq.s32.totalorder %s21, 5
      %p93 = scmp.ne.s32.totalorder %s88, %s90
      %p94 = scmp.eq.s32.totalorder %s21, 0
      %p95 = por %p93, %p94
      %p96 = scmp.ne.s32.totalorder %s88, %s90
      %p97 = scmp.eq.s32.totalorder %s26, 5
      %p98 = por %p96, %p97
      %p99 = scmp.ne.s32.totalorder %s90, %s91
      %p100 = scmp.eq.s32.totalorder %s26, 0
      %p101 = por %p99, %p100
      %p102 = scmp.ne.s32.totalorder %s90, %s91
      %p103 = scmp.eq.s32.totalorder %s27, 5
      %p104 = por %p102, %p103
      %p106 = scmp.ne.s32.totalorder %s91, %s105
      %p107 = scmp.eq.s32.totalorder %s27, 0
      %p108 = por %p106, %p107
      %s110 = sadd.s32 %s109, 1
      %p113 = scmp.eq.s32.totalorder %s21, 5
      %p114 = scmp.ne.s32.totalorder %s109, %s111
      %p115 = scmp.eq.s32.totalorder %s21, 0
      %p116 = por %p114, %p115
      %p117 = scmp.ne.s32.totalorder %s109, %s111
      %p118 = scmp.eq.s32.totalorder %s26, 5
      %p119 = por %p117, %p118
      %p120 = scmp.ne.s32.totalorder %s111, %s112
      %p121 = scmp.eq.s32.totalorder %s26, 0
      %p122 = por %p120, %p121
      %p123 = scmp.ne.s32.totalorder %s111, %s112
      %p124 = scmp.eq.s32.totalorder %s27, 5
      %p125 = por %p123, %p124
      %p127 = scmp.ne.s32.totalorder %s112, %s126
      %p128 = scmp.eq.s32.totalorder %s27, 0
      %p129 = por %p127, %p128
      %s131 = sadd.s32 %s130, 1
      %p134 = scmp.eq.s32.totalorder %s21, 5
      %p135 = scmp.ne.s32.totalorder %s130, %s132
      %p136 = scmp.eq.s32.totalorder %s21, 0
      %p137 = por %p135, %p136
      %p138 = scmp.ne.s32.totalorder %s130, %s132
      %p139 = scmp.eq.s32.totalorder %s26, 5
      %p140 = por %p138, %p139
      %p141 = scmp.ne.s32.totalorder %s132, %s133
      %p142 = scmp.eq.s32.totalorder %s26, 0
      %p143 = por %p141, %p142
      %p144 = scmp.ne.s32.totalorder %s132, %s133
      %p145 = scmp.eq.s32.totalorder %s27, 5
      %p146 = por %p144, %p145
      %p148 = scmp.ne.s32.totalorder %s133, %s147
      %p149 = scmp.eq.s32.totalorder %s27, 0
      %p150 = por %p148, %p149
      %s152 = sadd.s32 %s151, 1
      %p155 = scmp.eq.s32.totalorder %s21, 5
      %p156 = scmp.ne.s32.totalorder %s151, %s153
      %p157 = scmp.eq.s32.totalorder %s21, 0
      %p158 = por %p156, %p157
      %p159 = scmp.ne.s32.totalorder %s151, %s153
      %p160 = scmp.eq.s32.totalorder %s26, 5
      %p161 = por %p159, %p160
      %p162 = scmp.ne.s32.totalorder %s153, %s154
      %p163 = scmp.eq.s32.totalorder %s26, 0
      %p164 = por %p162, %p163
      %p165 = scmp.ne.s32.totalorder %s153, %s154
      %p166 = scmp.eq.s32.totalorder %s27, 5
      %p167 = por %p165, %p166
      %p169 = scmp.ne.s32.totalorder %s154, %s168
      %p170 = scmp.eq.s32.totalorder %s27, 0
      %p171 = por %p169, %p170
      %p172 = scmp.eq.s32.totalorder %s28, 2
      %s173 = scalar_select %p172, %s29, 0
      %p174 = scmp.eq.s32.totalorder %s40, 2
      %s175 = scalar_select %p174, %s36, 0
      %s176 = ssub.s32 %s173, %s175
      %p177 = scmp.eq.s32.totalorder %s176, 0
      %s179 = sadd.s32 %s178, 1
      %s180 = scalar_select %p177, %s178, %s179
      %p183 = pneg %p177
      %p184 = scmp.eq.s32.totalorder %s21, 5
      %p185 = por %p183, %p184
      %p186 = scmp.ne.s32.totalorder %s178, %s181
      %p187 = scmp.eq.s32.totalorder %s21, 0
      %p188 = por %p186, %p187
      %p189 = scmp.ne.s32.totalorder %s178, %s181
      %p190 = scmp.eq.s32.totalorder %s26, 5
      %p191 = por %p189, %p190
      %p192 = scmp.ne.s32.totalorder %s181, %s182
      %p193 = scmp.eq.s32.totalorder %s26, 0
      %p194 = por %p192, %p193
      %p195 = scmp.ne.s32.totalorder %s181, %s182
      %p196 = scmp.eq.s32.totalorder %s27, 5
      %p197 = por %p195, %p196
      %p199 = scmp.ne.s32.totalorder %s182, %s198
      %p200 = scmp.eq.s32.totalorder %s27, 0
      %p201 = por %p199, %p200
      %p202 = scmp.le.s32.totalorder 1, %s21
      %p203 = scmp.lt.s32.totalorder %s21, 7
      %p204 = pnand %p202, %p203
      %p205 = pneg %p204
      // Predicated region
      $region9: #{tpu_custom_call.1} parent=5 // pred_check
        _
      $region10: #{tpu_custom_call.1} parent=5 // pred_check_branch
        %207 = sbr.rel (%p204) target = $region12
      $region11: #{tpu_custom_call.1} parent=5 // pred_region
        %s208 = ssub.s32 %s21, 1
        // Predicated region
        $region13: #{tpu_custom_call.1} parent=11 // pred_check
          %p209 = pneg %p80
        $region14: #{tpu_custom_call.1} parent=11 // pred_check_branch
          %211 = sbr.rel (%p209) target = $region16
        $region15: #{tpu_custom_call.1} parent=11 // pred_region
          %s213 = ssub.s32 6144, 6144
          %214 = vsyncadd [#allocation9], %s213
          %s215 = sshll.u32 [#allocation8], 4
          %s216 = int_to_ptr.vmem [resolvable:$true] %s215
          %221 = dma.hbm_to_vmem [thread:$0]  %s3, 6144, %s216, [#allocation9], 384, 384, 24
        $region16: #{tpu_custom_call.1} parent=11 // pred_fallthru
          _
        // Predicated region
        $region17: #{tpu_custom_call.1} parent=11 // pred_check
          %p222 = pneg %p101
        $region18: #{tpu_custom_call.1} parent=11 // pred_check_branch
          %224 = sbr.rel (%p222) target = $region20
        $region19: #{tpu_custom_call.1} parent=11 // pred_region
          _
        $region20: #{tpu_custom_call.1} parent=11 // pred_fallthru
          _
        // Predicated region
        $region21: #{tpu_custom_call.1} parent=11 // pred_check
          %p225 = pneg %p122
        $region22: #{tpu_custom_call.1} parent=11 // pred_check_branch
          %227 = sbr.rel (%p225) target = $region24
        $region23: #{tpu_custom_call.1} parent=11 // pred_region
          _
        $region24: #{tpu_custom_call.1} parent=11 // pred_fallthru
          _
        // Predicated region
        $region25: #{tpu_custom_call.1} parent=11 // pred_check
          %p228 = pneg %p143
        $region26: #{tpu_custom_call.1} parent=11 // pred_check_branch
          %230 = sbr.rel (%p228) target = $region28
        $region27: #{tpu_custom_call.1} parent=11 // pred_region
          %s232 = ssub.s32 2048, 2048
          %233 = vsyncadd [#allocation9], %s232
          %s234 = sshll.u32 [#allocation10], 4
          %s235 = int_to_ptr.vmem [resolvable:$true] %s234
          %240 = dma.hbm_to_vmem [thread:$0]  %s6, 2048, %s235, [#allocation9], 128, 128, 8
        $region28: #{tpu_custom_call.1} parent=11 // pred_fallthru
          _
        // Predicated region
        $region29: #{tpu_custom_call.1} parent=11 // pred_check
          %p241 = pneg %p164
        $region30: #{tpu_custom_call.1} parent=11 // pred_check_branch
          %243 = sbr.rel (%p241) target = $region32
        $region31: #{tpu_custom_call.1} parent=11 // pred_region
          _
        $region32: #{tpu_custom_call.1} parent=11 // pred_fallthru
          _
      $region12: #{tpu_custom_call.1} parent=5 // pred_fallthru
        _
      %p244 = scmp.lt.s32.totalorder %s21, 6
      // Predicated region
      $region33: #{tpu_custom_call.1} parent=5 // pred_check
        %p245 = pneg %p244
      $region34: #{tpu_custom_call.1} parent=5 // pred_check_branch
        %247 = sbr.rel (%p245) target = $region36
      $region35: #{tpu_custom_call.1} parent=5 // pred_region
        // Predicated region
        $region37: #{tpu_custom_call.1} parent=35 // pred_check
          %p248 = pneg %p53
        $region38: #{tpu_custom_call.1} parent=35 // pred_check_branch
          %250 = sbr.rel (%p248) target = $region40
        $region39: #{tpu_custom_call.1} parent=35 // pred_region
          %s251 = sand.u32 %s43, 1
          %s252 = scalar_lea.sflag [#allocation6], %s251
          %s253 = sand.u32 %s43, 1
          %s254 = smul.addr %s253, 384
          %s255 = scalar_lea.vmem [#allocation5], %s254
          %s257 = ssub.s32 6144, 6144
          %258 = vsyncadd %s252, %s257
          %s259 = smul.addr %s28, 48
          %s260 = smul.addr %s259, 128
          %s261 = scalar_lea.hbm %s2, %s260
          %s262 = sshll.u32 %s255, 4
          %s263 = int_to_ptr.vmem [resolvable:$true] %s262
          %268 = dma.hbm_to_vmem [thread:$0]  %s261, 6144, %s263, %s252, 384, 384, 24
        $region40: #{tpu_custom_call.1} parent=35 // pred_fallthru
          _
      $region36: #{tpu_custom_call.1} parent=5 // pred_fallthru
        _
      %p269 = scmp.le.s32.totalorder 1, %s21
      %p270 = scmp.lt.s32.totalorder %s21, 7
      %p271 = pnand %p269, %p270
      %p272 = pneg %p271
      // Predicated region
      $region41: #{tpu_custom_call.1} parent=5 // pred_check
        _
      $region42: #{tpu_custom_call.1} parent=5 // pred_check_branch
        %274 = sbr.rel (%p271) target = $region44
      $region43: #{tpu_custom_call.1} parent=5 // pred_region
        %s275 = ssub.s32 %s21, 1
        %s276 = sand.u32 %s46, 1
        %s277 = scalar_lea.sflag [#allocation6], %s276
        %s278 = sand.u32 %s46, 1
        %s279 = smul.addr %s278, 384
        %s280 = scalar_lea.vmem [#allocation5], %s279
        // Predicated region
        $region45: #{tpu_custom_call.1} parent=43 // pred_check
          %p281 = pneg %p59
        $region46: #{tpu_custom_call.1} parent=43 // pred_check_branch
          %283 = sbr.rel (%p281) target = $region48
        $region47: #{tpu_custom_call.1} parent=43 // pred_region
          %284 = dma.done %s277, 6144
        $region48: #{tpu_custom_call.1} parent=43 // pred_fallthru
          _
        // Predicated region
        $region49: #{tpu_custom_call.1} parent=43 // pred_check
          %p285 = pneg %p80
        $region50: #{tpu_custom_call.1} parent=43 // pred_check_branch
          %287 = sbr.rel (%p285) target = $region52
        $region51: #{tpu_custom_call.1} parent=43 // pred_region
          %288 = dma.done [#allocation9], 6144
        $region52: #{tpu_custom_call.1} parent=43 // pred_fallthru
          _
        // Predicated region
        $region53: #{tpu_custom_call.1} parent=43 // pred_check
          %p289 = pneg %p143
        $region54: #{tpu_custom_call.1} parent=43 // pred_check_branch
          %291 = sbr.rel (%p289) target = $region56
        $region55: #{tpu_custom_call.1} parent=43 // pred_region
          %292 = dma.done [#allocation9], 2048
        $region56: #{tpu_custom_call.1} parent=43 // pred_fallthru
          _
        %s293 = sand.u32 %s46, 1
        %s294 = scalar_lea.sflag [#allocation6], %s293
        %s295 = sand.u32 %s46, 1
        %s296 = smul.addr %s295, 384
        %s297 = scalar_lea.vmem [#allocation5], %s296
        %p298 = pneg %p59
        %p299 = pneg %p56
        %p300 = pneg %p80
        %p301 = pneg %p77
        %p302 = pneg %p101
        %p303 = pneg %p98
        %p304 = pneg %p122
        %p305 = pneg %p119
        %p306 = pneg %p143
        %p307 = pneg %p140
        %p308 = pneg %p164
        %p309 = pneg %p161
        %p310 = pneg %p194
        %p311 = pneg %p191
        %s312 = sand.u32 %s181, 1
        %s313 = scalar_lea.sflag [#allocation7], %s312
        %s314 = sand.u32 %s181, 1
        %s315 = smul.addr %s314, 128
        %s316 = scalar_lea.vmem [#allocation11], %s315
        %p317 = scmp.eq.s32.totalorder %s30, 2
        %s318 = scalar_select %p317, %s31, 0
        %s319 = smul.u32 16, %s318
        %p320 = scmp.eq.s32.totalorder %s30, 0
        %p321 = scmp.eq.s32.totalorder %s31, 0
        %p322 = pnand %p320, %p321
        %p323 = pneg %p322
        // Predicated region
        $region57: #{tpu_custom_call.1} parent=43 // pred_check
          _
        $region58: #{tpu_custom_call.1} parent=43 // pred_check_branch
          %325 = sbr.rel (%p322) target = $region60
        $region59: #{tpu_custom_call.1} parent=43 // pred_region
          // Predicated region
          $region61: #{tpu_custom_call.1} parent=59 // pred_check
            _
          $region62: #{tpu_custom_call.1} parent=59 // pred_check_branch
            %327 = sbr.rel target = $region64
          $region63: #{tpu_custom_call.1} parent=59 // pred_region
            %328 = sst [smem:[#allocation14]] [#allocation13]
            %329 = sst [smem:[#allocation15]] [#allocation12]
          $region64: #{tpu_custom_call.1} parent=59 // pred_fallthru
            _
          %331 = shalt.err (0)
          %s333 = sshll.u32 [#allocation2], 4
          %s334 = int_to_ptr.vmem [resolvable:$true] %s333
          %336 = dma.hbm_to_vmem [thread:$0]  %s0, 4096, %s334, [#allocation3]
          %s337 = scalar_lea.sflag [#allocation3], 1
          // Predicated region
          $region65: #{tpu_custom_call.1} parent=59 // pred_check
            _
          $region66: #{tpu_custom_call.1} parent=59 // pred_check_branch
            %339 = sbr.rel target = $region68
          $region67: #{tpu_custom_call.1} parent=59 // pred_region
            %340 = sst [smem:[#allocation14]] [#allocation17]
            %341 = sst [smem:[#allocation15]] [#allocation16]
          $region68: #{tpu_custom_call.1} parent=59 // pred_fallthru
            _
          %343 = shalt.err (0)
          %s345 = sshll.u32 [#allocation4], 4
          %s346 = int_to_ptr.vmem [resolvable:$true] %s345
          %348 = dma.hbm_to_vmem [thread:$0]  %s1, 2048, %s346, %s337
          %s349 = smul.u32 2, 32
          %s350 = smul.u32 %s349, 2
          %s351 = sshll.u32 %s350, 4
          %352 = dma.done %s337, %s351
          %s353 = smul.u32 256, 1
          %s354 = sshll.u32 %s353, 4
          %355 = dma.done [#allocation3], %s354
        $region60: #{tpu_custom_call.1} parent=43 // pred_fallthru
          _
        %s356 = smul.u32 %s31, 128
        %p357 = scmp.lt.s32.totalorder %s30, 0
        %s358 = ssub.s32 0, %s30
        %s359 = scalar_select %p357, %s358, %s30
        %s360 = sand.u32 %s359, 1
        %s361 = ssub.s32 0, %s360
        %s362 = scalar_select %p357, %s361, %s360
        %p363 = scmp.ne.s32.totalorder %s362, 0
        %p364 = scmp.lt.s32.totalorder %s362, 0
        %p365 = pnand %p364, %p363
        %p366 = pneg %p365
        %s367 = sadd.s32 %s362, 2
        %s368 = scalar_select %p366, %s367, %s362
        %p369 = scmp.eq.s32.totalorder %s368, 0
        // Predicated region
        $region69: #{tpu_custom_call.1} parent=43 // pred_check
          %p370 = pneg %p369
        $region70: #{tpu_custom_call.1} parent=43 // pred_check_branch
          %372 = sbr.rel (%p370) target = $region72
        $region71: #{tpu_custom_call.1} parent=43 // pred_region
          %s373 = sshra.s32 %s356, 5
          %s374 = sand.u32 %s356, 31
          %s375 = smul.u32 %s373, 2
          %s376 = smul.addr %s375, 8
          %s377 = scalar_lea.vmem [#allocation4], %s376
          %v378 = vld [vmem:[%s377] sm:$0xff]
          %v379 = vld [vmem:[%s377 + $0x8] sm:$0xff]
          %v380 = vld [vmem:[%s377 + $0x10] sm:$0xff]
          %v381 = vld [vmem:[%s377 + $0x18] sm:$0xff]
          %v382 = vld [vmem:[%s377 + $0x20] sm:$0xff]
          %v383 = vld [vmem:[%s377 + $0x28] sm:$0xff]
          %v384 = vld [vmem:[%s377 + $0x30] sm:$0xff]
          %v385 = vld [vmem:[%s377 + $0x38] sm:$0xff]
          %v386 = vunpack.c.0.s8 %v378
          %v387 = vunpack.c.0.s8 %v379
          %v388 = vunpack.c.1.s8 %v378
          %v389 = vunpack.c.1.s8 %v379
          %v390 = vunpack.c.2.s8 %v378
          %v391 = vunpack.c.2.s8 %v379
          %v392 = vunpack.c.3.s8 %v378
          %v393 = vunpack.c.3.s8 %v379
          %v394 = vunpack.c.0.s8 %v380
          %v395 = vunpack.c.0.s8 %v381
          %v396 = vunpack.c.1.s8 %v380
          %v397 = vunpack.c.1.s8 %v381
          %v398 = vunpack.c.2.s8 %v380
          %v399 = vunpack.c.2.s8 %v381
          %v400 = vunpack.c.3.s8 %v380
          %v401 = vunpack.c.3.s8 %v381
          %v402 = vunpack.c.0.s8 %v382
          %v403 = vunpack.c.0.s8 %v383
          %v404 = vunpack.c.1.s8 %v382
          %v405 = vunpack.c.1.s8 %v383
          %v406 = vunpack.c.2.s8 %v382
          %v407 = vunpack.c.2.s8 %v383
          %v408 = vunpack.c.3.s8 %v382
          %v409 = vunpack.c.3.s8 %v383
          %v410 = vunpack.c.0.s8 %v384
          %v411 = vunpack.c.0.s8 %v385
          %v412 = vunpack.c.1.s8 %v384
          %v413 = vunpack.c.1.s8 %v385
          %v414 = vunpack.c.2.s8 %v384
          %v415 = vunpack.c.2.s8 %v385
          %v416 = vunpack.c.3.s8 %v384
          %v417 = vunpack.c.3.s8 %v385
          %v418 = vcvt.s32.f32 %v386
          %v419 = vcvt.s32.f32 %v387
          %v420 = vcvt.s32.f32 %v388
          %v421 = vcvt.s32.f32 %v389
          %v422 = vcvt.s32.f32 %v390
          %v423 = vcvt.s32.f32 %v391
          %v424 = vcvt.s32.f32 %v392
          %v425 = vcvt.s32.f32 %v393
          %v426 = vcvt.s32.f32 %v394
          %v427 = vcvt.s32.f32 %v395
          %v428 = vcvt.s32.f32 %v396
          %v429 = vcvt.s32.f32 %v397
          %v430 = vcvt.s32.f32 %v398
          %v431 = vcvt.s32.f32 %v399
          %v432 = vcvt.s32.f32 %v400
          %v433 = vcvt.s32.f32 %v401
          %v434 = vcvt.s32.f32 %v402
          %v435 = vcvt.s32.f32 %v403
          %v436 = vcvt.s32.f32 %v404
          %v437 = vcvt.s32.f32 %v405
          %v438 = vcvt.s32.f32 %v406
          %v439 = vcvt.s32.f32 %v407
          %v440 = vcvt.s32.f32 %v408
          %v441 = vcvt.s32.f32 %v409
          %v442 = vcvt.s32.f32 %v410
          %v443 = vcvt.s32.f32 %v411
          %v444 = vcvt.s32.f32 %v412
          %v445 = vcvt.s32.f32 %v413
          %v446 = vcvt.s32.f32 %v414
          %v447 = vcvt.s32.f32 %v415
          %v448 = vcvt.s32.f32 %v416
          %v449 = vcvt.s32.f32 %v417
          %v450 = vld [vmem:[#allocation2] sm:$0xff]
          %v451 = vld [vmem:[#allocation2 + $0x8] sm:$0xff]
          %v452 = vld [vmem:[#allocation2 + $0x10] sm:$0xff]
          %v453 = vld [vmem:[#allocation2 + $0x18] sm:$0xff]
          %v454 = vld [vmem:[#allocation2 + $0x20] sm:$0xff]
          %v455 = vld [vmem:[#allocation2 + $0x28] sm:$0xff]
          %v456 = vld [vmem:[#allocation2 + $0x30] sm:$0xff]
          %v457 = vld [vmem:[#allocation2 + $0x38] sm:$0xff]
          %v458 = vld [vmem:[#allocation2 + $0x40] sm:$0xff]
          %v459 = vld [vmem:[#allocation2 + $0x48] sm:$0xff]
          %v460 = vld [vmem:[#allocation2 + $0x50] sm:$0xff]
          %v461 = vld [vmem:[#allocation2 + $0x58] sm:$0xff]
          %v462 = vld [vmem:[#allocation2 + $0x60] sm:$0xff]
          %v463 = vld [vmem:[#allocation2 + $0x68] sm:$0xff]
          %v464 = vld [vmem:[#allocation2 + $0x70] sm:$0xff]
          %v465 = vld [vmem:[#allocation2 + $0x78] sm:$0xff]
          %v466 = vld [vmem:[#allocation2 + $0x80] sm:$0xff]
          %v467 = vld [vmem:[#allocation2 + $0x88] sm:$0xff]
          %v468 = vld [vmem:[#allocation2 + $0x90] sm:$0xff]
          %v469 = vld [vmem:[#allocation2 + $0x98] sm:$0xff]
          %v470 = vld [vmem:[#allocation2 + $0xa0] sm:$0xff]
          %v471 = vld [vmem:[#allocation2 + $0xa8] sm:$0xff]
          %v472 = vld [vmem:[#allocation2 + $0xb0] sm:$0xff]
          %v473 = vld [vmem:[#allocation2 + $0xb8] sm:$0xff]
          %v474 = vld [vmem:[#allocation2 + $0xc0] sm:$0xff]
          %v475 = vld [vmem:[#allocation2 + $0xc8] sm:$0xff]
          %v476 = vld [vmem:[#allocation2 + $0xd0] sm:$0xff]
          %v477 = vld [vmem:[#allocation2 + $0xd8] sm:$0xff]
          %v478 = vld [vmem:[#allocation2 + $0xe0] sm:$0xff]
          %v479 = vld [vmem:[#allocation2 + $0xe8] sm:$0xff]
          %v480 = vld [vmem:[#allocation2 + $0xf0] sm:$0xff]
          %v481 = vld [vmem:[#allocation2 + $0xf8] sm:$0xff]
          %s482 = scalar_lea.vmem [#allocation2], %s356
          %v483 = vld [vmem:[%s482] sm:$0xff]
          %v484 = vld [vmem:[%s482 + $0x8] sm:$0xff]
          %v485 = vld [vmem:[%s482 + $0x10] sm:$0xff]
          %v486 = vld [vmem:[%s482 + $0x18] sm:$0xff]
          %v487 = vld [vmem:[%s482 + $0x20] sm:$0xff]
          %v488 = vld [vmem:[%s482 + $0x28] sm:$0xff]
          %v489 = vld [vmem:[%s482 + $0x30] sm:$0xff]
          %v490 = vld [vmem:[%s482 + $0x38] sm:$0xff]
          %v491 = vld [vmem:[%s482 + $0x40] sm:$0xff]
          %v492 = vld [vmem:[%s482 + $0x48] sm:$0xff]
          %v493 = vld [vmem:[%s482 + $0x50] sm:$0xff]
          %v494 = vld [vmem:[%s482 + $0x58] sm:$0xff]
          %v495 = vld [vmem:[%s482 + $0x60] sm:$0xff]
          %v496 = vld [vmem:[%s482 + $0x68] sm:$0xff]
          %v497 = vld [vmem:[%s482 + $0x70] sm:$0xff]
          %v498 = vld [vmem:[%s482 + $0x78] sm:$0xff]
          %499 = vmatprep.subr.mxu0 0.0
          %500 = vmatpush1.msra.mxu0 %v450
          %501 = vmatprep.subr.mxu0 0.0
          %502 = vmatpush1.msra.mxu0 %v451
          %503 = vmatprep.subr.mxu0 0.0
          %504 = vmatpush1.msra.mxu0 %v452
          %505 = vmatprep.subr.mxu0 0.0
          %506 = vmatpush1.msra.mxu0 %v453
          %507 = vmatprep.subr.mxu0 0.0
          %508 = vmatpush1.msra.mxu0 %v454
          %509 = vmatprep.subr.mxu0 0.0
          %510 = vmatpush1.msra.mxu0 %v455
          %511 = vmatprep.subr.mxu0 0.0
          %512 = vmatpush1.msra.mxu0 %v456
          %513 = vmatprep.subr.mxu0 0.0
          %514 = vmatpush1.msra.mxu0 %v457
          %515 = vmatprep.subr.mxu0 0.0
          %516 = vmatpush1.msra.mxu0 %v458
          %517 = vmatprep.subr.mxu0 0.0
          %518 = vmatpush1.msra.mxu0 %v459
          %519 = vmatprep.subr.mxu0 0.0
          %520 = vmatpush1.msra.mxu0 %v460
          %521 = vmatprep.subr.mxu0 0.0
          %522 = vmatpush1.msra.mxu0 %v461
          %523 = vmatprep.subr.mxu0 0.0
          %524 = vmatpush1.msra.mxu0 %v462
          %525 = vmatprep.subr.mxu0 0.0
          %526 = vmatpush1.msra.mxu0 %v463
          %527 = vmatprep.subr.mxu0 0.0
          %528 = vmatpush1.msra.mxu0 %v464
          %529 = vmatprep.subr.mxu0 0.0
          %530 = vmatpush1.msra.mxu0 %v465
          %531 = vmatprep.subr.mxu0 0.0
          %532 = vmatpush1.msra.mxu0 %v466
          %533 = vmatprep.subr.mxu0 0.0
          %534 = vmatpush1.msra.mxu0 %v467
          %535 = vmatprep.subr.mxu0 0.0
          %536 = vmatpush1.msra.mxu0 %v468
          %537 = vmatprep.subr.mxu0 0.0
          %538 = vmatpush1.msra.mxu0 %v469
          %539 = vmatprep.subr.mxu0 0.0
          %540 = vmatpush1.msra.mxu0 %v470
          %541 = vmatprep.subr.mxu0 0.0
          %542 = vmatpush1.msra.mxu0 %v471
          %543 = vmatprep.subr.mxu0 0.0
          %544 = vmatpush1.msra.mxu0 %v472
          %545 = vmatprep.subr.mxu0 0.0
          %546 = vmatpush1.msra.mxu0 %v473
          %547 = vmatprep.subr.mxu0 0.0
          %548 = vmatpush1.msra.mxu0 %v474
          %549 = vmatprep.subr.mxu0 0.0
          %550 = vmatpush1.msra.mxu0 %v475
          %551 = vmatprep.subr.mxu0 0.0
          %552 = vmatpush1.msra.mxu0 %v476
          %553 = vmatprep.subr.mxu0 0.0
          %554 = vmatpush1.msra.mxu0 %v477
          %555 = vmatprep.subr.mxu0 0.0
          %556 = vmatpush1.msra.mxu0 %v478
          %557 = vmatprep.subr.mxu0 0.0
          %558 = vmatpush1.msra.mxu0 %v479
          %559 = vmatprep.subr.mxu0 0.0
          %560 = vmatpush1.msra.mxu0 %v480
          %561 = vmatprep.subr.mxu0 0.0
          %562 = vmatpush1.msra.mxu0 %v481
          %563 = vmatprep.mubr.f32.mxu0 %v419
          %564 = vmatmul.mubr.f32.gmra.mrb[0].mxu0 %v418
          %v565 = vpop.f32.mrb[0].mxu0
          %v566 = vadd.f32 0.0, %v565
          %v567 = vpop.f32.mrb[0].mxu0
          %568 = vmatprep.mubr.f32.mxu0 %v421
          %569 = vmatmul.mubr.f32.gmra.mrb[0].mxu0 %v420
          %v570 = vpop.f32.mrb[0].mxu0
          %v571 = vadd.f32 0.0, %v570
          %v572 = vpop.f32.mrb[0].mxu0
          %573 = vmatprep.mubr.f32.mxu0 %v423
          %574 = vmatmul.mubr.f32.gmra.mrb[0].mxu0 %v422
          %v575 = vpop.f32.mrb[0].mxu0
          %v576 = vadd.f32 0.0, %v575
          %v577 = vpop.f32.mrb[0].mxu0
          %578 = vmatprep.mubr.f32.mxu0 %v425
          %579 = vmatmul.mubr.f32.gmra.mrb[0].mxu0 %v424
          %v580 = vpop.f32.mrb[0].mxu0
          %v581 = vadd.f32 0.0, %v580
          %v582 = vpop.f32.mrb[0].mxu0
          %583 = vmatprep.mubr.f32.mxu0 %v427
          %584 = vmatmul.mubr.f32.gmra.mrb[0].mxu0 %v426
          %v585 = vpop.f32.mrb[0].mxu0
          %v586 = vadd.f32 0.0, %v585
          %v587 = vpop.f32.mrb[0].mxu0
          %588 = vmatprep.mubr.f32.mxu0 %v429
          %589 = vmatmul.mubr.f32.gmra.mrb[0].mxu0 %v428
          %v590 = vpop.f32.mrb[0].mxu0
          %v591 = vadd.f32 0.0, %v590
          %v592 = vpop.f32.mrb[0].mxu0
          %593 = vmatprep.mubr.f32.mxu0 %v431
          %594 = vmatmul.mubr.f32.gmra.mrb[0].mxu0 %v430
          %v595 = vpop.f32.mrb[0].mxu0
          %v596 = vadd.f32 0.0, %v595
          %v597 = vpop.f32.mrb[0].mxu0
          %598 = vmatprep.mubr.f32.mxu0 %v433
          %599 = vmatmul.mubr.f32.gmra.mrb[0].mxu0 %v432
          %v600 = vpop.f32.mrb[0].mxu0
          %v601 = vadd.f32 0.0, %v600
          %v602 = vpop.f32.mrb[0].mxu0
          %603 = vmatprep.mubr.f32.mxu0 %v435
          %604 = vmatmul.mubr.f32.gmra.mrb[0].mxu0 %v434
          %v605 = vpop.f32.mrb[0].mxu0
          %v606 = vadd.f32 0.0, %v605
          %v607 = vpop.f32.mrb[0].mxu0
          %608 = vmatprep.mubr.f32.mxu0 %v437
          %609 = vmatmul.mubr.f32.gmra.mrb[0].mxu0 %v436
          %v610 = vpop.f32.mrb[0].mxu0
          %v611 = vadd.f32 0.0, %v610
          %v612 = vpop.f32.mrb[0].mxu0
          %613 = vmatprep.mubr.f32.mxu0 %v439
          %614 = vmatmul.mubr.f32.gmra.mrb[0].mxu0 %v438
          %v615 = vpop.f32.mrb[0].mxu0
          %v616 = vadd.f32 0.0, %v615
          %v617 = vpop.f32.mrb[0].mxu0
          %618 = vmatprep.mubr.f32.mxu0 %v441
          %619 = vmatmul.mubr.f32.gmra.mrb[0].mxu0 %v440
          %v620 = vpop.f32.mrb[0].mxu0
          %v621 = vadd.f32 0.0, %v620
          %v622 = vpop.f32.mrb[0].mxu0
          %623 = vmatprep.mubr.f32.mxu0 %v443
          %624 = vmatmul.mubr.f32.gmra.mrb[0].mxu0 %v442
          %v625 = vpop.f32.mrb[0].mxu0
          %v626 = vadd.f32 0.0, %v625
          %v627 = vpop.f32.mrb[0].mxu0
          %628 = vmatprep.mubr.f32.mxu0 %v445
          %629 = vmatmul.mubr.f32.gmra.mrb[0].mxu0 %v444
          %v630 = vpop.f32.mrb[0].mxu0
          %v631 = vadd.f32 0.0, %v630
          %v632 = vpop.f32.mrb[0].mxu0
          %633 = vmatprep.mubr.f32.mxu0 %v447
          %634 = vmatmul.mubr.f32.gmra.mrb[0].mxu0 %v446
          %v635 = vpop.f32.mrb[0].mxu0
          %v636 = vadd.f32 0.0, %v635
          %v637 = vpop.f32.mrb[0].mxu0
          %638 = vmatprep.mubr.f32.mxu0 %v449
          %639 = vmatmul.mubr.f32.gmra.mrb[0].mxu0 %v448
          %v640 = vpop.f32.mrb[0].mxu0
          %v641 = vadd.f32 0.0, %v640
          %v642 = vpop.f32.mrb[0].mxu0
          %643 = vdwg.mxu0
          %v644 = vld [vmem:[%s280] sm:$0xff]
          %v645 = vld [vmem:[%s280 + $0x8] sm:$0xff]
          %v646 = vld [vmem:[%s280 + $0x10] sm:$0xff]
          %v647 = vld [vmem:[%s280 + $0x18] sm:$0xff]
          %v648 = vld [vmem:[%s280 + $0x20] sm:$0xff]
          %v649 = vld [vmem:[%s280 + $0x28] sm:$0xff]
          %v650 = vld [vmem:[%s280 + $0x30] sm:$0xff]
          %v651 = vld [vmem:[%s280 + $0x38] sm:$0xff]
          %v652 = vld [vmem:[%s280 + $0x40] sm:$0xff]
          %v653 = vld [vmem:[%s280 + $0x48] sm:$0xff]
          %v654 = vld [vmem:[%s280 + $0x50] sm:$0xff]
          %v655 = vld [vmem:[%s280 + $0x58] sm:$0xff]
          %v656 = vld [vmem:[%s280 + $0x60] sm:$0xff]
          %v657 = vld [vmem:[%s280 + $0x68] sm:$0xff]
          %v658 = vld [vmem:[%s280 + $0x70] sm:$0xff]
          %v659 = vld [vmem:[%s280 + $0x78] sm:$0xff]
          %v660 = vld [vmem:[%s280 + $0x80] sm:$0xff]
          %v661 = vld [vmem:[%s280 + $0x88] sm:$0xff]
          %v662 = vld [vmem:[%s280 + $0x90] sm:$0xff]
          %v663 = vld [vmem:[%s280 + $0x98] sm:$0xff]
          %v664 = vld [vmem:[%s280 + $0xa0] sm:$0xff]
          %v665 = vld [vmem:[%s280 + $0xa8] sm:$0xff]
          %v666 = vld [vmem:[%s280 + $0xb0] sm:$0xff]
          %v667 = vld [vmem:[%s280 + $0xb8] sm:$0xff]
          %v668 = vld [vmem:[%s280 + $0xc0] sm:$0xff]
          %v669 = vld [vmem:[%s280 + $0xc8] sm:$0xff]
          %v670 = vld [vmem:[%s280 + $0xd0] sm:$0xff]
          %v671 = vld [vmem:[%s280 + $0xd8] sm:$0xff]
          %v672 = vld [vmem:[%s280 + $0xe0] sm:$0xff]
          %v673 = vld [vmem:[%s280 + $0xe8] sm:$0xff]
          %v674 = vld [vmem:[%s280 + $0xf0] sm:$0xff]
          %v675 = vld [vmem:[%s280 + $0xf8] sm:$0xff]
          %v676 = vld [vmem:[%s280 + $0x100] sm:$0xff]
          %v677 = vld [vmem:[%s280 + $0x108] sm:$0xff]
          %v678 = vld [vmem:[%s280 + $0x110] sm:$0xff]
          %v679 = vld [vmem:[%s280 + $0x118] sm:$0xff]
          %v680 = vld [vmem:[%s280 + $0x120] sm:$0xff]
          %v681 = vld [vmem:[%s280 + $0x128] sm:$0xff]
          %v682 = vld [vmem:[%s280 + $0x130] sm:$0xff]
          %v683 = vld [vmem:[%s280 + $0x138] sm:$0xff]
          %v684 = vld [vmem:[%s280 + $0x140] sm:$0xff]
          %v685 = vld [vmem:[%s280 + $0x148] sm:$0xff]
          %v686 = vld [vmem:[%s280 + $0x150] sm:$0xff]
          %v687 = vld [vmem:[%s280 + $0x158] sm:$0xff]
          %v688 = vld [vmem:[%s280 + $0x160] sm:$0xff]
          %v689 = vld [vmem:[%s280 + $0x168] sm:$0xff]
          %v690 = vld [vmem:[%s280 + $0x170] sm:$0xff]
          %v691 = vld [vmem:[%s280 + $0x178] sm:$0xff]
          %v692 = vld [vmem:[%s4] sm:$0x7]
          %v694 = vlaneseq
          %v695 = vshrl.u32 %v694, 7
          %v696 = vsub.s32 0, %v695
          %v697 = vrot.slane %v692, %v696
          %v698 = vlaneseq
          %v699 = vshrl.u32 %v698, 7
          %v700 = vsub.s32 1, %v699
          %v701 = vrot.slane %v692, %v700
          %v702 = vlaneseq
          %v703 = vshrl.u32 %v702, 7
          %v704 = vsub.s32 2, %v703
          %v705 = vrot.slane %v692, %v704
          %709 = vmatprep.subr.mxu0 %v645
          %710 = vmatpush1.msra.mxu0 %v644
          %711 = vmatprep.subr.mxu0 %v648
          %712 = vmatpush1.msra.mxu0 %v647
          %713 = vmatprep.subr.mxu0 %v651
          %714 = vmatpush1.msra.mxu0 %v650
          %715 = vmatprep.subr.mxu0 %v654
          %716 = vmatpush1.msra.mxu0 %v653
          %717 = vmatprep.subr.mxu0 %v657
          %718 = vmatpush1.msra.mxu0 %v656
          %719 = vmatprep.subr.mxu0 %v660
          %720 = vmatpush1.msra.mxu0 %v659
          %721 = vmatprep.subr.mxu0 %v663
          %722 = vmatpush1.msra.mxu0 %v662
          %723 = vmatprep.subr.mxu0 %v666
          %724 = vmatpush1.msra.mxu0 %v665
          %725 = vmatprep.subr.mxu0 %v669
          %726 = vmatpush1.msra.mxu0 %v668
          %727 = vmatprep.subr.mxu0 %v672
          %728 = vmatpush1.msra.mxu0 %v671
          %729 = vmatprep.subr.mxu0 %v675
          %730 = vmatpush1.msra.mxu0 %v674
          %731 = vmatprep.subr.mxu0 %v678
          %732 = vmatpush1.msra.mxu0 %v677
          %733 = vmatprep.subr.mxu0 %v681
          %734 = vmatpush1.msra.mxu0 %v680
          %735 = vmatprep.subr.mxu0 %v684
          %736 = vmatpush1.msra.mxu0 %v683
          %737 = vmatprep.subr.mxu0 %v687
          %738 = vmatpush1.msra.mxu0 %v686
          %739 = vmatprep.subr.mxu0 %v690
          %740 = vmatpush1.msra.mxu0 %v689
          %741 = vmatprep.subr.mxu0 0.0
          %742 = vmatpush1.msra.mxu0 0.0
          %743 = vmatprep.subr.mxu0 0.0
          %744 = vmatpush1.msra.mxu0 0.0
          %745 = vmatprep.subr.mxu0 0.0
          %746 = vmatpush1.msra.mxu0 0.0
          %747 = vmatprep.subr.mxu0 0.0
          %748 = vmatpush1.msra.mxu0 0.0
          %749 = vmatprep.subr.mxu0 0.0
          %750 = vmatpush1.msra.mxu0 0.0
          %751 = vmatprep.subr.mxu0 0.0
          %752 = vmatpush1.msra.mxu0 0.0
          %753 = vmatprep.subr.mxu0 0.0
          %754 = vmatpush1.msra.mxu0 0.0
          %755 = vmatprep.subr.mxu0 0.0
          %756 = vmatpush1.msra.mxu0 0.0
          %757 = vmatprep.subr.mxu0 0.0
          %758 = vmatpush1.msra.mxu0 0.0
          %759 = vmatprep.subr.mxu0 0.0
          %760 = vmatpush1.msra.mxu0 0.0
          %761 = vmatprep.subr.mxu0 0.0
          %762 = vmatpush1.msra.mxu0 0.0
          %763 = vmatprep.subr.mxu0 0.0
          %764 = vmatpush1.msra.mxu0 0.0
          %765 = vmatprep.subr.mxu0 0.0
          %766 = vmatpush1.msra.mxu0 0.0
          %767 = vmatprep.subr.mxu0 0.0
          %768 = vmatpush1.msra.mxu0 0.0
          %769 = vmatprep.subr.mxu0 0.0
          %770 = vmatpush1.msra.mxu0 0.0
          %771 = vmatprep.subr.mxu0 0.0
          %772 = vmatpush1.msra.mxu0 0.0
          %773 = vmatprep.mubr.f32.mxu0 0.0
          %774 = vmatmul.mubr.f32.gmra.mrb[0].mxu0 %v566
          %v775 = vpop.f32.mrb[0].mxu0
          %v776 = vadd.f32 %v697, %v775
          %v777 = vpop.f32.mrb[0].mxu0
          %v778 = vadd.f32 %v701, %v777
          %779 = vmatprep.mubr.f32.mxu0 0.0
          %780 = vmatmul.mubr.f32.gmra.mrb[0].mxu0 %v571
          %v781 = vpop.f32.mrb[0].mxu0
          %v782 = vadd.f32 %v697, %v781
          %v783 = vpop.f32.mrb[0].mxu0
          %v784 = vadd.f32 %v701, %v783
          %785 = vmatprep.mubr.f32.mxu0 0.0
          %786 = vmatmul.mubr.f32.gmra.mrb[0].mxu0 %v576
          %v787 = vpop.f32.mrb[0].mxu0
          %v788 = vadd.f32 %v697, %v787
          %v789 = vpop.f32.mrb[0].mxu0
          %v790 = vadd.f32 %v701, %v789
          %791 = vmatprep.mubr.f32.mxu0 0.0
          %792 = vmatmul.mubr.f32.gmra.mrb[0].mxu0 %v581
          %v793 = vpop.f32.mrb[0].mxu0
          %v794 = vadd.f32 %v697, %v793
          %v795 = vpop.f32.mrb[0].mxu0
          %v796 = vadd.f32 %v701, %v795
          %797 = vmatprep.mubr.f32.mxu0 0.0
          %798 = vmatmul.mubr.f32.gmra.mrb[0].mxu0 %v586
          %v799 = vpop.f32.mrb[0].mxu0
          %v800 = vadd.f32 %v697, %v799
          %v801 = vpop.f32.mrb[0].mxu0
          %v802 = vadd.f32 %v701, %v801
          %803 = vmatprep.mubr.f32.mxu0 0.0
          %804 = vmatmul.mubr.f32.gmra.mrb[0].mxu0 %v591
          %v805 = vpop.f32.mrb[0].mxu0
          %v806 = vadd.f32 %v697, %v805
          %v807 = vpop.f32.mrb[0].mxu0
          %v808 = vadd.f32 %v701, %v807
          %809 = vmatprep.mubr.f32.mxu0 0.0
          %810 = vmatmul.mubr.f32.gmra.mrb[0].mxu0 %v596
          %v811 = vpop.f32.mrb[0].mxu0
          %v812 = vadd.f32 %v697, %v811
          %v813 = vpop.f32.mrb[0].mxu0
          %v814 = vadd.f32 %v701, %v813
          %815 = vmatprep.mubr.f32.mxu0 0.0
          %816 = vmatmul.mubr.f32.gmra.mrb[0].mxu0 %v601
          %v817 = vpop.f32.mrb[0].mxu0
          %v818 = vadd.f32 %v697, %v817
          %v819 = vpop.f32.mrb[0].mxu0
          %v820 = vadd.f32 %v701, %v819
          %821 = vmatprep.mubr.f32.mxu0 0.0
          %822 = vmatmul.mubr.f32.gmra.mrb[0].mxu0 %v606
          %v823 = vpop.f32.mrb[0].mxu0
          %v824 = vadd.f32 %v697, %v823
          %v825 = vpop.f32.mrb[0].mxu0
          %v826 = vadd.f32 %v701, %v825
          %827 = vmatprep.mubr.f32.mxu0 0.0
          %828 = vmatmul.mubr.f32.gmra.mrb[0].mxu0 %v611
          %v829 = vpop.f32.mrb[0].mxu0
          %v830 = vadd.f32 %v697, %v829
          %v831 = vpop.f32.mrb[0].mxu0
          %v832 = vadd.f32 %v701, %v831
          %833 = vmatprep.mubr.f32.mxu0 0.0
          %834 = vmatmul.mubr.f32.gmra.mrb[0].mxu0 %v616
          %v835 = vpop.f32.mrb[0].mxu0
          %v836 = vadd.f32 %v697, %v835
          %v837 = vpop.f32.mrb[0].mxu0
          %v838 = vadd.f32 %v701, %v837
          %839 = vmatprep.mubr.f32.mxu0 0.0
          %840 = vmatmul.mubr.f32.gmra.mrb[0].mxu0 %v621
          %v841 = vpop.f32.mrb[0].mxu0
          %v842 = vadd.f32 %v697, %v841
          %v843 = vpop.f32.mrb[0].mxu0
          %v844 = vadd.f32 %v701, %v843
          %845 = vmatprep.mubr.f32.mxu0 0.0
          %846 = vmatmul.mubr.f32.gmra.mrb[0].mxu0 %v626
          %v847 = vpop.f32.mrb[0].mxu0
          %v848 = vadd.f32 %v697, %v847
          %v849 = vpop.f32.mrb[0].mxu0
          %v850 = vadd.f32 %v701, %v849
          %851 = vmatprep.mubr.f32.mxu0 0.0
          %852 = vmatmul.mubr.f32.gmra.mrb[0].mxu0 %v631
          %v853 = vpop.f32.mrb[0].mxu0
          %v854 = vadd.f32 %v697, %v853
          %v855 = vpop.f32.mrb[0].mxu0
          %v856 = vadd.f32 %v701, %v855
          %857 = vmatprep.mubr.f32.mxu0 0.0
          %858 = vmatmul.mubr.f32.gmra.mrb[0].mxu0 %v636
          %v859 = vpop.f32.mrb[0].mxu0
          %v860 = vadd.f32 %v697, %v859
          %v861 = vpop.f32.mrb[0].mxu0
          %v862 = vadd.f32 %v701, %v861
          %863 = vmatprep.mubr.f32.mxu0 0.0
          %864 = vmatmul.mubr.f32.gmra.mrb[0].mxu0 %v641
          %v865 = vpop.f32.mrb[0].mxu0
          %v866 = vadd.f32 %v697, %v865
          %v867 = vpop.f32.mrb[0].mxu0
          %v868 = vadd.f32 %v701, %v867
          %869 = vdwg.mxu0
          %870 = vmatprep.subr.mxu0 0.0
          %871 = vmatpush1.msra.mxu0 %v646
          %872 = vmatprep.subr.mxu0 0.0
          %873 = vmatpush1.msra.mxu0 %v649
          %874 = vmatprep.subr.mxu0 0.0
          %875 = vmatpush1.msra.mxu0 %v652
          %876 = vmatprep.subr.mxu0 0.0
          %877 = vmatpush1.msra.mxu0 %v655
          %878 = vmatprep.subr.mxu0 0.0
          %879 = vmatpush1.msra.mxu0 %v658
          %880 = vmatprep.subr.mxu0 0.0
          %881 = vmatpush1.msra.mxu0 %v661
          %882 = vmatprep.subr.mxu0 0.0
          %883 = vmatpush1.msra.mxu0 %v664
          %884 = vmatprep.subr.mxu0 0.0
          %885 = vmatpush1.msra.mxu0 %v667
          %886 = vmatprep.subr.mxu0 0.0
          %887 = vmatpush1.msra.mxu0 %v670
          %888 = vmatprep.subr.mxu0 0.0
          %889 = vmatpush1.msra.mxu0 %v673
          %890 = vmatprep.subr.mxu0 0.0
          %891 = vmatpush1.msra.mxu0 %v676
          %892 = vmatprep.subr.mxu0 0.0
          %893 = vmatpush1.msra.mxu0 %v679
          %894 = vmatprep.subr.mxu0 0.0
          %895 = vmatpush1.msra.mxu0 %v682
          %896 = vmatprep.subr.mxu0 0.0
          %897 = vmatpush1.msra.mxu0 %v685
          %898 = vmatprep.subr.mxu0 0.0
          %899 = vmatpush1.msra.mxu0 %v688
          %900 = vmatprep.subr.mxu0 0.0
          %901 = vmatpush1.msra.mxu0 %v691
          %902 = vmatprep.subr.mxu0 0.0
          %903 = vmatpush1.msra.mxu0 0.0
          %904 = vmatprep.subr.mxu0 0.0
          %905 = vmatpush1.msra.mxu0 0.0
          %906 = vmatprep.subr.mxu0 0.0
          %907 = vmatpush1.msra.mxu0 0.0
          %908 = vmatprep.subr.mxu0 0.0
          %909 = vmatpush1.msra.mxu0 0.0
          %910 = vmatprep.subr.mxu0 0.0
          %911 = vmatpush1.msra.mxu0 0.0
          %912 = vmatprep.subr.mxu0 0.0
          %913 = vmatpush1.msra.mxu0 0.0
          %914 = vmatprep.subr.mxu0 0.0
          %915 = vmatpush1.msra.mxu0 0.0
          %916 = vmatprep.subr.mxu0 0.0
          %917 = vmatpush1.msra.mxu0 0.0
          %918 = vmatprep.subr.mxu0 0.0
          %919 = vmatpush1.msra.mxu0 0.0
          %920 = vmatprep.subr.mxu0 0.0
          %921 = vmatpush1.msra.mxu0 0.0
          %922 = vmatprep.subr.mxu0 0.0
          %923 = vmatpush1.msra.mxu0 0.0
          %924 = vmatprep.subr.mxu0 0.0
          %925 = vmatpush1.msra.mxu0 0.0
          %926 = vmatprep.subr.mxu0 0.0
          %927 = vmatpush1.msra.mxu0 0.0
          %928 = vmatprep.subr.mxu0 0.0
          %929 = vmatpush1.msra.mxu0 0.0
          %930 = vmatprep.subr.mxu0 0.0
          %931 = vmatpush1.msra.mxu0 0.0
          %932 = vmatprep.subr.mxu0 0.0
          %933 = vmatpush1.msra.mxu0 0.0
          %934 = vmatprep.mubr.f32.mxu0 0.0
          %935 = vmatmul.mubr.f32.gmra.mrb[0].mxu0 %v566
          %v936 = vpop.f32.mrb[0].mxu0
          %v937 = vadd.f32 %v705, %v936
          %v938 = vpop.f32.mrb[0].mxu0
          %939 = vmatprep.mubr.f32.mxu0 0.0
          %940 = vmatmul.mubr.f32.gmra.mrb[0].mxu0 %v571
          %v941 = vpop.f32.mrb[0].mxu0
          %v942 = vadd.f32 %v705, %v941
          %v943 = vpop.f32.mrb[0].mxu0
          %944 = vmatprep.mubr.f32.mxu0 0.0
          %945 = vmatmul.mubr.f32.gmra.mrb[0].mxu0 %v576
          %v946 = vpop.f32.mrb[0].mxu0
          %v947 = vadd.f32 %v705, %v946
          %v948 = vpop.f32.mrb[0].mxu0
          %949 = vmatprep.mubr.f32.mxu0 0.0
          %950 = vmatmul.mubr.f32.gmra.mrb[0].mxu0 %v581
          %v951 = vpop.f32.mrb[0].mxu0
          %v952 = vadd.f32 %v705, %v951
          %v953 = vpop.f32.mrb[0].mxu0
          %954 = vmatprep.mubr.f32.mxu0 0.0
          %955 = vmatmul.mubr.f32.gmra.mrb[0].mxu0 %v586
          %v956 = vpop.f32.mrb[0].mxu0
          %v957 = vadd.f32 %v705, %v956
          %v958 = vpop.f32.mrb[0].mxu0
          %959 = vmatprep.mubr.f32.mxu0 0.0
          %960 = vmatmul.mubr.f32.gmra.mrb[0].mxu0 %v591
          %v961 = vpop.f32.mrb[0].mxu0
          %v962 = vadd.f32 %v705, %v961
          %v963 = vpop.f32.mrb[0].mxu0
          %964 = vmatprep.mubr.f32.mxu0 0.0
          %965 = vmatmul.mubr.f32.gmra.mrb[0].mxu0 %v596
          %v966 = vpop.f32.mrb[0].mxu0
          %v967 = vadd.f32 %v705, %v966
          %v968 = vpop.f32.mrb[0].mxu0
          %969 = vmatprep.mubr.f32.mxu0 0.0
          %970 = vmatmul.mubr.f32.gmra.mrb[0].mxu0 %v601
          %v971 = vpop.f32.mrb[0].mxu0
          %v972 = vadd.f32 %v705, %v971
          %v973 = vpop.f32.mrb[0].mxu0
          %974 = vmatprep.mubr.f32.mxu0 0.0
          %975 = vmatmul.mubr.f32.gmra.mrb[0].mxu0 %v606
          %v976 = vpop.f32.mrb[0].mxu0
          %v977 = vadd.f32 %v705, %v976
          %v978 = vpop.f32.mrb[0].mxu0
          %979 = vmatprep.mubr.f32.mxu0 0.0
          %980 = vmatmul.mubr.f32.gmra.mrb[0].mxu0 %v611
          %v981 = vpop.f32.mrb[0].mxu0
          %v982 = vadd.f32 %v705, %v981
          %v983 = vpop.f32.mrb[0].mxu0
          %984 = vmatprep.mubr.f32.mxu0 0.0
          %985 = vmatmul.mubr.f32.gmra.mrb[0].mxu0 %v616
          %v986 = vpop.f32.mrb[0].mxu0
          %v987 = vadd.f32 %v705, %v986
          %v988 = vpop.f32.mrb[0].mxu0
          %989 = vmatprep.mubr.f32.mxu0 0.0
          %990 = vmatmul.mubr.f32.gmra.mrb[0].mxu0 %v621
          %v991 = vpop.f32.mrb[0].mxu0
          %v992 = vadd.f32 %v705, %v991
          %v993 = vpop.f32.mrb[0].mxu0
          %994 = vmatprep.mubr.f32.mxu0 0.0
          %995 = vmatmul.mubr.f32.gmra.mrb[0].mxu0 %v626
          %v996 = vpop.f32.mrb[0].mxu0
          %v997 = vadd.f32 %v705, %v996
          %v998 = vpop.f32.mrb[0].mxu0
          %999 = vmatprep.mubr.f32.mxu0 0.0
          %1000 = vmatmul.mubr.f32.gmra.mrb[0].mxu0 %v631
          %v1001 = vpop.f32.mrb[0].mxu0
          %v1002 = vadd.f32 %v705, %v1001
          %v1003 = vpop.f32.mrb[0].mxu0
          %1004 = vmatprep.mubr.f32.mxu0 0.0
          %1005 = vmatmul.mubr.f32.gmra.mrb[0].mxu0 %v636
          %v1006 = vpop.f32.mrb[0].mxu0
          %v1007 = vadd.f32 %v705, %v1006
          %v1008 = vpop.f32.mrb[0].mxu0
          %1009 = vmatprep.mubr.f32.mxu0 0.0
          %1010 = vmatmul.mubr.f32.gmra.mrb[0].mxu0 %v641
          %v1011 = vpop.f32.mrb[0].mxu0
          %v1012 = vadd.f32 %v705, %v1011
          %v1013 = vpop.f32.mrb[0].mxu0
          %1014 = vdwg.mxu0
          %v1015 = vld [vmem:[#allocation8] sm:$0xff]
          %v1016 = vld [vmem:[#allocation8 + $0x8] sm:$0xff]
          %v1017 = vld [vmem:[#allocation8 + $0x10] sm:$0xff]
          %v1018 = vld [vmem:[#allocation8 + $0x18] sm:$0xff]
          %v1019 = vld [vmem:[#allocation8 + $0x20] sm:$0xff]
          %v1020 = vld [vmem:[#allocation8 + $0x28] sm:$0xff]
          %v1021 = vld [vmem:[#allocation8 + $0x30] sm:$0xff]
          %v1022 = vld [vmem:[#allocation8 + $0x38] sm:$0xff]
          %v1023 = vld [vmem:[#allocation8 + $0x40] sm:$0xff]
          %v1024 = vld [vmem:[#allocation8 + $0x48] sm:$0xff]
          %v1025 = vld [vmem:[#allocation8 + $0x50] sm:$0xff]
          %v1026 = vld [vmem:[#allocation8 + $0x58] sm:$0xff]
          %v1027 = vld [vmem:[#allocation8 + $0x60] sm:$0xff]
          %v1028 = vld [vmem:[#allocation8 + $0x68] sm:$0xff]
          %v1029 = vld [vmem:[#allocation8 + $0x70] sm:$0xff]
          %v1030 = vld [vmem:[#allocation8 + $0x78] sm:$0xff]
          %v1031 = vld [vmem:[#allocation8 + $0x80] sm:$0xff]
          %v1032 = vld [vmem:[#allocation8 + $0x88] sm:$0xff]
          %v1033 = vld [vmem:[#allocation8 + $0x90] sm:$0xff]
          %v1034 = vld [vmem:[#allocation8 + $0x98] sm:$0xff]
          %v1035 = vld [vmem:[#allocation8 + $0xa0] sm:$0xff]
          %v1036 = vld [vmem:[#allocation8 + $0xa8] sm:$0xff]
          %v1037 = vld [vmem:[#allocation8 + $0xb0] sm:$0xff]
          %v1038 = vld [vmem:[#allocation8 + $0xb8] sm:$0xff]
          %v1039 = vld [vmem:[#allocation8 + $0xc0] sm:$0xff]
          %v1040 = vld [vmem:[#allocation8 + $0xc8] sm:$0xff]
          %v1041 = vld [vmem:[#allocation8 + $0xd0] sm:$0xff]
          %v1042 = vld [vmem:[#allocation8 + $0xd8] sm:$0xff]
          %v1043 = vld [vmem:[#allocation8 + $0xe0] sm:$0xff]
          %v1044 = vld [vmem:[#allocation8 + $0xe8] sm:$0xff]
          %v1045 = vld [vmem:[#allocation8 + $0xf0] sm:$0xff]
          %v1046 = vld [vmem:[#allocation8 + $0xf8] sm:$0xff]
          %v1047 = vld [vmem:[#allocation8 + $0x100] sm:$0xff]
          %v1048 = vld [vmem:[#allocation8 + $0x108] sm:$0xff]
          %v1049 = vld [vmem:[#allocation8 + $0x110] sm:$0xff]
          %v1050 = vld [vmem:[#allocation8 + $0x118] sm:$0xff]
          %v1051 = vld [vmem:[#allocation8 + $0x120] sm:$0xff]
          %v1052 = vld [vmem:[#allocation8 + $0x128] sm:$0xff]
          %v1053 = vld [vmem:[#allocation8 + $0x130] sm:$0xff]
          %v1054 = vld [vmem:[#allocation8 + $0x138] sm:$0xff]
          %v1055 = vld [vmem:[#allocation8 + $0x140] sm:$0xff]
          %v1056 = vld [vmem:[#allocation8 + $0x148] sm:$0xff]
          %v1057 = vld [vmem:[#allocation8 + $0x150] sm:$0xff]
          %v1058 = vld [vmem:[#allocation8 + $0x158] sm:$0xff]
          %v1059 = vld [vmem:[#allocation8 + $0x160] sm:$0xff]
          %v1060 = vld [vmem:[#allocation8 + $0x168] sm:$0xff]
          %v1061 = vld [vmem:[#allocation8 + $0x170] sm:$0xff]
          %v1062 = vld [vmem:[#allocation8 + $0x178] sm:$0xff]
          %v1063 = vld [vmem:[%s5] sm:$0x7]
          %v1065 = vlaneseq
          %v1066 = vshrl.u32 %v1065, 7
          %v1067 = vsub.s32 0, %v1066
          %v1068 = vrot.slane %v1063, %v1067
          %v1069 = vlaneseq
          %v1070 = vshrl.u32 %v1069, 7
          %v1071 = vsub.s32 1, %v1070
          %v1072 = vrot.slane %v1063, %v1071
          %v1073 = vlaneseq
          %v1074 = vshrl.u32 %v1073, 7
          %v1075 = vsub.s32 2, %v1074
          %v1076 = vrot.slane %v1063, %v1075
          %1080 = vmatprep.subr.mxu0 %v1016
          %1081 = vmatpush1.msra.mxu0 %v1015
          %1082 = vmatprep.subr.mxu0 %v1019
          %1083 = vmatpush1.msra.mxu0 %v1018
          %1084 = vmatprep.subr.mxu0 %v1022
          %1085 = vmatpush1.msra.mxu0 %v1021
          %1086 = vmatprep.subr.mxu0 %v1025
          %1087 = vmatpush1.msra.mxu0 %v1024
          %1088 = vmatprep.subr.mxu0 %v1028
          %1089 = vmatpush1.msra.mxu0 %v1027
          %1090 = vmatprep.subr.mxu0 %v1031
          %1091 = vmatpush1.msra.mxu0 %v1030
          %1092 = vmatprep.subr.mxu0 %v1034
          %1093 = vmatpush1.msra.mxu0 %v1033
          %1094 = vmatprep.subr.mxu0 %v1037
          %1095 = vmatpush1.msra.mxu0 %v1036
          %1096 = vmatprep.subr.mxu0 %v1040
          %1097 = vmatpush1.msra.mxu0 %v1039
          %1098 = vmatprep.subr.mxu0 %v1043
          %1099 = vmatpush1.msra.mxu0 %v1042
          %1100 = vmatprep.subr.mxu0 %v1046
          %1101 = vmatpush1.msra.mxu0 %v1045
          %1102 = vmatprep.subr.mxu0 %v1049
          %1103 = vmatpush1.msra.mxu0 %v1048
          %1104 = vmatprep.subr.mxu0 %v1052
          %1105 = vmatpush1.msra.mxu0 %v1051
          %1106 = vmatprep.subr.mxu0 %v1055
          %1107 = vmatpush1.msra.mxu0 %v1054
          %1108 = vmatprep.subr.mxu0 %v1058
          %1109 = vmatpush1.msra.mxu0 %v1057
          %1110 = vmatprep.subr.mxu0 %v1061
          %1111 = vmatpush1.msra.mxu0 %v1060
          %1112 = vmatprep.subr.mxu0 0.0
          %1113 = vmatpush1.msra.mxu0 0.0
          %1114 = vmatprep.subr.mxu0 0.0
          %1115 = vmatpush1.msra.mxu0 0.0
          %1116 = vmatprep.subr.mxu0 0.0
          %1117 = vmatpush1.msra.mxu0 0.0
          %1118 = vmatprep.subr.mxu0 0.0
          %1119 = vmatpush1.msra.mxu0 0.0
          %1120 = vmatprep.subr.mxu0 0.0
          %1121 = vmatpush1.msra.mxu0 0.0
          %1122 = vmatprep.subr.mxu0 0.0
          %1123 = vmatpush1.msra.mxu0 0.0
          %1124 = vmatprep.subr.mxu0 0.0
          %1125 = vmatpush1.msra.mxu0 0.0
          %1126 = vmatprep.subr.mxu0 0.0
          %1127 = vmatpush1.msra.mxu0 0.0
          %1128 = vmatprep.subr.mxu0 0.0
          %1129 = vmatpush1.msra.mxu0 0.0
          %1130 = vmatprep.subr.mxu0 0.0
          %1131 = vmatpush1.msra.mxu0 0.0
          %1132 = vmatprep.subr.mxu0 0.0
          %1133 = vmatpush1.msra.mxu0 0.0
          %1134 = vmatprep.subr.mxu0 0.0
          %1135 = vmatpush1.msra.mxu0 0.0
          %1136 = vmatprep.subr.mxu0 0.0
          %1137 = vmatpush1.msra.mxu0 0.0
          %1138 = vmatprep.subr.mxu0 0.0
          %1139 = vmatpush1.msra.mxu0 0.0
          %1140 = vmatprep.subr.mxu0 0.0
          %1141 = vmatpush1.msra.mxu0 0.0
          %1142 = vmatprep.subr.mxu0 0.0
          %1143 = vmatpush1.msra.mxu0 0.0
          %1144 = vmatprep.mubr.f32.mxu0 0.0
          %1145 = vmatmul.mubr.f32.gmra.mrb[0].mxu0 %v483
          %v1146 = vpop.f32.mrb[0].mxu0
          %v1147 = vadd.f32 %v1068, %v1146
          %v1148 = vpop.f32.mrb[0].mxu0
          %v1149 = vadd.f32 %v1072, %v1148
          %1150 = vmatprep.mubr.f32.mxu0 0.0
          %1151 = vmatmul.mubr.f32.gmra.mrb[0].mxu0 %v484
          %v1152 = vpop.f32.mrb[0].mxu0
          %v1153 = vadd.f32 %v1068, %v1152
          %v1154 = vpop.f32.mrb[0].mxu0
          %v1155 = vadd.f32 %v1072, %v1154
          %1156 = vmatprep.mubr.f32.mxu0 0.0
          %1157 = vmatmul.mubr.f32.gmra.mrb[0].mxu0 %v485
          %v1158 = vpop.f32.mrb[0].mxu0
          %v1159 = vadd.f32 %v1068, %v1158
          %v1160 = vpop.f32.mrb[0].mxu0
          %v1161 = vadd.f32 %v1072, %v1160
          %1162 = vmatprep.mubr.f32.mxu0 0.0
          %1163 = vmatmul.mubr.f32.gmra.mrb[0].mxu0 %v486
          %v1164 = vpop.f32.mrb[0].mxu0
          %v1165 = vadd.f32 %v1068, %v1164
          %v1166 = vpop.f32.mrb[0].mxu0
          %v1167 = vadd.f32 %v1072, %v1166
          %1168 = vmatprep.mubr.f32.mxu0 0.0
          %1169 = vmatmul.mubr.f32.gmra.mrb[0].mxu0 %v487
          %v1170 = vpop.f32.mrb[0].mxu0
          %v1171 = vadd.f32 %v1068, %v1170
          %v1172 = vpop.f32.mrb[0].mxu0
          %v1173 = vadd.f32 %v1072, %v1172
          %1174 = vmatprep.mubr.f32.mxu0 0.0
          %1175 = vmatmul.mubr.f32.gmra.mrb[0].mxu0 %v488
          %v1176 = vpop.f32.mrb[0].mxu0
          %v1177 = vadd.f32 %v1068, %v1176
          %v1178 = vpop.f32.mrb[0].mxu0
          %v1179 = vadd.f32 %v1072, %v1178
          %1180 = vmatprep.mubr.f32.mxu0 0.0
          %1181 = vmatmul.mubr.f32.gmra.mrb[0].mxu0 %v489
          %v1182 = vpop.f32.mrb[0].mxu0
          %v1183 = vadd.f32 %v1068, %v1182
          %v1184 = vpop.f32.mrb[0].mxu0
          %v1185 = vadd.f32 %v1072, %v1184
          %1186 = vmatprep.mubr.f32.mxu0 0.0
          %1187 = vmatmul.mubr.f32.gmra.mrb[0].mxu0 %v490
          %v1188 = vpop.f32.mrb[0].mxu0
          %v1189 = vadd.f32 %v1068, %v1188
          %v1190 = vpop.f32.mrb[0].mxu0
          %v1191 = vadd.f32 %v1072, %v1190
          %1192 = vmatprep.mubr.f32.mxu0 0.0
          %1193 = vmatmul.mubr.f32.gmra.mrb[0].mxu0 %v491
          %v1194 = vpop.f32.mrb[0].mxu0
          %v1195 = vadd.f32 %v1068, %v1194
          %v1196 = vpop.f32.mrb[0].mxu0
          %v1197 = vadd.f32 %v1072, %v1196
          %1198 = vmatprep.mubr.f32.mxu0 0.0
          %1199 = vmatmul.mubr.f32.gmra.mrb[0].mxu0 %v492
          %v1200 = vpop.f32.mrb[0].mxu0
          %v1201 = vadd.f32 %v1068, %v1200
          %v1202 = vpop.f32.mrb[0].mxu0
          %v1203 = vadd.f32 %v1072, %v1202
          %1204 = vmatprep.mubr.f32.mxu0 0.0
          %1205 = vmatmul.mubr.f32.gmra.mrb[0].mxu0 %v493
          %v1206 = vpop.f32.mrb[0].mxu0
          %v1207 = vadd.f32 %v1068, %v1206
          %v1208 = vpop.f32.mrb[0].mxu0
          %v1209 = vadd.f32 %v1072, %v1208
          %1210 = vmatprep.mubr.f32.mxu0 0.0
          %1211 = vmatmul.mubr.f32.gmra.mrb[0].mxu0 %v494
          %v1212 = vpop.f32.mrb[0].mxu0
          %v1213 = vadd.f32 %v1068, %v1212
          %v1214 = vpop.f32.mrb[0].mxu0
          %v1215 = vadd.f32 %v1072, %v1214
          %1216 = vmatprep.mubr.f32.mxu0 0.0
          %1217 = vmatmul.mubr.f32.gmra.mrb[0].mxu0 %v495
          %v1218 = vpop.f32.mrb[0].mxu0
          %v1219 = vadd.f32 %v1068, %v1218
          %v1220 = vpop.f32.mrb[0].mxu0
          %v1221 = vadd.f32 %v1072, %v1220
          %1222 = vmatprep.mubr.f32.mxu0 0.0
          %1223 = vmatmul.mubr.f32.gmra.mrb[0].mxu0 %v496
          %v1224 = vpop.f32.mrb[0].mxu0
          %v1225 = vadd.f32 %v1068, %v1224
          %v1226 = vpop.f32.mrb[0].mxu0
          %v1227 = vadd.f32 %v1072, %v1226
          %1228 = vmatprep.mubr.f32.mxu0 0.0
          %1229 = vmatmul.mubr.f32.gmra.mrb[0].mxu0 %v497
          %v1230 = vpop.f32.mrb[0].mxu0
          %v1231 = vadd.f32 %v1068, %v1230
          %v1232 = vpop.f32.mrb[0].mxu0
          %v1233 = vadd.f32 %v1072, %v1232
          %1234 = vmatprep.mubr.f32.mxu0 0.0
          %1235 = vmatmul.mubr.f32.gmra.mrb[0].mxu0 %v498
          %v1236 = vpop.f32.mrb[0].mxu0
          %v1237 = vadd.f32 %v1068, %v1236
          %v1238 = vpop.f32.mrb[0].mxu0
          %v1239 = vadd.f32 %v1072, %v1238
          %1240 = vdwg.mxu0
          %1241 = vmatprep.subr.mxu0 0.0
          %1242 = vmatpush1.msra.mxu0 %v1017
          %1243 = vmatprep.subr.mxu0 0.0
          %1244 = vmatpush1.msra.mxu0 %v1020
          %1245 = vmatprep.subr.mxu0 0.0
          %1246 = vmatpush1.msra.mxu0 %v1023
          %1247 = vmatprep.subr.mxu0 0.0
          %1248 = vmatpush1.msra.mxu0 %v1026
          %1249 = vmatprep.subr.mxu0 0.0
          %1250 = vmatpush1.msra.mxu0 %v1029
          %1251 = vmatprep.subr.mxu0 0.0
          %1252 = vmatpush1.msra.mxu0 %v1032
          %1253 = vmatprep.subr.mxu0 0.0
          %1254 = vmatpush1.msra.mxu0 %v1035
          %1255 = vmatprep.subr.mxu0 0.0
          %1256 = vmatpush1.msra.mxu0 %v1038
          %1257 = vmatprep.subr.mxu0 0.0
          %1258 = vmatpush1.msra.mxu0 %v1041
          %1259 = vmatprep.subr.mxu0 0.0
          %1260 = vmatpush1.msra.mxu0 %v1044
          %1261 = vmatprep.subr.mxu0 0.0
          %1262 = vmatpush1.msra.mxu0 %v1047
          %1263 = vmatprep.subr.mxu0 0.0
          %1264 = vmatpush1.msra.mxu0 %v1050
          %1265 = vmatprep.subr.mxu0 0.0
          %1266 = vmatpush1.msra.mxu0 %v1053
          %1267 = vmatprep.subr.mxu0 0.0
          %1268 = vmatpush1.msra.mxu0 %v1056
          %1269 = vmatprep.subr.mxu0 0.0
          %1270 = vmatpush1.msra.mxu0 %v1059
          %1271 = vmatprep.subr.mxu0 0.0
          %1272 = vmatpush1.msra.mxu0 %v1062
          %1273 = vmatprep.subr.mxu0 0.0
          %1274 = vmatpush1.msra.mxu0 0.0
          %1275 = vmatprep.subr.mxu0 0.0
          %1276 = vmatpush1.msra.mxu0 0.0
          %1277 = vmatprep.subr.mxu0 0.0
          %1278 = vmatpush1.msra.mxu0 0.0
          %1279 = vmatprep.subr.mxu0 0.0
          %1280 = vmatpush1.msra.mxu0 0.0
          %1281 = vmatprep.subr.mxu0 0.0
          %1282 = vmatpush1.msra.mxu0 0.0
          %1283 = vmatprep.subr.mxu0 0.0
          %1284 = vmatpush1.msra.mxu0 0.0
          %1285 = vmatprep.subr.mxu0 0.0
          %1286 = vmatpush1.msra.mxu0 0.0
          %1287 = vmatprep.subr.mxu0 0.0
          %1288 = vmatpush1.msra.mxu0 0.0
          %1289 = vmatprep.subr.mxu0 0.0
          %1290 = vmatpush1.msra.mxu0 0.0
          %1291 = vmatprep.subr.mxu0 0.0
          %1292 = vmatpush1.msra.mxu0 0.0
          %1293 = vmatprep.subr.mxu0 0.0
          %1294 = vmatpush1.msra.mxu0 0.0
          %1295 = vmatprep.subr.mxu0 0.0
          %1296 = vmatpush1.msra.mxu0 0.0
          %1297 = vmatprep.subr.mxu0 0.0
          %1298 = vmatpush1.msra.mxu0 0.0
          %1299 = vmatprep.subr.mxu0 0.0
          %1300 = vmatpush1.msra.mxu0 0.0
          %1301 = vmatprep.subr.mxu0 0.0
          %1302 = vmatpush1.msra.mxu0 0.0
          %1303 = vmatprep.subr.mxu0 0.0
          %1304 = vmatpush1.msra.mxu0 0.0
          %1305 = vmatprep.mubr.f32.mxu0 0.0
          %1306 = vmatmul.mubr.f32.gmra.mrb[0].mxu0 %v483
          %v1307 = vpop.f32.mrb[0].mxu0
          %v1308 = vadd.f32 %v1076, %v1307
          %v1309 = vpop.f32.mrb[0].mxu0
          %1310 = vmatprep.mubr.f32.mxu0 0.0
          %1311 = vmatmul.mubr.f32.gmra.mrb[0].mxu0 %v484
          %v1312 = vpop.f32.mrb[0].mxu0
          %v1313 = vadd.f32 %v1076, %v1312
          %v1314 = vpop.f32.mrb[0].mxu0
          %1315 = vmatprep.mubr.f32.mxu0 0.0
          %1316 = vmatmul.mubr.f32.gmra.mrb[0].mxu0 %v485
          %v1317 = vpop.f32.mrb[0].mxu0
          %v1318 = vadd.f32 %v1076, %v1317
          %v1319 = vpop.f32.mrb[0].mxu0
          %1320 = vmatprep.mubr.f32.mxu0 0.0
          %1321 = vmatmul.mubr.f32.gmra.mrb[0].mxu0 %v486
          %v1322 = vpop.f32.mrb[0].mxu0
          %v1323 = vadd.f32 %v1076, %v1322
          %v1324 = vpop.f32.mrb[0].mxu0
          %1325 = vmatprep.mubr.f32.mxu0 0.0
          %1326 = vmatmul.mubr.f32.gmra.mrb[0].mxu0 %v487
          %v1327 = vpop.f32.mrb[0].mxu0
          %v1328 = vadd.f32 %v1076, %v1327
          %v1329 = vpop.f32.mrb[0].mxu0
          %1330 = vmatprep.mubr.f32.mxu0 0.0
          %1331 = vmatmul.mubr.f32.gmra.mrb[0].mxu0 %v488
          %v1332 = vpop.f32.mrb[0].mxu0
          %v1333 = vadd.f32 %v1076, %v1332
          %v1334 = vpop.f32.mrb[0].mxu0
          %1335 = vmatprep.mubr.f32.mxu0 0.0
          %1336 = vmatmul.mubr.f32.gmra.mrb[0].mxu0 %v489
          %v1337 = vpop.f32.mrb[0].mxu0
          %v1338 = vadd.f32 %v1076, %v1337
          %v1339 = vpop.f32.mrb[0].mxu0
          %1340 = vmatprep.mubr.f32.mxu0 0.0
          %1341 = vmatmul.mubr.f32.gmra.mrb[0].mxu0 %v490
          %v1342 = vpop.f32.mrb[0].mxu0
          %v1343 = vadd.f32 %v1076, %v1342
          %v1344 = vpop.f32.mrb[0].mxu0
          %1345 = vmatprep.mubr.f32.mxu0 0.0
          %1346 = vmatmul.mubr.f32.gmra.mrb[0].mxu0 %v491
          %v1347 = vpop.f32.mrb[0].mxu0
          %v1348 = vadd.f32 %v1076, %v1347
          %v1349 = vpop.f32.mrb[0].mxu0
          %1350 = vmatprep.mubr.f32.mxu0 0.0
          %1351 = vmatmul.mubr.f32.gmra.mrb[0].mxu0 %v492
          %v1352 = vpop.f32.mrb[0].mxu0
          %v1353 = vadd.f32 %v1076, %v1352
          %v1354 = vpop.f32.mrb[0].mxu0
          %1355 = vmatprep.mubr.f32.mxu0 0.0
          %1356 = vmatmul.mubr.f32.gmra.mrb[0].mxu0 %v493
          %v1357 = vpop.f32.mrb[0].mxu0
          %v1358 = vadd.f32 %v1076, %v1357
          %v1359 = vpop.f32.mrb[0].mxu0
          %1360 = vmatprep.mubr.f32.mxu0 0.0
          %1361 = vmatmul.mubr.f32.gmra.mrb[0].mxu0 %v494
          %v1362 = vpop.f32.mrb[0].mxu0
          %v1363 = vadd.f32 %v1076, %v1362
          %v1364 = vpop.f32.mrb[0].mxu0
          %1365 = vmatprep.mubr.f32.mxu0 0.0
          %1366 = vmatmul.mubr.f32.gmra.mrb[0].mxu0 %v495
          %v1367 = vpop.f32.mrb[0].mxu0
          %v1368 = vadd.f32 %v1076, %v1367
          %v1369 = vpop.f32.mrb[0].mxu0
          %1370 = vmatprep.mubr.f32.mxu0 0.0
          %1371 = vmatmul.mubr.f32.gmra.mrb[0].mxu0 %v496
          %v1372 = vpop.f32.mrb[0].mxu0
          %v1373 = vadd.f32 %v1076, %v1372
          %v1374 = vpop.f32.mrb[0].mxu0
          %1375 = vmatprep.mubr.f32.mxu0 0.0
          %1376 = vmatmul.mubr.f32.gmra.mrb[0].mxu0 %v497
          %v1377 = vpop.f32.mrb[0].mxu0
          %v1378 = vadd.f32 %v1076, %v1377
          %v1379 = vpop.f32.mrb[0].mxu0
          %1380 = vmatprep.mubr.f32.mxu0 0.0
          %1381 = vmatmul.mubr.f32.gmra.mrb[0].mxu0 %v498
          %v1382 = vpop.f32.mrb[0].mxu0
          %v1383 = vadd.f32 %v1076, %v1382
          %v1384 = vpop.f32.mrb[0].mxu0
          %1385 = vdwg.mxu0
          %v1386 = vadd.f32 %v776, %v1147
          %v1387 = vadd.f32 %v782, %v1153
          %v1388 = vadd.f32 %v788, %v1159
          %v1389 = vadd.f32 %v794, %v1165
          %v1390 = vadd.f32 %v800, %v1171
          %v1391 = vadd.f32 %v806, %v1177
          %v1392 = vadd.f32 %v812, %v1183
          %v1393 = vadd.f32 %v818, %v1189
          %v1394 = vadd.f32 %v824, %v1195
          %v1395 = vadd.f32 %v830, %v1201
          %v1396 = vadd.f32 %v836, %v1207
          %v1397 = vadd.f32 %v842, %v1213
          %v1398 = vadd.f32 %v848, %v1219
          %v1399 = vadd.f32 %v854, %v1225
          %v1400 = vadd.f32 %v860, %v1231
          %v1401 = vadd.f32 %v866, %v1237
          %v1402 = vxor.u32 %v1386, 2147483648
          %v1403 = vxor.u32 %v1387, 2147483648
          %v1404 = vxor.u32 %v1388, 2147483648
          %v1405 = vxor.u32 %v1389, 2147483648
          %v1406 = vxor.u32 %v1390, 2147483648
          %v1407 = vxor.u32 %v1391, 2147483648
          %v1408 = vxor.u32 %v1392, 2147483648
          %v1409 = vxor.u32 %v1393, 2147483648
          %v1410 = vxor.u32 %v1394, 2147483648
          %v1411 = vxor.u32 %v1395, 2147483648
          %v1412 = vxor.u32 %v1396, 2147483648
          %v1413 = vxor.u32 %v1397, 2147483648
          %v1414 = vxor.u32 %v1398, 2147483648
          %v1415 = vxor.u32 %v1399, 2147483648
          %v1416 = vxor.u32 %v1400, 2147483648
          %v1417 = vxor.u32 %v1401, 2147483648
          %v1418 = vmul.f32 %v1402, 1.442695
          %v1419 = vpow.pop %v1418
          %v1420 = vmul.f32 %v1403, 1.442695
          %v1421 = vpow.pop %v1420
          %v1422 = vmul.f32 %v1404, 1.442695
          %v1423 = vpow.pop %v1422
          %v1424 = vmul.f32 %v1405, 1.442695
          %v1425 = vpow.pop %v1424
          %v1426 = vmul.f32 %v1406, 1.442695
          %v1427 = vpow.pop %v1426
          %v1428 = vmul.f32 %v1407, 1.442695
          %v1429 = vpow.pop %v1428
          %v1430 = vmul.f32 %v1408, 1.442695
          %v1431 = vpow.pop %v1430
          %v1432 = vmul.f32 %v1409, 1.442695
          %v1433 = vpow.pop %v1432
          %v1434 = vmul.f32 %v1410, 1.442695
          %v1435 = vpow.pop %v1434
          %v1436 = vmul.f32 %v1411, 1.442695
          %v1437 = vpow.pop %v1436
          %v1438 = vmul.f32 %v1412, 1.442695
          %v1439 = vpow.pop %v1438
          %v1440 = vmul.f32 %v1413, 1.442695
          %v1441 = vpow.pop %v1440
          %v1442 = vmul.f32 %v1414, 1.442695
          %v1443 = vpow.pop %v1442
          %v1444 = vmul.f32 %v1415, 1.442695
          %v1445 = vpow.pop %v1444
          %v1446 = vmul.f32 %v1416, 1.442695
          %v1447 = vpow.pop %v1446
          %v1448 = vmul.f32 %v1417, 1.442695
          %v1449 = vpow.pop %v1448
          %v1450 = vadd.f32 %v1419, 1.0
          %v1451 = vadd.f32 %v1421, 1.0
          %v1452 = vadd.f32 %v1423, 1.0
          %v1453 = vadd.f32 %v1425, 1.0
          %v1454 = vadd.f32 %v1427, 1.0
          %v1455 = vadd.f32 %v1429, 1.0
          %v1456 = vadd.f32 %v1431, 1.0
          %v1457 = vadd.f32 %v1433, 1.0
          %v1458 = vadd.f32 %v1435, 1.0
          %v1459 = vadd.f32 %v1437, 1.0
          %v1460 = vadd.f32 %v1439, 1.0
          %v1461 = vadd.f32 %v1441, 1.0
          %v1462 = vadd.f32 %v1443, 1.0
          %v1463 = vadd.f32 %v1445, 1.0
          %v1464 = vadd.f32 %v1447, 1.0
          %v1465 = vadd.f32 %v1449, 1.0
          %v1466 = vrcp.pop %v1450
          %v1467 = vmul.f32 1.0, %v1466
          %v1468 = vrcp.pop %v1451
          %v1469 = vmul.f32 1.0, %v1468
          %v1470 = vrcp.pop %v1452
          %v1471 = vmul.f32 1.0, %v1470
          %v1472 = vrcp.pop %v1453
          %v1473 = vmul.f32 1.0, %v1472
          %v1474 = vrcp.pop %v1454
          %v1475 = vmul.f32 1.0, %v1474
          %v1476 = vrcp.pop %v1455
          %v1477 = vmul.f32 1.0, %v1476
          %v1478 = vrcp.pop %v1456
          %v1479 = vmul.f32 1.0, %v1478
          %v1480 = vrcp.pop %v1457
          %v1481 = vmul.f32 1.0, %v1480
          %v1482 = vrcp.pop %v1458
          %v1483 = vmul.f32 1.0, %v1482
          %v1484 = vrcp.pop %v1459
          %v1485 = vmul.f32 1.0, %v1484
          %v1486 = vrcp.pop %v1460
          %v1487 = vmul.f32 1.0, %v1486
          %v1488 = vrcp.pop %v1461
          %v1489 = vmul.f32 1.0, %v1488
          %v1490 = vrcp.pop %v1462
          %v1491 = vmul.f32 1.0, %v1490
          %v1492 = vrcp.pop %v1463
          %v1493 = vmul.f32 1.0, %v1492
          %v1494 = vrcp.pop %v1464
          %v1495 = vmul.f32 1.0, %v1494
          %v1496 = vrcp.pop %v1465
          %v1497 = vmul.f32 1.0, %v1496
          %v1498 = vadd.f32 %v778, %v1149
          %v1499 = vadd.f32 %v784, %v1155
          %v1500 = vadd.f32 %v790, %v1161
          %v1501 = vadd.f32 %v796, %v1167
          %v1502 = vadd.f32 %v802, %v1173
          %v1503 = vadd.f32 %v808, %v1179
          %v1504 = vadd.f32 %v814, %v1185
          %v1505 = vadd.f32 %v820, %v1191
          %v1506 = vadd.f32 %v826, %v1197
          %v1507 = vadd.f32 %v832, %v1203
          %v1508 = vadd.f32 %v838, %v1209
          %v1509 = vadd.f32 %v844, %v1215
          %v1510 = vadd.f32 %v850, %v1221
          %v1511 = vadd.f32 %v856, %v1227
          %v1512 = vadd.f32 %v862, %v1233
          %v1513 = vadd.f32 %v868, %v1239
          %v1514 = vxor.u32 %v1498, 2147483648
          %v1515 = vxor.u32 %v1499, 2147483648
          %v1516 = vxor.u32 %v1500, 2147483648
          %v1517 = vxor.u32 %v1501, 2147483648
          %v1518 = vxor.u32 %v1502, 2147483648
          %v1519 = vxor.u32 %v1503, 2147483648
          %v1520 = vxor.u32 %v1504, 2147483648
          %v1521 = vxor.u32 %v1505, 2147483648
          %v1522 = vxor.u32 %v1506, 2147483648
          %v1523 = vxor.u32 %v1507, 2147483648
          %v1524 = vxor.u32 %v1508, 2147483648
          %v1525 = vxor.u32 %v1509, 2147483648
          %v1526 = vxor.u32 %v1510, 2147483648
          %v1527 = vxor.u32 %v1511, 2147483648
          %v1528 = vxor.u32 %v1512, 2147483648
          %v1529 = vxor.u32 %v1513, 2147483648
          %v1530 = vmul.f32 %v1514, 1.442695
          %v1531 = vpow.pop %v1530
          %v1532 = vmul.f32 %v1515, 1.442695
          %v1533 = vpow.pop %v1532
          %v1534 = vmul.f32 %v1516, 1.442695
          %v1535 = vpow.pop %v1534
          %v1536 = vmul.f32 %v1517, 1.442695
          %v1537 = vpow.pop %v1536
          %v1538 = vmul.f32 %v1518, 1.442695
          %v1539 = vpow.pop %v1538
          %v1540 = vmul.f32 %v1519, 1.442695
          %v1541 = vpow.pop %v1540
          %v1542 = vmul.f32 %v1520, 1.442695
          %v1543 = vpow.pop %v1542
          %v1544 = vmul.f32 %v1521, 1.442695
          %v1545 = vpow.pop %v1544
          %v1546 = vmul.f32 %v1522, 1.442695
          %v1547 = vpow.pop %v1546
          %v1548 = vmul.f32 %v1523, 1.442695
          %v1549 = vpow.pop %v1548
          %v1550 = vmul.f32 %v1524, 1.442695
          %v1551 = vpow.pop %v1550
          %v1552 = vmul.f32 %v1525, 1.442695
          %v1553 = vpow.pop %v1552
          %v1554 = vmul.f32 %v1526, 1.442695
          %v1555 = vpow.pop %v1554
          %v1556 = vmul.f32 %v1527, 1.442695
          %v1557 = vpow.pop %v1556
          %v1558 = vmul.f32 %v1528, 1.442695
          %v1559 = vpow.pop %v1558
          %v1560 = vmul.f32 %v1529, 1.442695
          %v1561 = vpow.pop %v1560
          %v1562 = vadd.f32 %v1531, 1.0
          %v1563 = vadd.f32 %v1533, 1.0
          %v1564 = vadd.f32 %v1535, 1.0
          %v1565 = vadd.f32 %v1537, 1.0
          %v1566 = vadd.f32 %v1539, 1.0
          %v1567 = vadd.f32 %v1541, 1.0
          %v1568 = vadd.f32 %v1543, 1.0
          %v1569 = vadd.f32 %v1545, 1.0
          %v1570 = vadd.f32 %v1547, 1.0
          %v1571 = vadd.f32 %v1549, 1.0
          %v1572 = vadd.f32 %v1551, 1.0
          %v1573 = vadd.f32 %v1553, 1.0
          %v1574 = vadd.f32 %v1555, 1.0
          %v1575 = vadd.f32 %v1557, 1.0
          %v1576 = vadd.f32 %v1559, 1.0
          %v1577 = vadd.f32 %v1561, 1.0
          %v1578 = vrcp.pop %v1562
          %v1579 = vmul.f32 1.0, %v1578
          %v1580 = vrcp.pop %v1563
          %v1581 = vmul.f32 1.0, %v1580
          %v1582 = vrcp.pop %v1564
          %v1583 = vmul.f32 1.0, %v1582
          %v1584 = vrcp.pop %v1565
          %v1585 = vmul.f32 1.0, %v1584
          %v1586 = vrcp.pop %v1566
          %v1587 = vmul.f32 1.0, %v1586
          %v1588 = vrcp.pop %v1567
          %v1589 = vmul.f32 1.0, %v1588
          %v1590 = vrcp.pop %v1568
          %v1591 = vmul.f32 1.0, %v1590
          %v1592 = vrcp.pop %v1569
          %v1593 = vmul.f32 1.0, %v1592
          %v1594 = vrcp.pop %v1570
          %v1595 = vmul.f32 1.0, %v1594
          %v1596 = vrcp.pop %v1571
          %v1597 = vmul.f32 1.0, %v1596
          %v1598 = vrcp.pop %v1572
          %v1599 = vmul.f32 1.0, %v1598
          %v1600 = vrcp.pop %v1573
          %v1601 = vmul.f32 1.0, %v1600
          %v1602 = vrcp.pop %v1574
          %v1603 = vmul.f32 1.0, %v1602
          %v1604 = vrcp.pop %v1575
          %v1605 = vmul.f32 1.0, %v1604
          %v1606 = vrcp.pop %v1576
          %v1607 = vmul.f32 1.0, %v1606
          %v1608 = vrcp.pop %v1577
          %v1609 = vmul.f32 1.0, %v1608
          %v1610 = vmul.f32 %v1467, %v1308
          %v1611 = vmul.f32 %v1469, %v1313
          %v1612 = vmul.f32 %v1471, %v1318
          %v1613 = vmul.f32 %v1473, %v1323
          %v1614 = vmul.f32 %v1475, %v1328
          %v1615 = vmul.f32 %v1477, %v1333
          %v1616 = vmul.f32 %v1479, %v1338
          %v1617 = vmul.f32 %v1481, %v1343
          %v1618 = vmul.f32 %v1483, %v1348
          %v1619 = vmul.f32 %v1485, %v1353
          %v1620 = vmul.f32 %v1487, %v1358
          %v1621 = vmul.f32 %v1489, %v1363
          %v1622 = vmul.f32 %v1491, %v1368
          %v1623 = vmul.f32 %v1493, %v1373
          %v1624 = vmul.f32 %v1495, %v1378
          %v1625 = vmul.f32 %v1497, %v1383
          %v1626 = vadd.f32 %v937, %v1610
          %v1627 = vadd.f32 %v942, %v1611
          %v1628 = vadd.f32 %v947, %v1612
          %v1629 = vadd.f32 %v952, %v1613
          %v1630 = vadd.f32 %v957, %v1614
          %v1631 = vadd.f32 %v962, %v1615
          %v1632 = vadd.f32 %v967, %v1616
          %v1633 = vadd.f32 %v972, %v1617
          %v1634 = vadd.f32 %v977, %v1618
          %v1635 = vadd.f32 %v982, %v1619
          %v1636 = vadd.f32 %v987, %v1620
          %v1637 = vadd.f32 %v992, %v1621
          %v1638 = vadd.f32 %v997, %v1622
          %v1639 = vadd.f32 %v1002, %v1623
          %v1640 = vadd.f32 %v1007, %v1624
          %v1641 = vadd.f32 %v1012, %v1625
          %v1642 = vtanh.pop %v1626
          %v1643 = vtanh.pop %v1627
          %v1644 = vtanh.pop %v1628
          %v1645 = vtanh.pop %v1629
          %v1646 = vtanh.pop %v1630
          %v1647 = vtanh.pop %v1631
          %v1648 = vtanh.pop %v1632
          %v1649 = vtanh.pop %v1633
          %v1650 = vtanh.pop %v1634
          %v1651 = vtanh.pop %v1635
          %v1652 = vtanh.pop %v1636
          %v1653 = vtanh.pop %v1637
          %v1654 = vtanh.pop %v1638
          %v1655 = vtanh.pop %v1639
          %v1656 = vtanh.pop %v1640
          %v1657 = vtanh.pop %v1641
          %v1658 = vsub.f32 1.0, %v1579
          %v1659 = vsub.f32 1.0, %v1581
          %v1660 = vsub.f32 1.0, %v1583
          %v1661 = vsub.f32 1.0, %v1585
          %v1662 = vsub.f32 1.0, %v1587
          %v1663 = vsub.f32 1.0, %v1589
          %v1664 = vsub.f32 1.0, %v1591
          %v1665 = vsub.f32 1.0, %v1593
          %v1666 = vsub.f32 1.0, %v1595
          %v1667 = vsub.f32 1.0, %v1597
          %v1668 = vsub.f32 1.0, %v1599
          %v1669 = vsub.f32 1.0, %v1601
          %v1670 = vsub.f32 1.0, %v1603
          %v1671 = vsub.f32 1.0, %v1605
          %v1672 = vsub.f32 1.0, %v1607
          %v1673 = vsub.f32 1.0, %v1609
          %v1674 = vmul.f32 %v1658, %v1642
          %v1675 = vmul.f32 %v1659, %v1643
          %v1676 = vmul.f32 %v1660, %v1644
          %v1677 = vmul.f32 %v1661, %v1645
          %v1678 = vmul.f32 %v1662, %v1646
          %v1679 = vmul.f32 %v1663, %v1647
          %v1680 = vmul.f32 %v1664, %v1648
          %v1681 = vmul.f32 %v1665, %v1649
          %v1682 = vmul.f32 %v1666, %v1650
          %v1683 = vmul.f32 %v1667, %v1651
          %v1684 = vmul.f32 %v1668, %v1652
          %v1685 = vmul.f32 %v1669, %v1653
          %v1686 = vmul.f32 %v1670, %v1654
          %v1687 = vmul.f32 %v1671, %v1655
          %v1688 = vmul.f32 %v1672, %v1656
          %v1689 = vmul.f32 %v1673, %v1657
          %v1690 = vmul.f32 %v1579, %v483
          %v1691 = vmul.f32 %v1581, %v484
          %v1692 = vmul.f32 %v1583, %v485
          %v1693 = vmul.f32 %v1585, %v486
          %v1694 = vmul.f32 %v1587, %v487
          %v1695 = vmul.f32 %v1589, %v488
          %v1696 = vmul.f32 %v1591, %v489
          %v1697 = vmul.f32 %v1593, %v490
          %v1698 = vmul.f32 %v1595, %v491
          %v1699 = vmul.f32 %v1597, %v492
          %v1700 = vmul.f32 %v1599, %v493
          %v1701 = vmul.f32 %v1601, %v494
          %v1702 = vmul.f32 %v1603, %v495
          %v1703 = vmul.f32 %v1605, %v496
          %v1704 = vmul.f32 %v1607, %v497
          %v1705 = vmul.f32 %v1609, %v498
          %v1706 = vadd.f32 %v1674, %v1690
          %v1707 = vadd.f32 %v1675, %v1691
          %v1708 = vadd.f32 %v1676, %v1692
          %v1709 = vadd.f32 %v1677, %v1693
          %v1710 = vadd.f32 %v1678, %v1694
          %v1711 = vadd.f32 %v1679, %v1695
          %v1712 = vadd.f32 %v1680, %v1696
          %v1713 = vadd.f32 %v1681, %v1697
          %v1714 = vadd.f32 %v1682, %v1698
          %v1715 = vadd.f32 %v1683, %v1699
          %v1716 = vadd.f32 %v1684, %v1700
          %v1717 = vadd.f32 %v1685, %v1701
          %v1718 = vadd.f32 %v1686, %v1702
          %v1719 = vadd.f32 %v1687, %v1703
          %v1720 = vadd.f32 %v1688, %v1704
          %v1721 = vadd.f32 %v1689, %v1705
          %s1722 = sadd.s32 %s356, 256
          %s1723 = scalar_lea.vmem [#allocation2], %s1722
          %1724 = vst [vmem:[%s1723] sm:$0xff] %v1706
          %1725 = vst [vmem:[%s1723 + $0x8] sm:$0xff] %v1707
          %1726 = vst [vmem:[%s1723 + $0x10] sm:$0xff] %v1708
          %1727 = vst [vmem:[%s1723 + $0x18] sm:$0xff] %v1709
          %1728 = vst [vmem:[%s1723 + $0x20] sm:$0xff] %v1710
          %1729 = vst [vmem:[%s1723 + $0x28] sm:$0xff] %v1711
          %1730 = vst [vmem:[%s1723 + $0x30] sm:$0xff] %v1712
          %1731 = vst [vmem:[%s1723 + $0x38] sm:$0xff] %v1713
          %1732 = vst [vmem:[%s1723 + $0x40] sm:$0xff] %v1714
          %1733 = vst [vmem:[%s1723 + $0x48] sm:$0xff] %v1715
          %1734 = vst [vmem:[%s1723 + $0x50] sm:$0xff] %v1716
          %1735 = vst [vmem:[%s1723 + $0x58] sm:$0xff] %v1717
          %1736 = vst [vmem:[%s1723 + $0x60] sm:$0xff] %v1718
          %1737 = vst [vmem:[%s1723 + $0x68] sm:$0xff] %v1719
          %1738 = vst [vmem:[%s1723 + $0x70] sm:$0xff] %v1720
          %1739 = vst [vmem:[%s1723 + $0x78] sm:$0xff] %v1721
          %p1740 = scmp.eq.s32.totalorder %s30, 2
          // Predicated region
          $region73: #{tpu_custom_call.1} parent=71 // pred_check
            %p1741 = pneg %p1740
          $region74: #{tpu_custom_call.1} parent=71 // pred_check_branch
            %1743 = sbr.rel (%p1741) target = $region76
          $region75: #{tpu_custom_call.1} parent=71 // pred_region
            %v1744 = vld [vmem:[#allocation10] sm:$0xff]
            %v1745 = vld [vmem:[#allocation10 + $0x8] sm:$0xff]
            %v1746 = vld [vmem:[#allocation10 + $0x10] sm:$0xff]
            %v1747 = vld [vmem:[#allocation10 + $0x18] sm:$0xff]
            %v1748 = vld [vmem:[#allocation10 + $0x20] sm:$0xff]
            %v1749 = vld [vmem:[#allocation10 + $0x28] sm:$0xff]
            %v1750 = vld [vmem:[#allocation10 + $0x30] sm:$0xff]
            %v1751 = vld [vmem:[#allocation10 + $0x38] sm:$0xff]
            %v1752 = vld [vmem:[#allocation10 + $0x40] sm:$0xff]
            %v1753 = vld [vmem:[#allocation10 + $0x48] sm:$0xff]
            %v1754 = vld [vmem:[#allocation10 + $0x50] sm:$0xff]
            %v1755 = vld [vmem:[#allocation10 + $0x58] sm:$0xff]
            %v1756 = vld [vmem:[#allocation10 + $0x60] sm:$0xff]
            %v1757 = vld [vmem:[#allocation10 + $0x68] sm:$0xff]
            %v1758 = vld [vmem:[#allocation10 + $0x70] sm:$0xff]
            %v1759 = vld [vmem:[#allocation10 + $0x78] sm:$0xff]
            %v1760 = vld [vmem:[%s7] sm:$0x1]
            %v1762 = vlaneseq
            %v1763 = vshrl.u32 %v1762, 7
            %v1764 = vsub.s32 0, %v1763
            %v1765 = vrot.slane %v1760, %v1764
            %1767 = vmatprep.subr.mxu0 0.0
            %1768 = vmatpush1.msra.mxu0 %v1744
            %1769 = vmatprep.subr.mxu0 0.0
            %1770 = vmatpush1.msra.mxu0 %v1745
            %1771 = vmatprep.subr.mxu0 0.0
            %1772 = vmatpush1.msra.mxu0 %v1746
            %1773 = vmatprep.subr.mxu0 0.0
            %1774 = vmatpush1.msra.mxu0 %v1747
            %1775 = vmatprep.subr.mxu0 0.0
            %1776 = vmatpush1.msra.mxu0 %v1748
            %1777 = vmatprep.subr.mxu0 0.0
            %1778 = vmatpush1.msra.mxu0 %v1749
            %1779 = vmatprep.subr.mxu0 0.0
            %1780 = vmatpush1.msra.mxu0 %v1750
            %1781 = vmatprep.subr.mxu0 0.0
            %1782 = vmatpush1.msra.mxu0 %v1751
            %1783 = vmatprep.subr.mxu0 0.0
            %1784 = vmatpush1.msra.mxu0 %v1752
            %1785 = vmatprep.subr.mxu0 0.0
            %1786 = vmatpush1.msra.mxu0 %v1753
            %1787 = vmatprep.subr.mxu0 0.0
            %1788 = vmatpush1.msra.mxu0 %v1754
            %1789 = vmatprep.subr.mxu0 0.0
            %1790 = vmatpush1.msra.mxu0 %v1755
            %1791 = vmatprep.subr.mxu0 0.0
            %1792 = vmatpush1.msra.mxu0 %v1756
            %1793 = vmatprep.subr.mxu0 0.0
            %1794 = vmatpush1.msra.mxu0 %v1757
            %1795 = vmatprep.subr.mxu0 0.0
            %1796 = vmatpush1.msra.mxu0 %v1758
            %1797 = vmatprep.subr.mxu0 0.0
            %1798 = vmatpush1.msra.mxu0 %v1759
            %1799 = vmatprep.subr.mxu0 0.0
            %1800 = vmatpush1.msra.mxu0 0.0
            %1801 = vmatprep.subr.mxu0 0.0
            %1802 = vmatpush1.msra.mxu0 0.0
            %1803 = vmatprep.subr.mxu0 0.0
            %1804 = vmatpush1.msra.mxu0 0.0
            %1805 = vmatprep.subr.mxu0 0.0
            %1806 = vmatpush1.msra.mxu0 0.0
            %1807 = vmatprep.subr.mxu0 0.0
            %1808 = vmatpush1.msra.mxu0 0.0
            %1809 = vmatprep.subr.mxu0 0.0
            %1810 = vmatpush1.msra.mxu0 0.0
            %1811 = vmatprep.subr.mxu0 0.0
            %1812 = vmatpush1.msra.mxu0 0.0
            %1813 = vmatprep.subr.mxu0 0.0
            %1814 = vmatpush1.msra.mxu0 0.0
            %1815 = vmatprep.subr.mxu0 0.0
            %1816 = vmatpush1.msra.mxu0 0.0
            %1817 = vmatprep.subr.mxu0 0.0
            %1818 = vmatpush1.msra.mxu0 0.0
            %1819 = vmatprep.subr.mxu0 0.0
            %1820 = vmatpush1.msra.mxu0 0.0
            %1821 = vmatprep.subr.mxu0 0.0
            %1822 = vmatpush1.msra.mxu0 0.0
            %1823 = vmatprep.subr.mxu0 0.0
            %1824 = vmatpush1.msra.mxu0 0.0
            %1825 = vmatprep.subr.mxu0 0.0
            %1826 = vmatpush1.msra.mxu0 0.0
            %1827 = vmatprep.subr.mxu0 0.0
            %1828 = vmatpush1.msra.mxu0 0.0
            %1829 = vmatprep.subr.mxu0 0.0
            %1830 = vmatpush1.msra.mxu0 0.0
            %1831 = vmatprep.mubr.f32.mxu0 0.0
            %1832 = vmatmul.mubr.f32.gmra.mrb[0].mxu0 %v1706
            %v1833 = vpop.f32.mrb[0].mxu0
            %v1834 = vadd.f32 %v1765, %v1833
            %v1835 = vpop.f32.mrb[0].mxu0
            %1836 = vmatprep.mubr.f32.mxu0 0.0
            %1837 = vmatmul.mubr.f32.gmra.mrb[0].mxu0 %v1707
            %v1838 = vpop.f32.mrb[0].mxu0
            %v1839 = vadd.f32 %v1765, %v1838
            %v1840 = vpop.f32.mrb[0].mxu0
            %1841 = vmatprep.mubr.f32.mxu0 0.0
            %1842 = vmatmul.mubr.f32.gmra.mrb[0].mxu0 %v1708
            %v1843 = vpop.f32.mrb[0].mxu0
            %v1844 = vadd.f32 %v1765, %v1843
            %v1845 = vpop.f32.mrb[0].mxu0
            %1846 = vmatprep.mubr.f32.mxu0 0.0
            %1847 = vmatmul.mubr.f32.gmra.mrb[0].mxu0 %v1709
            %v1848 = vpop.f32.mrb[0].mxu0
            %v1849 = vadd.f32 %v1765, %v1848
            %v1850 = vpop.f32.mrb[0].mxu0
            %1851 = vmatprep.mubr.f32.mxu0 0.0
            %1852 = vmatmul.mubr.f32.gmra.mrb[0].mxu0 %v1710
            %v1853 = vpop.f32.mrb[0].mxu0
            %v1854 = vadd.f32 %v1765, %v1853
            %v1855 = vpop.f32.mrb[0].mxu0
            %1856 = vmatprep.mubr.f32.mxu0 0.0
            %1857 = vmatmul.mubr.f32.gmra.mrb[0].mxu0 %v1711
            %v1858 = vpop.f32.mrb[0].mxu0
            %v1859 = vadd.f32 %v1765, %v1858
            %v1860 = vpop.f32.mrb[0].mxu0
            %1861 = vmatprep.mubr.f32.mxu0 0.0
            %1862 = vmatmul.mubr.f32.gmra.mrb[0].mxu0 %v1712
            %v1863 = vpop.f32.mrb[0].mxu0
            %v1864 = vadd.f32 %v1765, %v1863
            %v1865 = vpop.f32.mrb[0].mxu0
            %1866 = vmatprep.mubr.f32.mxu0 0.0
            %1867 = vmatmul.mubr.f32.gmra.mrb[0].mxu0 %v1713
            %v1868 = vpop.f32.mrb[0].mxu0
            %v1869 = vadd.f32 %v1765, %v1868
            %v1870 = vpop.f32.mrb[0].mxu0
            %1871 = vmatprep.mubr.f32.mxu0 0.0
            %1872 = vmatmul.mubr.f32.gmra.mrb[0].mxu0 %v1714
            %v1873 = vpop.f32.mrb[0].mxu0
            %v1874 = vadd.f32 %v1765, %v1873
            %v1875 = vpop.f32.mrb[0].mxu0
            %1876 = vmatprep.mubr.f32.mxu0 0.0
            %1877 = vmatmul.mubr.f32.gmra.mrb[0].mxu0 %v1715
            %v1878 = vpop.f32.mrb[0].mxu0
            %v1879 = vadd.f32 %v1765, %v1878
            %v1880 = vpop.f32.mrb[0].mxu0
            %1881 = vmatprep.mubr.f32.mxu0 0.0
            %1882 = vmatmul.mubr.f32.gmra.mrb[0].mxu0 %v1716
            %v1883 = vpop.f32.mrb[0].mxu0
            %v1884 = vadd.f32 %v1765, %v1883
            %v1885 = vpop.f32.mrb[0].mxu0
            %1886 = vmatprep.mubr.f32.mxu0 0.0
            %1887 = vmatmul.mubr.f32.gmra.mrb[0].mxu0 %v1717
            %v1888 = vpop.f32.mrb[0].mxu0
            %v1889 = vadd.f32 %v1765, %v1888
            %v1890 = vpop.f32.mrb[0].mxu0
            %1891 = vmatprep.mubr.f32.mxu0 0.0
            %1892 = vmatmul.mubr.f32.gmra.mrb[0].mxu0 %v1718
            %v1893 = vpop.f32.mrb[0].mxu0
            %v1894 = vadd.f32 %v1765, %v1893
            %v1895 = vpop.f32.mrb[0].mxu0
            %1896 = vmatprep.mubr.f32.mxu0 0.0
            %1897 = vmatmul.mubr.f32.gmra.mrb[0].mxu0 %v1719
            %v1898 = vpop.f32.mrb[0].mxu0
            %v1899 = vadd.f32 %v1765, %v1898
            %v1900 = vpop.f32.mrb[0].mxu0
            %1901 = vmatprep.mubr.f32.mxu0 0.0
            %1902 = vmatmul.mubr.f32.gmra.mrb[0].mxu0 %v1720
            %v1903 = vpop.f32.mrb[0].mxu0
            %v1904 = vadd.f32 %v1765, %v1903
            %v1905 = vpop.f32.mrb[0].mxu0
            %1906 = vmatprep.mubr.f32.mxu0 0.0
            %1907 = vmatmul.mubr.f32.gmra.mrb[0].mxu0 %v1721
            %v1908 = vpop.f32.mrb[0].mxu0
            %v1909 = vadd.f32 %v1765, %v1908
            %v1910 = vpop.f32.mrb[0].mxu0
            %1911 = vdwg.mxu0
            %v1912 = vmax.f32 %v1834, 0.01
            %v1913 = vmax.f32 %v1839, 0.01
            %v1914 = vmax.f32 %v1844, 0.01
            %v1915 = vmax.f32 %v1849, 0.01
            %v1916 = vmax.f32 %v1854, 0.01
            %v1917 = vmax.f32 %v1859, 0.01
            %v1918 = vmax.f32 %v1864, 0.01
            %v1919 = vmax.f32 %v1869, 0.01
            %v1920 = vmax.f32 %v1874, 0.01
            %v1921 = vmax.f32 %v1879, 0.01
            %v1922 = vmax.f32 %v1884, 0.01
            %v1923 = vmax.f32 %v1889, 0.01
            %v1924 = vmax.f32 %v1894, 0.01
            %v1925 = vmax.f32 %v1899, 0.01
            %v1926 = vmax.f32 %v1904, 0.01
            %v1927 = vmax.f32 %v1909, 0.01
            %v1928 = vmin.f32 %v1912, 1.0
            %v1929 = vmin.f32 %v1913, 1.0
            %v1930 = vmin.f32 %v1914, 1.0
            %v1931 = vmin.f32 %v1915, 1.0
            %v1932 = vmin.f32 %v1916, 1.0
            %v1933 = vmin.f32 %v1917, 1.0
            %v1934 = vmin.f32 %v1918, 1.0
            %v1935 = vmin.f32 %v1919, 1.0
            %v1936 = vmin.f32 %v1920, 1.0
            %v1937 = vmin.f32 %v1921, 1.0
            %v1938 = vmin.f32 %v1922, 1.0
            %v1939 = vmin.f32 %v1923, 1.0
            %v1940 = vmin.f32 %v1924, 1.0
            %v1941 = vmin.f32 %v1925, 1.0
            %v1942 = vmin.f32 %v1926, 1.0
            %v1943 = vmin.f32 %v1927, 1.0
            %1944 = vst [vmem:[%s316] sm:$0xff] %v1928
            %1945 = vst [vmem:[%s316 + $0x8] sm:$0xff] %v1929
            %1946 = vst [vmem:[%s316 + $0x10] sm:$0xff] %v1930
            %1947 = vst [vmem:[%s316 + $0x18] sm:$0xff] %v1931
            %1948 = vst [vmem:[%s316 + $0x20] sm:$0xff] %v1932
            %1949 = vst [vmem:[%s316 + $0x28] sm:$0xff] %v1933
            %1950 = vst [vmem:[%s316 + $0x30] sm:$0xff] %v1934
            %1951 = vst [vmem:[%s316 + $0x38] sm:$0xff] %v1935
            %1952 = vst [vmem:[%s316 + $0x40] sm:$0xff] %v1936
            %1953 = vst [vmem:[%s316 + $0x48] sm:$0xff] %v1937
            %1954 = vst [vmem:[%s316 + $0x50] sm:$0xff] %v1938
            %1955 = vst [vmem:[%s316 + $0x58] sm:$0xff] %v1939
            %1956 = vst [vmem:[%s316 + $0x60] sm:$0xff] %v1940
            %1957 = vst [vmem:[%s316 + $0x68] sm:$0xff] %v1941
            %1958 = vst [vmem:[%s316 + $0x70] sm:$0xff] %v1942
            %1959 = vst [vmem:[%s316 + $0x78] sm:$0xff] %v1943
          $region76: #{tpu_custom_call.1} parent=71 // pred_fallthru
            _
        $region72: #{tpu_custom_call.1} parent=43 // pred_fallthru
          _
        %p1960 = scmp.ne.s32.totalorder %s368, 0
        // Predicated region
        $region77: #{tpu_custom_call.1} parent=43 // pred_check
          %p1961 = pneg %p1960
        $region78: #{tpu_custom_call.1} parent=43 // pred_check_branch
          %1963 = sbr.rel (%p1961) target = $region80
        $region79: #{tpu_custom_call.1} parent=43 // pred_region
          %s1964 = sshra.s32 %s356, 5
          %s1965 = sand.u32 %s356, 31
          %s1966 = smul.u32 %s1964, 2
          %s1967 = smul.addr %s1966, 8
          %s1968 = scalar_lea.vmem [#allocation4], %s1967
          %v1969 = vld [vmem:[%s1968] sm:$0xff]
          %v1970 = vld [vmem:[%s1968 + $0x8] sm:$0xff]
          %v1971 = vld [vmem:[%s1968 + $0x10] sm:$0xff]
          %v1972 = vld [vmem:[%s1968 + $0x18] sm:$0xff]
          %v1973 = vld [vmem:[%s1968 + $0x20] sm:$0xff]
          %v1974 = vld [vmem:[%s1968 + $0x28] sm:$0xff]
          %v1975 = vld [vmem:[%s1968 + $0x30] sm:$0xff]
          %v1976 = vld [vmem:[%s1968 + $0x38] sm:$0xff]
          %v1977 = vunpack.c.0.s8 %v1969
          %v1978 = vunpack.c.0.s8 %v1970
          %v1979 = vunpack.c.1.s8 %v1969
          %v1980 = vunpack.c.1.s8 %v1970
          %v1981 = vunpack.c.2.s8 %v1969
          %v1982 = vunpack.c.2.s8 %v1970
          %v1983 = vunpack.c.3.s8 %v1969
          %v1984 = vunpack.c.3.s8 %v1970
          %v1985 = vunpack.c.0.s8 %v1971
          %v1986 = vunpack.c.0.s8 %v1972
          %v1987 = vunpack.c.1.s8 %v1971
          %v1988 = vunpack.c.1.s8 %v1972
          %v1989 = vunpack.c.2.s8 %v1971
          %v1990 = vunpack.c.2.s8 %v1972
          %v1991 = vunpack.c.3.s8 %v1971
          %v1992 = vunpack.c.3.s8 %v1972
          %v1993 = vunpack.c.0.s8 %v1973
          %v1994 = vunpack.c.0.s8 %v1974
          %v1995 = vunpack.c.1.s8 %v1973
          %v1996 = vunpack.c.1.s8 %v1974
          %v1997 = vunpack.c.2.s8 %v1973
          %v1998 = vunpack.c.2.s8 %v1974
          %v1999 = vunpack.c.3.s8 %v1973
          %v2000 = vunpack.c.3.s8 %v1974
          %v2001 = vunpack.c.0.s8 %v1975
          %v2002 = vunpack.c.0.s8 %v1976
          %v2003 = vunpack.c.1.s8 %v1975
          %v2004 = vunpack.c.1.s8 %v1976
          %v2005 = vunpack.c.2.s8 %v1975
          %v2006 = vunpack.c.2.s8 %v1976
          %v2007 = vunpack.c.3.s8 %v1975
          %v2008 = vunpack.c.3.s8 %v1976
          %v2009 = vcvt.s32.f32 %v1977
          %v2010 = vcvt.s32.f32 %v1978
          %v2011 = vcvt.s32.f32 %v1979
          %v2012 = vcvt.s32.f32 %v1980
          %v2013 = vcvt.s32.f32 %v1981
          %v2014 = vcvt.s32.f32 %v1982
          %v2015 = vcvt.s32.f32 %v1983
          %v2016 = vcvt.s32.f32 %v1984
          %v2017 = vcvt.s32.f32 %v1985
          %v2018 = vcvt.s32.f32 %v1986
          %v2019 = vcvt.s32.f32 %v1987
          %v2020 = vcvt.s32.f32 %v1988
          %v2021 = vcvt.s32.f32 %v1989
          %v2022 = vcvt.s32.f32 %v1990
          %v2023 = vcvt.s32.f32 %v1991
          %v2024 = vcvt.s32.f32 %v1992
          %v2025 = vcvt.s32.f32 %v1993
          %v2026 = vcvt.s32.f32 %v1994
          %v2027 = vcvt.s32.f32 %v1995
          %v2028 = vcvt.s32.f32 %v1996
          %v2029 = vcvt.s32.f32 %v1997
          %v2030 = vcvt.s32.f32 %v1998
          %v2031 = vcvt.s32.f32 %v1999
          %v2032 = vcvt.s32.f32 %v2000
          %v2033 = vcvt.s32.f32 %v2001
          %v2034 = vcvt.s32.f32 %v2002
          %v2035 = vcvt.s32.f32 %v2003
          %v2036 = vcvt.s32.f32 %v2004
          %v2037 = vcvt.s32.f32 %v2005
          %v2038 = vcvt.s32.f32 %v2006
          %v2039 = vcvt.s32.f32 %v2007
          %v2040 = vcvt.s32.f32 %v2008
          %s2041 = scalar_lea.vmem [#allocation2], 256
          %v2042 = vld [vmem:[%s2041] sm:$0xff]
          %v2043 = vld [vmem:[%s2041 + $0x8] sm:$0xff]
          %v2044 = vld [vmem:[%s2041 + $0x10] sm:$0xff]
          %v2045 = vld [vmem:[%s2041 + $0x18] sm:$0xff]
          %v2046 = vld [vmem:[%s2041 + $0x20] sm:$0xff]
          %v2047 = vld [vmem:[%s2041 + $0x28] sm:$0xff]
          %v2048 = vld [vmem:[%s2041 + $0x30] sm:$0xff]
          %v2049 = vld [vmem:[%s2041 + $0x38] sm:$0xff]
          %v2050 = vld [vmem:[%s2041 + $0x40] sm:$0xff]
          %v2051 = vld [vmem:[%s2041 + $0x48] sm:$0xff]
          %v2052 = vld [vmem:[%s2041 + $0x50] sm:$0xff]
          %v2053 = vld [vmem:[%s2041 + $0x58] sm:$0xff]
          %v2054 = vld [vmem:[%s2041 + $0x60] sm:$0xff]
          %v2055 = vld [vmem:[%s2041 + $0x68] sm:$0xff]
          %v2056 = vld [vmem:[%s2041 + $0x70] sm:$0xff]
          %v2057 = vld [vmem:[%s2041 + $0x78] sm:$0xff]
          %v2058 = vld [vmem:[%s2041 + $0x80] sm:$0xff]
          %v2059 = vld [vmem:[%s2041 + $0x88] sm:$0xff]
          %v2060 = vld [vmem:[%s2041 + $0x90] sm:$0xff]
          %v2061 = vld [vmem:[%s2041 + $0x98] sm:$0xff]
          %v2062 = vld [vmem:[%s2041 + $0xa0] sm:$0xff]
          %v2063 = vld [vmem:[%s2041 + $0xa8] sm:$0xff]
          %v2064 = vld [vmem:[%s2041 + $0xb0] sm:$0xff]
          %v2065 = vld [vmem:[%s2041 + $0xb8] sm:$0xff]
          %v2066 = vld [vmem:[%s2041 + $0xc0] sm:$0xff]
          %v2067 = vld [vmem:[%s2041 + $0xc8] sm:$0xff]
          %v2068 = vld [vmem:[%s2041 + $0xd0] sm:$0xff]
          %v2069 = vld [vmem:[%s2041 + $0xd8] sm:$0xff]
          %v2070 = vld [vmem:[%s2041 + $0xe0] sm:$0xff]
          %v2071 = vld [vmem:[%s2041 + $0xe8] sm:$0xff]
          %v2072 = vld [vmem:[%s2041 + $0xf0] sm:$0xff]
          %v2073 = vld [vmem:[%s2041 + $0xf8] sm:$0xff]
          %s2074 = sadd.s32 %s356, 256
          %s2075 = scalar_lea.vmem [#allocation2], %s2074
          %v2076 = vld [vmem:[%s2075] sm:$0xff]
          %v2077 = vld [vmem:[%s2075 + $0x8] sm:$0xff]
          %v2078 = vld [vmem:[%s2075 + $0x10] sm:$0xff]
          %v2079 = vld [vmem:[%s2075 + $0x18] sm:$0xff]
          %v2080 = vld [vmem:[%s2075 + $0x20] sm:$0xff]
          %v2081 = vld [vmem:[%s2075 + $0x28] sm:$0xff]
          %v2082 = vld [vmem:[%s2075 + $0x30] sm:$0xff]
          %v2083 = vld [vmem:[%s2075 + $0x38] sm:$0xff]
          %v2084 = vld [vmem:[%s2075 + $0x40] sm:$0xff]
          %v2085 = vld [vmem:[%s2075 + $0x48] sm:$0xff]
          %v2086 = vld [vmem:[%s2075 + $0x50] sm:$0xff]
          %v2087 = vld [vmem:[%s2075 + $0x58] sm:$0xff]
          %v2088 = vld [vmem:[%s2075 + $0x60] sm:$0xff]
          %v2089 = vld [vmem:[%s2075 + $0x68] sm:$0xff]
          %v2090 = vld [vmem:[%s2075 + $0x70] sm:$0xff]
          %v2091 = vld [vmem:[%s2075 + $0x78] sm:$0xff]
          %2092 = vmatprep.subr.mxu0 0.0
          %2093 = vmatpush1.msra.mxu0 %v2042
          %2094 = vmatprep.subr.mxu0 0.0
          %2095 = vmatpush1.msra.mxu0 %v2043
          %2096 = vmatprep.subr.mxu0 0.0
          %2097 = vmatpush1.msra.mxu0 %v2044
          %2098 = vmatprep.subr.mxu0 0.0
          %2099 = vmatpush1.msra.mxu0 %v2045
          %2100 = vmatprep.subr.mxu0 0.0
          %2101 = vmatpush1.msra.mxu0 %v2046
          %2102 = vmatprep.subr.mxu0 0.0
          %2103 = vmatpush1.msra.mxu0 %v2047
          %2104 = vmatprep.subr.mxu0 0.0
          %2105 = vmatpush1.msra.mxu0 %v2048
          %2106 = vmatprep.subr.mxu0 0.0
          %2107 = vmatpush1.msra.mxu0 %v2049
          %2108 = vmatprep.subr.mxu0 0.0
          %2109 = vmatpush1.msra.mxu0 %v2050
          %2110 = vmatprep.subr.mxu0 0.0
          %2111 = vmatpush1.msra.mxu0 %v2051
          %2112 = vmatprep.subr.mxu0 0.0
          %2113 = vmatpush1.msra.mxu0 %v2052
          %2114 = vmatprep.subr.mxu0 0.0
          %2115 = vmatpush1.msra.mxu0 %v2053
          %2116 = vmatprep.subr.mxu0 0.0
          %2117 = vmatpush1.msra.mxu0 %v2054
          %2118 = vmatprep.subr.mxu0 0.0
          %2119 = vmatpush1.msra.mxu0 %v2055
          %2120 = vmatprep.subr.mxu0 0.0
          %2121 = vmatpush1.msra.mxu0 %v2056
          %2122 = vmatprep.subr.mxu0 0.0
          %2123 = vmatpush1.msra.mxu0 %v2057
          %2124 = vmatprep.subr.mxu0 0.0
          %2125 = vmatpush1.msra.mxu0 %v2058
          %2126 = vmatprep.subr.mxu0 0.0
          %2127 = vmatpush1.msra.mxu0 %v2059
          %2128 = vmatprep.subr.mxu0 0.0
          %2129 = vmatpush1.msra.mxu0 %v2060
          %2130 = vmatprep.subr.mxu0 0.0
          %2131 = vmatpush1.msra.mxu0 %v2061
          %2132 = vmatprep.subr.mxu0 0.0
          %2133 = vmatpush1.msra.mxu0 %v2062
          %2134 = vmatprep.subr.mxu0 0.0
          %2135 = vmatpush1.msra.mxu0 %v2063
          %2136 = vmatprep.subr.mxu0 0.0
          %2137 = vmatpush1.msra.mxu0 %v2064
          %2138 = vmatprep.subr.mxu0 0.0
          %2139 = vmatpush1.msra.mxu0 %v2065
          %2140 = vmatprep.subr.mxu0 0.0
          %2141 = vmatpush1.msra.mxu0 %v2066
          %2142 = vmatprep.subr.mxu0 0.0
          %2143 = vmatpush1.msra.mxu0 %v2067
          %2144 = vmatprep.subr.mxu0 0.0
          %2145 = vmatpush1.msra.mxu0 %v2068
          %2146 = vmatprep.subr.mxu0 0.0
          %2147 = vmatpush1.msra.mxu0 %v2069
          %2148 = vmatprep.subr.mxu0 0.0
          %2149 = vmatpush1.msra.mxu0 %v2070
          %2150 = vmatprep.subr.mxu0 0.0
          %2151 = vmatpush1.msra.mxu0 %v2071
          %2152 = vmatprep.subr.mxu0 0.0
          %2153 = vmatpush1.msra.mxu0 %v2072
          %2154 = vmatprep.subr.mxu0 0.0
          %2155 = vmatpush1.msra.mxu0 %v2073
          %2156 = vmatprep.mubr.f32.mxu0 %v2010
          %2157 = vmatmul.mubr.f32.gmra.mrb[0].mxu0 %v2009
          %v2158 = vpop.f32.mrb[0].mxu0
          %v2159 = vadd.f32 0.0, %v2158
          %v2160 = vpop.f32.mrb[0].mxu0
          %2161 = vmatprep.mubr.f32.mxu0 %v2012
          %2162 = vmatmul.mubr.f32.gmra.mrb[0].mxu0 %v2011
          %v2163 = vpop.f32.mrb[0].mxu0
          %v2164 = vadd.f32 0.0, %v2163
          %v2165 = vpop.f32.mrb[0].mxu0
          %2166 = vmatprep.mubr.f32.mxu0 %v2014
          %2167 = vmatmul.mubr.f32.gmra.mrb[0].mxu0 %v2013
          %v2168 = vpop.f32.mrb[0].mxu0
          %v2169 = vadd.f32 0.0, %v2168
          %v2170 = vpop.f32.mrb[0].mxu0
          %2171 = vmatprep.mubr.f32.mxu0 %v2016
          %2172 = vmatmul.mubr.f32.gmra.mrb[0].mxu0 %v2015
          %v2173 = vpop.f32.mrb[0].mxu0
          %v2174 = vadd.f32 0.0, %v2173
          %v2175 = vpop.f32.mrb[0].mxu0
          %2176 = vmatprep.mubr.f32.mxu0 %v2018
          %2177 = vmatmul.mubr.f32.gmra.mrb[0].mxu0 %v2017
          %v2178 = vpop.f32.mrb[0].mxu0
          %v2179 = vadd.f32 0.0, %v2178
          %v2180 = vpop.f32.mrb[0].mxu0
          %2181 = vmatprep.mubr.f32.mxu0 %v2020
          %2182 = vmatmul.mubr.f32.gmra.mrb[0].mxu0 %v2019
          %v2183 = vpop.f32.mrb[0].mxu0
          %v2184 = vadd.f32 0.0, %v2183
          %v2185 = vpop.f32.mrb[0].mxu0
          %2186 = vmatprep.mubr.f32.mxu0 %v2022
          %2187 = vmatmul.mubr.f32.gmra.mrb[0].mxu0 %v2021
          %v2188 = vpop.f32.mrb[0].mxu0
          %v2189 = vadd.f32 0.0, %v2188
          %v2190 = vpop.f32.mrb[0].mxu0
          %2191 = vmatprep.mubr.f32.mxu0 %v2024
          %2192 = vmatmul.mubr.f32.gmra.mrb[0].mxu0 %v2023
          %v2193 = vpop.f32.mrb[0].mxu0
          %v2194 = vadd.f32 0.0, %v2193
          %v2195 = vpop.f32.mrb[0].mxu0
          %2196 = vmatprep.mubr.f32.mxu0 %v2026
          %2197 = vmatmul.mubr.f32.gmra.mrb[0].mxu0 %v2025
          %v2198 = vpop.f32.mrb[0].mxu0
          %v2199 = vadd.f32 0.0, %v2198
          %v2200 = vpop.f32.mrb[0].mxu0
          %2201 = vmatprep.mubr.f32.mxu0 %v2028
          %2202 = vmatmul.mubr.f32.gmra.mrb[0].mxu0 %v2027
          %v2203 = vpop.f32.mrb[0].mxu0
          %v2204 = vadd.f32 0.0, %v2203
          %v2205 = vpop.f32.mrb[0].mxu0
          %2206 = vmatprep.mubr.f32.mxu0 %v2030
          %2207 = vmatmul.mubr.f32.gmra.mrb[0].mxu0 %v2029
          %v2208 = vpop.f32.mrb[0].mxu0
          %v2209 = vadd.f32 0.0, %v2208
          %v2210 = vpop.f32.mrb[0].mxu0
          %2211 = vmatprep.mubr.f32.mxu0 %v2032
          %2212 = vmatmul.mubr.f32.gmra.mrb[0].mxu0 %v2031
          %v2213 = vpop.f32.mrb[0].mxu0
          %v2214 = vadd.f32 0.0, %v2213
          %v2215 = vpop.f32.mrb[0].mxu0
          %2216 = vmatprep.mubr.f32.mxu0 %v2034
          %2217 = vmatmul.mubr.f32.gmra.mrb[0].mxu0 %v2033
          %v2218 = vpop.f32.mrb[0].mxu0
          %v2219 = vadd.f32 0.0, %v2218
          %v2220 = vpop.f32.mrb[0].mxu0
          %2221 = vmatprep.mubr.f32.mxu0 %v2036
          %2222 = vmatmul.mubr.f32.gmra.mrb[0].mxu0 %v2035
          %v2223 = vpop.f32.mrb[0].mxu0
          %v2224 = vadd.f32 0.0, %v2223
          %v2225 = vpop.f32.mrb[0].mxu0
          %2226 = vmatprep.mubr.f32.mxu0 %v2038
          %2227 = vmatmul.mubr.f32.gmra.mrb[0].mxu0 %v2037
          %v2228 = vpop.f32.mrb[0].mxu0
          %v2229 = vadd.f32 0.0, %v2228
          %v2230 = vpop.f32.mrb[0].mxu0
          %2231 = vmatprep.mubr.f32.mxu0 %v2040
          %2232 = vmatmul.mubr.f32.gmra.mrb[0].mxu0 %v2039
          %v2233 = vpop.f32.mrb[0].mxu0
          %v2234 = vadd.f32 0.0, %v2233
          %v2235 = vpop.f32.mrb[0].mxu0
          %2236 = vdwg.mxu0
          %v2237 = vld [vmem:[%s280] sm:$0xff]
          %v2238 = vld [vmem:[%s280 + $0x8] sm:$0xff]
          %v2239 = vld [vmem:[%s280 + $0x10] sm:$0xff]
          %v2240 = vld [vmem:[%s280 + $0x18] sm:$0xff]
          %v2241 = vld [vmem:[%s280 + $0x20] sm:$0xff]
          %v2242 = vld [vmem:[%s280 + $0x28] sm:$0xff]
          %v2243 = vld [vmem:[%s280 + $0x30] sm:$0xff]
          %v2244 = vld [vmem:[%s280 + $0x38] sm:$0xff]
          %v2245 = vld [vmem:[%s280 + $0x40] sm:$0xff]
          %v2246 = vld [vmem:[%s280 + $0x48] sm:$0xff]
          %v2247 = vld [vmem:[%s280 + $0x50] sm:$0xff]
          %v2248 = vld [vmem:[%s280 + $0x58] sm:$0xff]
          %v2249 = vld [vmem:[%s280 + $0x60] sm:$0xff]
          %v2250 = vld [vmem:[%s280 + $0x68] sm:$0xff]
          %v2251 = vld [vmem:[%s280 + $0x70] sm:$0xff]
          %v2252 = vld [vmem:[%s280 + $0x78] sm:$0xff]
          %v2253 = vld [vmem:[%s280 + $0x80] sm:$0xff]
          %v2254 = vld [vmem:[%s280 + $0x88] sm:$0xff]
          %v2255 = vld [vmem:[%s280 + $0x90] sm:$0xff]
          %v2256 = vld [vmem:[%s280 + $0x98] sm:$0xff]
          %v2257 = vld [vmem:[%s280 + $0xa0] sm:$0xff]
          %v2258 = vld [vmem:[%s280 + $0xa8] sm:$0xff]
          %v2259 = vld [vmem:[%s280 + $0xb0] sm:$0xff]
          %v2260 = vld [vmem:[%s280 + $0xb8] sm:$0xff]
          %v2261 = vld [vmem:[%s280 + $0xc0] sm:$0xff]
          %v2262 = vld [vmem:[%s280 + $0xc8] sm:$0xff]
          %v2263 = vld [vmem:[%s280 + $0xd0] sm:$0xff]
          %v2264 = vld [vmem:[%s280 + $0xd8] sm:$0xff]
          %v2265 = vld [vmem:[%s280 + $0xe0] sm:$0xff]
          %v2266 = vld [vmem:[%s280 + $0xe8] sm:$0xff]
          %v2267 = vld [vmem:[%s280 + $0xf0] sm:$0xff]
          %v2268 = vld [vmem:[%s280 + $0xf8] sm:$0xff]
          %v2269 = vld [vmem:[%s280 + $0x100] sm:$0xff]
          %v2270 = vld [vmem:[%s280 + $0x108] sm:$0xff]
          %v2271 = vld [vmem:[%s280 + $0x110] sm:$0xff]
          %v2272 = vld [vmem:[%s280 + $0x118] sm:$0xff]
          %v2273 = vld [vmem:[%s280 + $0x120] sm:$0xff]
          %v2274 = vld [vmem:[%s280 + $0x128] sm:$0xff]
          %v2275 = vld [vmem:[%s280 + $0x130] sm:$0xff]
          %v2276 = vld [vmem:[%s280 + $0x138] sm:$0xff]
          %v2277 = vld [vmem:[%s280 + $0x140] sm:$0xff]
          %v2278 = vld [vmem:[%s280 + $0x148] sm:$0xff]
          %v2279 = vld [vmem:[%s280 + $0x150] sm:$0xff]
          %v2280 = vld [vmem:[%s280 + $0x158] sm:$0xff]
          %v2281 = vld [vmem:[%s280 + $0x160] sm:$0xff]
          %v2282 = vld [vmem:[%s280 + $0x168] sm:$0xff]
          %v2283 = vld [vmem:[%s280 + $0x170] sm:$0xff]
          %v2284 = vld [vmem:[%s280 + $0x178] sm:$0xff]
          %v2285 = vld [vmem:[%s4] sm:$0x7]
          %v2287 = vlaneseq
          %v2288 = vshrl.u32 %v2287, 7
          %v2289 = vsub.s32 0, %v2288
          %v2290 = vrot.slane %v2285, %v2289
          %v2291 = vlaneseq
          %v2292 = vshrl.u32 %v2291, 7
          %v2293 = vsub.s32 1, %v2292
          %v2294 = vrot.slane %v2285, %v2293
          %v2295 = vlaneseq
          %v2296 = vshrl.u32 %v2295, 7
          %v2297 = vsub.s32 2, %v2296
          %v2298 = vrot.slane %v2285, %v2297
          %2302 = vmatprep.subr.mxu0 %v2238
          %2303 = vmatpush1.msra.mxu0 %v2237
          %2304 = vmatprep.subr.mxu0 %v2241
          %2305 = vmatpush1.msra.mxu0 %v2240
          %2306 = vmatprep.subr.mxu0 %v2244
          %2307 = vmatpush1.msra.mxu0 %v2243
          %2308 = vmatprep.subr.mxu0 %v2247
          %2309 = vmatpush1.msra.mxu0 %v2246
          %2310 = vmatprep.subr.mxu0 %v2250
          %2311 = vmatpush1.msra.mxu0 %v2249
          %2312 = vmatprep.subr.mxu0 %v2253
          %2313 = vmatpush1.msra.mxu0 %v2252
          %2314 = vmatprep.subr.mxu0 %v2256
          %2315 = vmatpush1.msra.mxu0 %v2255
          %2316 = vmatprep.subr.mxu0 %v2259
          %2317 = vmatpush1.msra.mxu0 %v2258
          %2318 = vmatprep.subr.mxu0 %v2262
          %2319 = vmatpush1.msra.mxu0 %v2261
          %2320 = vmatprep.subr.mxu0 %v2265
          %2321 = vmatpush1.msra.mxu0 %v2264
          %2322 = vmatprep.subr.mxu0 %v2268
          %2323 = vmatpush1.msra.mxu0 %v2267
          %2324 = vmatprep.subr.mxu0 %v2271
          %2325 = vmatpush1.msra.mxu0 %v2270
          %2326 = vmatprep.subr.mxu0 %v2274
          %2327 = vmatpush1.msra.mxu0 %v2273
          %2328 = vmatprep.subr.mxu0 %v2277
          %2329 = vmatpush1.msra.mxu0 %v2276
          %2330 = vmatprep.subr.mxu0 %v2280
          %2331 = vmatpush1.msra.mxu0 %v2279
          %2332 = vmatprep.subr.mxu0 %v2283
          %2333 = vmatpush1.msra.mxu0 %v2282
          %2334 = vmatprep.subr.mxu0 0.0
          %2335 = vmatpush1.msra.mxu0 0.0
          %2336 = vmatprep.subr.mxu0 0.0
          %2337 = vmatpush1.msra.mxu0 0.0
          %2338 = vmatprep.subr.mxu0 0.0
          %2339 = vmatpush1.msra.mxu0 0.0
          %2340 = vmatprep.subr.mxu0 0.0
          %2341 = vmatpush1.msra.mxu0 0.0
          %2342 = vmatprep.subr.mxu0 0.0
          %2343 = vmatpush1.msra.mxu0 0.0
          %2344 = vmatprep.subr.mxu0 0.0
          %2345 = vmatpush1.msra.mxu0 0.0
          %2346 = vmatprep.subr.mxu0 0.0
          %2347 = vmatpush1.msra.mxu0 0.0
          %2348 = vmatprep.subr.mxu0 0.0
          %2349 = vmatpush1.msra.mxu0 0.0
          %2350 = vmatprep.subr.mxu0 0.0
          %2351 = vmatpush1.msra.mxu0 0.0
          %2352 = vmatprep.subr.mxu0 0.0
          %2353 = vmatpush1.msra.mxu0 0.0
          %2354 = vmatprep.subr.mxu0 0.0
          %2355 = vmatpush1.msra.mxu0 0.0
          %2356 = vmatprep.subr.mxu0 0.0
          %2357 = vmatpush1.msra.mxu0 0.0
          %2358 = vmatprep.subr.mxu0 0.0
          %2359 = vmatpush1.msra.mxu0 0.0
          %2360 = vmatprep.subr.mxu0 0.0
          %2361 = vmatpush1.msra.mxu0 0.0
          %2362 = vmatprep.subr.mxu0 0.0
          %2363 = vmatpush1.msra.mxu0 0.0
          %2364 = vmatprep.subr.mxu0 0.0
          %2365 = vmatpush1.msra.mxu0 0.0
          %2366 = vmatprep.mubr.f32.mxu0 0.0
          %2367 = vmatmul.mubr.f32.gmra.mrb[0].mxu0 %v2159
          %v2368 = vpop.f32.mrb[0].mxu0
          %v2369 = vadd.f32 %v2290, %v2368
          %v2370 = vpop.f32.mrb[0].mxu0
          %v2371 = vadd.f32 %v2294, %v2370
          %2372 = vmatprep.mubr.f32.mxu0 0.0
          %2373 = vmatmul.mubr.f32.gmra.mrb[0].mxu0 %v2164
          %v2374 = vpop.f32.mrb[0].mxu0
          %v2375 = vadd.f32 %v2290, %v2374
          %v2376 = vpop.f32.mrb[0].mxu0
          %v2377 = vadd.f32 %v2294, %v2376
          %2378 = vmatprep.mubr.f32.mxu0 0.0
          %2379 = vmatmul.mubr.f32.gmra.mrb[0].mxu0 %v2169
          %v2380 = vpop.f32.mrb[0].mxu0
          %v2381 = vadd.f32 %v2290, %v2380
          %v2382 = vpop.f32.mrb[0].mxu0
          %v2383 = vadd.f32 %v2294, %v2382
          %2384 = vmatprep.mubr.f32.mxu0 0.0
          %2385 = vmatmul.mubr.f32.gmra.mrb[0].mxu0 %v2174
          %v2386 = vpop.f32.mrb[0].mxu0
          %v2387 = vadd.f32 %v2290, %v2386
          %v2388 = vpop.f32.mrb[0].mxu0
          %v2389 = vadd.f32 %v2294, %v2388
          %2390 = vmatprep.mubr.f32.mxu0 0.0
          %2391 = vmatmul.mubr.f32.gmra.mrb[0].mxu0 %v2179
          %v2392 = vpop.f32.mrb[0].mxu0
          %v2393 = vadd.f32 %v2290, %v2392
          %v2394 = vpop.f32.mrb[0].mxu0
          %v2395 = vadd.f32 %v2294, %v2394
          %2396 = vmatprep.mubr.f32.mxu0 0.0
          %2397 = vmatmul.mubr.f32.gmra.mrb[0].mxu0 %v2184
          %v2398 = vpop.f32.mrb[0].mxu0
          %v2399 = vadd.f32 %v2290, %v2398
          %v2400 = vpop.f32.mrb[0].mxu0
          %v2401 = vadd.f32 %v2294, %v2400
          %2402 = vmatprep.mubr.f32.mxu0 0.0
          %2403 = vmatmul.mubr.f32.gmra.mrb[0].mxu0 %v2189
          %v2404 = vpop.f32.mrb[0].mxu0
          %v2405 = vadd.f32 %v2290, %v2404
          %v2406 = vpop.f32.mrb[0].mxu0
          %v2407 = vadd.f32 %v2294, %v2406
          %2408 = vmatprep.mubr.f32.mxu0 0.0
          %2409 = vmatmul.mubr.f32.gmra.mrb[0].mxu0 %v2194
          %v2410 = vpop.f32.mrb[0].mxu0
          %v2411 = vadd.f32 %v2290, %v2410
          %v2412 = vpop.f32.mrb[0].mxu0
          %v2413 = vadd.f32 %v2294, %v2412
          %2414 = vmatprep.mubr.f32.mxu0 0.0
          %2415 = vmatmul.mubr.f32.gmra.mrb[0].mxu0 %v2199
          %v2416 = vpop.f32.mrb[0].mxu0
          %v2417 = vadd.f32 %v2290, %v2416
          %v2418 = vpop.f32.mrb[0].mxu0
          %v2419 = vadd.f32 %v2294, %v2418
          %2420 = vmatprep.mubr.f32.mxu0 0.0
          %2421 = vmatmul.mubr.f32.gmra.mrb[0].mxu0 %v2204
          %v2422 = vpop.f32.mrb[0].mxu0
          %v2423 = vadd.f32 %v2290, %v2422
          %v2424 = vpop.f32.mrb[0].mxu0
          %v2425 = vadd.f32 %v2294, %v2424
          %2426 = vmatprep.mubr.f32.mxu0 0.0
          %2427 = vmatmul.mubr.f32.gmra.mrb[0].mxu0 %v2209
          %v2428 = vpop.f32.mrb[0].mxu0
          %v2429 = vadd.f32 %v2290, %v2428
          %v2430 = vpop.f32.mrb[0].mxu0
          %v2431 = vadd.f32 %v2294, %v2430
          %2432 = vmatprep.mubr.f32.mxu0 0.0
          %2433 = vmatmul.mubr.f32.gmra.mrb[0].mxu0 %v2214
          %v2434 = vpop.f32.mrb[0].mxu0
          %v2435 = vadd.f32 %v2290, %v2434
          %v2436 = vpop.f32.mrb[0].mxu0
          %v2437 = vadd.f32 %v2294, %v2436
          %2438 = vmatprep.mubr.f32.mxu0 0.0
          %2439 = vmatmul.mubr.f32.gmra.mrb[0].mxu0 %v2219
          %v2440 = vpop.f32.mrb[0].mxu0
          %v2441 = vadd.f32 %v2290, %v2440
          %v2442 = vpop.f32.mrb[0].mxu0
          %v2443 = vadd.f32 %v2294, %v2442
          %2444 = vmatprep.mubr.f32.mxu0 0.0
          %2445 = vmatmul.mubr.f32.gmra.mrb[0].mxu0 %v2224
          %v2446 = vpop.f32.mrb[0].mxu0
          %v2447 = vadd.f32 %v2290, %v2446
          %v2448 = vpop.f32.mrb[0].mxu0
          %v2449 = vadd.f32 %v2294, %v2448
          %2450 = vmatprep.mubr.f32.mxu0 0.0
          %2451 = vmatmul.mubr.f32.gmra.mrb[0].mxu0 %v2229
          %v2452 = vpop.f32.mrb[0].mxu0
          %v2453 = vadd.f32 %v2290, %v2452
          %v2454 = vpop.f32.mrb[0].mxu0
          %v2455 = vadd.f32 %v2294, %v2454
          %2456 = vmatprep.mubr.f32.mxu0 0.0
          %2457 = vmatmul.mubr.f32.gmra.mrb[0].mxu0 %v2234
          %v2458 = vpop.f32.mrb[0].mxu0
          %v2459 = vadd.f32 %v2290, %v2458
          %v2460 = vpop.f32.mrb[0].mxu0
          %v2461 = vadd.f32 %v2294, %v2460
          %2462 = vdwg.mxu0
          %2463 = vmatprep.subr.mxu0 0.0
          %2464 = vmatpush1.msra.mxu0 %v2239
          %2465 = vmatprep.subr.mxu0 0.0
          %2466 = vmatpush1.msra.mxu0 %v2242
          %2467 = vmatprep.subr.mxu0 0.0
          %2468 = vmatpush1.msra.mxu0 %v2245
          %2469 = vmatprep.subr.mxu0 0.0
          %2470 = vmatpush1.msra.mxu0 %v2248
          %2471 = vmatprep.subr.mxu0 0.0
          %2472 = vmatpush1.msra.mxu0 %v2251
          %2473 = vmatprep.subr.mxu0 0.0
          %2474 = vmatpush1.msra.mxu0 %v2254
          %2475 = vmatprep.subr.mxu0 0.0
          %2476 = vmatpush1.msra.mxu0 %v2257
          %2477 = vmatprep.subr.mxu0 0.0
          %2478 = vmatpush1.msra.mxu0 %v2260
          %2479 = vmatprep.subr.mxu0 0.0
          %2480 = vmatpush1.msra.mxu0 %v2263
          %2481 = vmatprep.subr.mxu0 0.0
          %2482 = vmatpush1.msra.mxu0 %v2266
          %2483 = vmatprep.subr.mxu0 0.0
          %2484 = vmatpush1.msra.mxu0 %v2269
          %2485 = vmatprep.subr.mxu0 0.0
          %2486 = vmatpush1.msra.mxu0 %v2272
          %2487 = vmatprep.subr.mxu0 0.0
          %2488 = vmatpush1.msra.mxu0 %v2275
          %2489 = vmatprep.subr.mxu0 0.0
          %2490 = vmatpush1.msra.mxu0 %v2278
          %2491 = vmatprep.subr.mxu0 0.0
          %2492 = vmatpush1.msra.mxu0 %v2281
          %2493 = vmatprep.subr.mxu0 0.0
          %2494 = vmatpush1.msra.mxu0 %v2284
          %2495 = vmatprep.subr.mxu0 0.0
          %2496 = vmatpush1.msra.mxu0 0.0
          %2497 = vmatprep.subr.mxu0 0.0
          %2498 = vmatpush1.msra.mxu0 0.0
          %2499 = vmatprep.subr.mxu0 0.0
          %2500 = vmatpush1.msra.mxu0 0.0
          %2501 = vmatprep.subr.mxu0 0.0
          %2502 = vmatpush1.msra.mxu0 0.0
          %2503 = vmatprep.subr.mxu0 0.0
          %2504 = vmatpush1.msra.mxu0 0.0
          %2505 = vmatprep.subr.mxu0 0.0
          %2506 = vmatpush1.msra.mxu0 0.0
          %2507 = vmatprep.subr.mxu0 0.0
          %2508 = vmatpush1.msra.mxu0 0.0
          %2509 = vmatprep.subr.mxu0 0.0
          %2510 = vmatpush1.msra.mxu0 0.0
          %2511 = vmatprep.subr.mxu0 0.0
          %2512 = vmatpush1.msra.mxu0 0.0
          %2513 = vmatprep.subr.mxu0 0.0
          %2514 = vmatpush1.msra.mxu0 0.0
          %2515 = vmatprep.subr.mxu0 0.0
          %2516 = vmatpush1.msra.mxu0 0.0
          %2517 = vmatprep.subr.mxu0 0.0
          %2518 = vmatpush1.msra.mxu0 0.0
          %2519 = vmatprep.subr.mxu0 0.0
          %2520 = vmatpush1.msra.mxu0 0.0
          %2521 = vmatprep.subr.mxu0 0.0
          %2522 = vmatpush1.msra.mxu0 0.0
          %2523 = vmatprep.subr.mxu0 0.0
          %2524 = vmatpush1.msra.mxu0 0.0
          %2525 = vmatprep.subr.mxu0 0.0
          %2526 = vmatpush1.msra.mxu0 0.0
          %2527 = vmatprep.mubr.f32.mxu0 0.0
          %2528 = vmatmul.mubr.f32.gmra.mrb[0].mxu0 %v2159
          %v2529 = vpop.f32.mrb[0].mxu0
          %v2530 = vadd.f32 %v2298, %v2529
          %v2531 = vpop.f32.mrb[0].mxu0
          %2532 = vmatprep.mubr.f32.mxu0 0.0
          %2533 = vmatmul.mubr.f32.gmra.mrb[0].mxu0 %v2164
          %v2534 = vpop.f32.mrb[0].mxu0
          %v2535 = vadd.f32 %v2298, %v2534
          %v2536 = vpop.f32.mrb[0].mxu0
          %2537 = vmatprep.mubr.f32.mxu0 0.0
          %2538 = vmatmul.mubr.f32.gmra.mrb[0].mxu0 %v2169
          %v2539 = vpop.f32.mrb[0].mxu0
          %v2540 = vadd.f32 %v2298, %v2539
          %v2541 = vpop.f32.mrb[0].mxu0
          %2542 = vmatprep.mubr.f32.mxu0 0.0
          %2543 = vmatmul.mubr.f32.gmra.mrb[0].mxu0 %v2174
          %v2544 = vpop.f32.mrb[0].mxu0
          %v2545 = vadd.f32 %v2298, %v2544
          %v2546 = vpop.f32.mrb[0].mxu0
          %2547 = vmatprep.mubr.f32.mxu0 0.0
          %2548 = vmatmul.mubr.f32.gmra.mrb[0].mxu0 %v2179
          %v2549 = vpop.f32.mrb[0].mxu0
          %v2550 = vadd.f32 %v2298, %v2549
          %v2551 = vpop.f32.mrb[0].mxu0
          %2552 = vmatprep.mubr.f32.mxu0 0.0
          %2553 = vmatmul.mubr.f32.gmra.mrb[0].mxu0 %v2184
          %v2554 = vpop.f32.mrb[0].mxu0
          %v2555 = vadd.f32 %v2298, %v2554
          %v2556 = vpop.f32.mrb[0].mxu0
          %2557 = vmatprep.mubr.f32.mxu0 0.0
          %2558 = vmatmul.mubr.f32.gmra.mrb[0].mxu0 %v2189
          %v2559 = vpop.f32.mrb[0].mxu0
          %v2560 = vadd.f32 %v2298, %v2559
          %v2561 = vpop.f32.mrb[0].mxu0
          %2562 = vmatprep.mubr.f32.mxu0 0.0
          %2563 = vmatmul.mubr.f32.gmra.mrb[0].mxu0 %v2194
          %v2564 = vpop.f32.mrb[0].mxu0
          %v2565 = vadd.f32 %v2298, %v2564
          %v2566 = vpop.f32.mrb[0].mxu0
          %2567 = vmatprep.mubr.f32.mxu0 0.0
          %2568 = vmatmul.mubr.f32.gmra.mrb[0].mxu0 %v2199
          %v2569 = vpop.f32.mrb[0].mxu0
          %v2570 = vadd.f32 %v2298, %v2569
          %v2571 = vpop.f32.mrb[0].mxu0
          %2572 = vmatprep.mubr.f32.mxu0 0.0
          %2573 = vmatmul.mubr.f32.gmra.mrb[0].mxu0 %v2204
          %v2574 = vpop.f32.mrb[0].mxu0
          %v2575 = vadd.f32 %v2298, %v2574
          %v2576 = vpop.f32.mrb[0].mxu0
          %2577 = vmatprep.mubr.f32.mxu0 0.0
          %2578 = vmatmul.mubr.f32.gmra.mrb[0].mxu0 %v2209
          %v2579 = vpop.f32.mrb[0].mxu0
          %v2580 = vadd.f32 %v2298, %v2579
          %v2581 = vpop.f32.mrb[0].mxu0
          %2582 = vmatprep.mubr.f32.mxu0 0.0
          %2583 = vmatmul.mubr.f32.gmra.mrb[0].mxu0 %v2214
          %v2584 = vpop.f32.mrb[0].mxu0
          %v2585 = vadd.f32 %v2298, %v2584
          %v2586 = vpop.f32.mrb[0].mxu0
          %2587 = vmatprep.mubr.f32.mxu0 0.0
          %2588 = vmatmul.mubr.f32.gmra.mrb[0].mxu0 %v2219
          %v2589 = vpop.f32.mrb[0].mxu0
          %v2590 = vadd.f32 %v2298, %v2589
          %v2591 = vpop.f32.mrb[0].mxu0
          %2592 = vmatprep.mubr.f32.mxu0 0.0
          %2593 = vmatmul.mubr.f32.gmra.mrb[0].mxu0 %v2224
          %v2594 = vpop.f32.mrb[0].mxu0
          %v2595 = vadd.f32 %v2298, %v2594
          %v2596 = vpop.f32.mrb[0].mxu0
          %2597 = vmatprep.mubr.f32.mxu0 0.0
          %2598 = vmatmul.mubr.f32.gmra.mrb[0].mxu0 %v2229
          %v2599 = vpop.f32.mrb[0].mxu0
          %v2600 = vadd.f32 %v2298, %v2599
          %v2601 = vpop.f32.mrb[0].mxu0
          %2602 = vmatprep.mubr.f32.mxu0 0.0
          %2603 = vmatmul.mubr.f32.gmra.mrb[0].mxu0 %v2234
          %v2604 = vpop.f32.mrb[0].mxu0
          %v2605 = vadd.f32 %v2298, %v2604
          %v2606 = vpop.f32.mrb[0].mxu0
          %2607 = vdwg.mxu0
          %v2608 = vld [vmem:[#allocation8] sm:$0xff]
          %v2609 = vld [vmem:[#allocation8 + $0x8] sm:$0xff]
          %v2610 = vld [vmem:[#allocation8 + $0x10] sm:$0xff]
          %v2611 = vld [vmem:[#allocation8 + $0x18] sm:$0xff]
          %v2612 = vld [vmem:[#allocation8 + $0x20] sm:$0xff]
          %v2613 = vld [vmem:[#allocation8 + $0x28] sm:$0xff]
          %v2614 = vld [vmem:[#allocation8 + $0x30] sm:$0xff]
          %v2615 = vld [vmem:[#allocation8 + $0x38] sm:$0xff]
          %v2616 = vld [vmem:[#allocation8 + $0x40] sm:$0xff]
          %v2617 = vld [vmem:[#allocation8 + $0x48] sm:$0xff]
          %v2618 = vld [vmem:[#allocation8 + $0x50] sm:$0xff]
          %v2619 = vld [vmem:[#allocation8 + $0x58] sm:$0xff]
          %v2620 = vld [vmem:[#allocation8 + $0x60] sm:$0xff]
          %v2621 = vld [vmem:[#allocation8 + $0x68] sm:$0xff]
          %v2622 = vld [vmem:[#allocation8 + $0x70] sm:$0xff]
          %v2623 = vld [vmem:[#allocation8 + $0x78] sm:$0xff]
          %v2624 = vld [vmem:[#allocation8 + $0x80] sm:$0xff]
          %v2625 = vld [vmem:[#allocation8 + $0x88] sm:$0xff]
          %v2626 = vld [vmem:[#allocation8 + $0x90] sm:$0xff]
          %v2627 = vld [vmem:[#allocation8 + $0x98] sm:$0xff]
          %v2628 = vld [vmem:[#allocation8 + $0xa0] sm:$0xff]
          %v2629 = vld [vmem:[#allocation8 + $0xa8] sm:$0xff]
          %v2630 = vld [vmem:[#allocation8 + $0xb0] sm:$0xff]
          %v2631 = vld [vmem:[#allocation8 + $0xb8] sm:$0xff]
          %v2632 = vld [vmem:[#allocation8 + $0xc0] sm:$0xff]
          %v2633 = vld [vmem:[#allocation8 + $0xc8] sm:$0xff]
          %v2634 = vld [vmem:[#allocation8 + $0xd0] sm:$0xff]
          %v2635 = vld [vmem:[#allocation8 + $0xd8] sm:$0xff]
          %v2636 = vld [vmem:[#allocation8 + $0xe0] sm:$0xff]
          %v2637 = vld [vmem:[#allocation8 + $0xe8] sm:$0xff]
          %v2638 = vld [vmem:[#allocation8 + $0xf0] sm:$0xff]
          %v2639 = vld [vmem:[#allocation8 + $0xf8] sm:$0xff]
          %v2640 = vld [vmem:[#allocation8 + $0x100] sm:$0xff]
          %v2641 = vld [vmem:[#allocation8 + $0x108] sm:$0xff]
          %v2642 = vld [vmem:[#allocation8 + $0x110] sm:$0xff]
          %v2643 = vld [vmem:[#allocation8 + $0x118] sm:$0xff]
          %v2644 = vld [vmem:[#allocation8 + $0x120] sm:$0xff]
          %v2645 = vld [vmem:[#allocation8 + $0x128] sm:$0xff]
          %v2646 = vld [vmem:[#allocation8 + $0x130] sm:$0xff]
          %v2647 = vld [vmem:[#allocation8 + $0x138] sm:$0xff]
          %v2648 = vld [vmem:[#allocation8 + $0x140] sm:$0xff]
          %v2649 = vld [vmem:[#allocation8 + $0x148] sm:$0xff]
          %v2650 = vld [vmem:[#allocation8 + $0x150] sm:$0xff]
          %v2651 = vld [vmem:[#allocation8 + $0x158] sm:$0xff]
          %v2652 = vld [vmem:[#allocation8 + $0x160] sm:$0xff]
          %v2653 = vld [vmem:[#allocation8 + $0x168] sm:$0xff]
          %v2654 = vld [vmem:[#allocation8 + $0x170] sm:$0xff]
          %v2655 = vld [vmem:[#allocation8 + $0x178] sm:$0xff]
          %v2656 = vld [vmem:[%s5] sm:$0x7]
          %v2658 = vlaneseq
          %v2659 = vshrl.u32 %v2658, 7
          %v2660 = vsub.s32 0, %v2659
          %v2661 = vrot.slane %v2656, %v2660
          %v2662 = vlaneseq
          %v2663 = vshrl.u32 %v2662, 7
          %v2664 = vsub.s32 1, %v2663
          %v2665 = vrot.slane %v2656, %v2664
          %v2666 = vlaneseq
          %v2667 = vshrl.u32 %v2666, 7
          %v2668 = vsub.s32 2, %v2667
          %v2669 = vrot.slane %v2656, %v2668
          %2673 = vmatprep.subr.mxu0 %v2609
          %2674 = vmatpush1.msra.mxu0 %v2608
          %2675 = vmatprep.subr.mxu0 %v2612
          %2676 = vmatpush1.msra.mxu0 %v2611
          %2677 = vmatprep.subr.mxu0 %v2615
          %2678 = vmatpush1.msra.mxu0 %v2614
          %2679 = vmatprep.subr.mxu0 %v2618
          %2680 = vmatpush1.msra.mxu0 %v2617
          %2681 = vmatprep.subr.mxu0 %v2621
          %2682 = vmatpush1.msra.mxu0 %v2620
          %2683 = vmatprep.subr.mxu0 %v2624
          %2684 = vmatpush1.msra.mxu0 %v2623
          %2685 = vmatprep.subr.mxu0 %v2627
          %2686 = vmatpush1.msra.mxu0 %v2626
          %2687 = vmatprep.subr.mxu0 %v2630
          %2688 = vmatpush1.msra.mxu0 %v2629
          %2689 = vmatprep.subr.mxu0 %v2633
          %2690 = vmatpush1.msra.mxu0 %v2632
          %2691 = vmatprep.subr.mxu0 %v2636
          %2692 = vmatpush1.msra.mxu0 %v2635
          %2693 = vmatprep.subr.mxu0 %v2639
          %2694 = vmatpush1.msra.mxu0 %v2638
          %2695 = vmatprep.subr.mxu0 %v2642
          %2696 = vmatpush1.msra.mxu0 %v2641
          %2697 = vmatprep.subr.mxu0 %v2645
          %2698 = vmatpush1.msra.mxu0 %v2644
          %2699 = vmatprep.subr.mxu0 %v2648
          %2700 = vmatpush1.msra.mxu0 %v2647
          %2701 = vmatprep.subr.mxu0 %v2651
          %2702 = vmatpush1.msra.mxu0 %v2650
          %2703 = vmatprep.subr.mxu0 %v2654
          %2704 = vmatpush1.msra.mxu0 %v2653
          %2705 = vmatprep.subr.mxu0 0.0
          %2706 = vmatpush1.msra.mxu0 0.0
          %2707 = vmatprep.subr.mxu0 0.0
          %2708 = vmatpush1.msra.mxu0 0.0
          %2709 = vmatprep.subr.mxu0 0.0
          %2710 = vmatpush1.msra.mxu0 0.0
          %2711 = vmatprep.subr.mxu0 0.0
          %2712 = vmatpush1.msra.mxu0 0.0
          %2713 = vmatprep.subr.mxu0 0.0
          %2714 = vmatpush1.msra.mxu0 0.0
          %2715 = vmatprep.subr.mxu0 0.0
          %2716 = vmatpush1.msra.mxu0 0.0
          %2717 = vmatprep.subr.mxu0 0.0
          %2718 = vmatpush1.msra.mxu0 0.0
          %2719 = vmatprep.subr.mxu0 0.0
          %2720 = vmatpush1.msra.mxu0 0.0
          %2721 = vmatprep.subr.mxu0 0.0
          %2722 = vmatpush1.msra.mxu0 0.0
          %2723 = vmatprep.subr.mxu0 0.0
          %2724 = vmatpush1.msra.mxu0 0.0
          %2725 = vmatprep.subr.mxu0 0.0
          %2726 = vmatpush1.msra.mxu0 0.0
          %2727 = vmatprep.subr.mxu0 0.0
          %2728 = vmatpush1.msra.mxu0 0.0
          %2729 = vmatprep.subr.mxu0 0.0
          %2730 = vmatpush1.msra.mxu0 0.0
          %2731 = vmatprep.subr.mxu0 0.0
          %2732 = vmatpush1.msra.mxu0 0.0
          %2733 = vmatprep.subr.mxu0 0.0
          %2734 = vmatpush1.msra.mxu0 0.0
          %2735 = vmatprep.subr.mxu0 0.0
          %2736 = vmatpush1.msra.mxu0 0.0
          %2737 = vmatprep.mubr.f32.mxu0 0.0
          %2738 = vmatmul.mubr.f32.gmra.mrb[0].mxu0 %v2076
          %v2739 = vpop.f32.mrb[0].mxu0
          %v2740 = vadd.f32 %v2661, %v2739
          %v2741 = vpop.f32.mrb[0].mxu0
          %v2742 = vadd.f32 %v2665, %v2741
          %2743 = vmatprep.mubr.f32.mxu0 0.0
          %2744 = vmatmul.mubr.f32.gmra.mrb[0].mxu0 %v2077
          %v2745 = vpop.f32.mrb[0].mxu0
          %v2746 = vadd.f32 %v2661, %v2745
          %v2747 = vpop.f32.mrb[0].mxu0
          %v2748 = vadd.f32 %v2665, %v2747
          %2749 = vmatprep.mubr.f32.mxu0 0.0
          %2750 = vmatmul.mubr.f32.gmra.mrb[0].mxu0 %v2078
          %v2751 = vpop.f32.mrb[0].mxu0
          %v2752 = vadd.f32 %v2661, %v2751
          %v2753 = vpop.f32.mrb[0].mxu0
          %v2754 = vadd.f32 %v2665, %v2753
          %2755 = vmatprep.mubr.f32.mxu0 0.0
          %2756 = vmatmul.mubr.f32.gmra.mrb[0].mxu0 %v2079
          %v2757 = vpop.f32.mrb[0].mxu0
          %v2758 = vadd.f32 %v2661, %v2757
          %v2759 = vpop.f32.mrb[0].mxu0
          %v2760 = vadd.f32 %v2665, %v2759
          %2761 = vmatprep.mubr.f32.mxu0 0.0
          %2762 = vmatmul.mubr.f32.gmra.mrb[0].mxu0 %v2080
          %v2763 = vpop.f32.mrb[0].mxu0
          %v2764 = vadd.f32 %v2661, %v2763
          %v2765 = vpop.f32.mrb[0].mxu0
          %v2766 = vadd.f32 %v2665, %v2765
          %2767 = vmatprep.mubr.f32.mxu0 0.0
          %2768 = vmatmul.mubr.f32.gmra.mrb[0].mxu0 %v2081
          %v2769 = vpop.f32.mrb[0].mxu0
          %v2770 = vadd.f32 %v2661, %v2769
          %v2771 = vpop.f32.mrb[0].mxu0
          %v2772 = vadd.f32 %v2665, %v2771
          %2773 = vmatprep.mubr.f32.mxu0 0.0
          %2774 = vmatmul.mubr.f32.gmra.mrb[0].mxu0 %v2082
          %v2775 = vpop.f32.mrb[0].mxu0
          %v2776 = vadd.f32 %v2661, %v2775
          %v2777 = vpop.f32.mrb[0].mxu0
          %v2778 = vadd.f32 %v2665, %v2777
          %2779 = vmatprep.mubr.f32.mxu0 0.0
          %2780 = vmatmul.mubr.f32.gmra.mrb[0].mxu0 %v2083
          %v2781 = vpop.f32.mrb[0].mxu0
          %v2782 = vadd.f32 %v2661, %v2781
          %v2783 = vpop.f32.mrb[0].mxu0
          %v2784 = vadd.f32 %v2665, %v2783
          %2785 = vmatprep.mubr.f32.mxu0 0.0
          %2786 = vmatmul.mubr.f32.gmra.mrb[0].mxu0 %v2084
          %v2787 = vpop.f32.mrb[0].mxu0
          %v2788 = vadd.f32 %v2661, %v2787
          %v2789 = vpop.f32.mrb[0].mxu0
          %v2790 = vadd.f32 %v2665, %v2789
          %2791 = vmatprep.mubr.f32.mxu0 0.0
          %2792 = vmatmul.mubr.f32.gmra.mrb[0].mxu0 %v2085
          %v2793 = vpop.f32.mrb[0].mxu0
          %v2794 = vadd.f32 %v2661, %v2793
          %v2795 = vpop.f32.mrb[0].mxu0
          %v2796 = vadd.f32 %v2665, %v2795
          %2797 = vmatprep.mubr.f32.mxu0 0.0
          %2798 = vmatmul.mubr.f32.gmra.mrb[0].mxu0 %v2086
          %v2799 = vpop.f32.mrb[0].mxu0
          %v2800 = vadd.f32 %v2661, %v2799
          %v2801 = vpop.f32.mrb[0].mxu0
          %v2802 = vadd.f32 %v2665, %v2801
          %2803 = vmatprep.mubr.f32.mxu0 0.0
          %2804 = vmatmul.mubr.f32.gmra.mrb[0].mxu0 %v2087
          %v2805 = vpop.f32.mrb[0].mxu0
          %v2806 = vadd.f32 %v2661, %v2805
          %v2807 = vpop.f32.mrb[0].mxu0
          %v2808 = vadd.f32 %v2665, %v2807
          %2809 = vmatprep.mubr.f32.mxu0 0.0
          %2810 = vmatmul.mubr.f32.gmra.mrb[0].mxu0 %v2088
          %v2811 = vpop.f32.mrb[0].mxu0
          %v2812 = vadd.f32 %v2661, %v2811
          %v2813 = vpop.f32.mrb[0].mxu0
          %v2814 = vadd.f32 %v2665, %v2813
          %2815 = vmatprep.mubr.f32.mxu0 0.0
          %2816 = vmatmul.mubr.f32.gmra.mrb[0].mxu0 %v2089
          %v2817 = vpop.f32.mrb[0].mxu0
          %v2818 = vadd.f32 %v2661, %v2817
          %v2819 = vpop.f32.mrb[0].mxu0
          %v2820 = vadd.f32 %v2665, %v2819
          %2821 = vmatprep.mubr.f32.mxu0 0.0
          %2822 = vmatmul.mubr.f32.gmra.mrb[0].mxu0 %v2090
          %v2823 = vpop.f32.mrb[0].mxu0
          %v2824 = vadd.f32 %v2661, %v2823
          %v2825 = vpop.f32.mrb[0].mxu0
          %v2826 = vadd.f32 %v2665, %v2825
          %2827 = vmatprep.mubr.f32.mxu0 0.0
          %2828 = vmatmul.mubr.f32.gmra.mrb[0].mxu0 %v2091
          %v2829 = vpop.f32.mrb[0].mxu0
          %v2830 = vadd.f32 %v2661, %v2829
          %v2831 = vpop.f32.mrb[0].mxu0
          %v2832 = vadd.f32 %v2665, %v2831
          %2833 = vdwg.mxu0
          %2834 = vmatprep.subr.mxu0 0.0
          %2835 = vmatpush1.msra.mxu0 %v2610
          %2836 = vmatprep.subr.mxu0 0.0
          %2837 = vmatpush1.msra.mxu0 %v2613
          %2838 = vmatprep.subr.mxu0 0.0
          %2839 = vmatpush1.msra.mxu0 %v2616
          %2840 = vmatprep.subr.mxu0 0.0
          %2841 = vmatpush1.msra.mxu0 %v2619
          %2842 = vmatprep.subr.mxu0 0.0
          %2843 = vmatpush1.msra.mxu0 %v2622
          %2844 = vmatprep.subr.mxu0 0.0
          %2845 = vmatpush1.msra.mxu0 %v2625
          %2846 = vmatprep.subr.mxu0 0.0
          %2847 = vmatpush1.msra.mxu0 %v2628
          %2848 = vmatprep.subr.mxu0 0.0
          %2849 = vmatpush1.msra.mxu0 %v2631
          %2850 = vmatprep.subr.mxu0 0.0
          %2851 = vmatpush1.msra.mxu0 %v2634
          %2852 = vmatprep.subr.mxu0 0.0
          %2853 = vmatpush1.msra.mxu0 %v2637
          %2854 = vmatprep.subr.mxu0 0.0
          %2855 = vmatpush1.msra.mxu0 %v2640
          %2856 = vmatprep.subr.mxu0 0.0
          %2857 = vmatpush1.msra.mxu0 %v2643
          %2858 = vmatprep.subr.mxu0 0.0
          %2859 = vmatpush1.msra.mxu0 %v2646
          %2860 = vmatprep.subr.mxu0 0.0
          %2861 = vmatpush1.msra.mxu0 %v2649
          %2862 = vmatprep.subr.mxu0 0.0
          %2863 = vmatpush1.msra.mxu0 %v2652
          %2864 = vmatprep.subr.mxu0 0.0
          %2865 = vmatpush1.msra.mxu0 %v2655
          %2866 = vmatprep.subr.mxu0 0.0
          %2867 = vmatpush1.msra.mxu0 0.0
          %2868 = vmatprep.subr.mxu0 0.0
          %2869 = vmatpush1.msra.mxu0 0.0
          %2870 = vmatprep.subr.mxu0 0.0
          %2871 = vmatpush1.msra.mxu0 0.0
          %2872 = vmatprep.subr.mxu0 0.0
          %2873 = vmatpush1.msra.mxu0 0.0
          %2874 = vmatprep.subr.mxu0 0.0
          %2875 = vmatpush1.msra.mxu0 0.0
          %2876 = vmatprep.subr.mxu0 0.0
          %2877 = vmatpush1.msra.mxu0 0.0
          %2878 = vmatprep.subr.mxu0 0.0
          %2879 = vmatpush1.msra.mxu0 0.0
          %2880 = vmatprep.subr.mxu0 0.0
          %2881 = vmatpush1.msra.mxu0 0.0
          %2882 = vmatprep.subr.mxu0 0.0
          %2883 = vmatpush1.msra.mxu0 0.0
          %2884 = vmatprep.subr.mxu0 0.0
          %2885 = vmatpush1.msra.mxu0 0.0
          %2886 = vmatprep.subr.mxu0 0.0
          %2887 = vmatpush1.msra.mxu0 0.0
          %2888 = vmatprep.subr.mxu0 0.0
          %2889 = vmatpush1.msra.mxu0 0.0
          %2890 = vmatprep.subr.mxu0 0.0
          %2891 = vmatpush1.msra.mxu0 0.0
          %2892 = vmatprep.subr.mxu0 0.0
          %2893 = vmatpush1.msra.mxu0 0.0
          %2894 = vmatprep.subr.mxu0 0.0
          %2895 = vmatpush1.msra.mxu0 0.0
          %2896 = vmatprep.subr.mxu0 0.0
          %2897 = vmatpush1.msra.mxu0 0.0
          %2898 = vmatprep.mubr.f32.mxu0 0.0
          %2899 = vmatmul.mubr.f32.gmra.mrb[0].mxu0 %v2076
          %v2900 = vpop.f32.mrb[0].mxu0
          %v2901 = vadd.f32 %v2669, %v2900
          %v2902 = vpop.f32.mrb[0].mxu0
          %2903 = vmatprep.mubr.f32.mxu0 0.0
          %2904 = vmatmul.mubr.f32.gmra.mrb[0].mxu0 %v2077
          %v2905 = vpop.f32.mrb[0].mxu0
          %v2906 = vadd.f32 %v2669, %v2905
          %v2907 = vpop.f32.mrb[0].mxu0
          %2908 = vmatprep.mubr.f32.mxu0 0.0
          %2909 = vmatmul.mubr.f32.gmra.mrb[0].mxu0 %v2078
          %v2910 = vpop.f32.mrb[0].mxu0
          %v2911 = vadd.f32 %v2669, %v2910
          %v2912 = vpop.f32.mrb[0].mxu0
          %2913 = vmatprep.mubr.f32.mxu0 0.0
          %2914 = vmatmul.mubr.f32.gmra.mrb[0].mxu0 %v2079
          %v2915 = vpop.f32.mrb[0].mxu0
          %v2916 = vadd.f32 %v2669, %v2915
          %v2917 = vpop.f32.mrb[0].mxu0
          %2918 = vmatprep.mubr.f32.mxu0 0.0
          %2919 = vmatmul.mubr.f32.gmra.mrb[0].mxu0 %v2080
          %v2920 = vpop.f32.mrb[0].mxu0
          %v2921 = vadd.f32 %v2669, %v2920
          %v2922 = vpop.f32.mrb[0].mxu0
          %2923 = vmatprep.mubr.f32.mxu0 0.0
          %2924 = vmatmul.mubr.f32.gmra.mrb[0].mxu0 %v2081
          %v2925 = vpop.f32.mrb[0].mxu0
          %v2926 = vadd.f32 %v2669, %v2925
          %v2927 = vpop.f32.mrb[0].mxu0
          %2928 = vmatprep.mubr.f32.mxu0 0.0
          %2929 = vmatmul.mubr.f32.gmra.mrb[0].mxu0 %v2082
          %v2930 = vpop.f32.mrb[0].mxu0
          %v2931 = vadd.f32 %v2669, %v2930
          %v2932 = vpop.f32.mrb[0].mxu0
          %2933 = vmatprep.mubr.f32.mxu0 0.0
          %2934 = vmatmul.mubr.f32.gmra.mrb[0].mxu0 %v2083
          %v2935 = vpop.f32.mrb[0].mxu0
          %v2936 = vadd.f32 %v2669, %v2935
          %v2937 = vpop.f32.mrb[0].mxu0
          %2938 = vmatprep.mubr.f32.mxu0 0.0
          %2939 = vmatmul.mubr.f32.gmra.mrb[0].mxu0 %v2084
          %v2940 = vpop.f32.mrb[0].mxu0
          %v2941 = vadd.f32 %v2669, %v2940
          %v2942 = vpop.f32.mrb[0].mxu0
          %2943 = vmatprep.mubr.f32.mxu0 0.0
          %2944 = vmatmul.mubr.f32.gmra.mrb[0].mxu0 %v2085
          %v2945 = vpop.f32.mrb[0].mxu0
          %v2946 = vadd.f32 %v2669, %v2945
          %v2947 = vpop.f32.mrb[0].mxu0
          %2948 = vmatprep.mubr.f32.mxu0 0.0
          %2949 = vmatmul.mubr.f32.gmra.mrb[0].mxu0 %v2086
          %v2950 = vpop.f32.mrb[0].mxu0
          %v2951 = vadd.f32 %v2669, %v2950
          %v2952 = vpop.f32.mrb[0].mxu0
          %2953 = vmatprep.mubr.f32.mxu0 0.0
          %2954 = vmatmul.mubr.f32.gmra.mrb[0].mxu0 %v2087
          %v2955 = vpop.f32.mrb[0].mxu0
          %v2956 = vadd.f32 %v2669, %v2955
          %v2957 = vpop.f32.mrb[0].mxu0
          %2958 = vmatprep.mubr.f32.mxu0 0.0
          %2959 = vmatmul.mubr.f32.gmra.mrb[0].mxu0 %v2088
          %v2960 = vpop.f32.mrb[0].mxu0
          %v2961 = vadd.f32 %v2669, %v2960
          %v2962 = vpop.f32.mrb[0].mxu0
          %2963 = vmatprep.mubr.f32.mxu0 0.0
          %2964 = vmatmul.mubr.f32.gmra.mrb[0].mxu0 %v2089
          %v2965 = vpop.f32.mrb[0].mxu0
          %v2966 = vadd.f32 %v2669, %v2965
          %v2967 = vpop.f32.mrb[0].mxu0
          %2968 = vmatprep.mubr.f32.mxu0 0.0
          %2969 = vmatmul.mubr.f32.gmra.mrb[0].mxu0 %v2090
          %v2970 = vpop.f32.mrb[0].mxu0
          %v2971 = vadd.f32 %v2669, %v2970
          %v2972 = vpop.f32.mrb[0].mxu0
          %2973 = vmatprep.mubr.f32.mxu0 0.0
          %2974 = vmatmul.mubr.f32.gmra.mrb[0].mxu0 %v2091
          %v2975 = vpop.f32.mrb[0].mxu0
          %v2976 = vadd.f32 %v2669, %v2975
          %v2977 = vpop.f32.mrb[0].mxu0
          %2978 = vdwg.mxu0
          %v2979 = vadd.f32 %v2369, %v2740
          %v2980 = vadd.f32 %v2375, %v2746
          %v2981 = vadd.f32 %v2381, %v2752
          %v2982 = vadd.f32 %v2387, %v2758
          %v2983 = vadd.f32 %v2393, %v2764
          %v2984 = vadd.f32 %v2399, %v2770
          %v2985 = vadd.f32 %v2405, %v2776
          %v2986 = vadd.f32 %v2411, %v2782
          %v2987 = vadd.f32 %v2417, %v2788
          %v2988 = vadd.f32 %v2423, %v2794
          %v2989 = vadd.f32 %v2429, %v2800
          %v2990 = vadd.f32 %v2435, %v2806
          %v2991 = vadd.f32 %v2441, %v2812
          %v2992 = vadd.f32 %v2447, %v2818
          %v2993 = vadd.f32 %v2453, %v2824
          %v2994 = vadd.f32 %v2459, %v2830
          %v2995 = vxor.u32 %v2979, 2147483648
          %v2996 = vxor.u32 %v2980, 2147483648
          %v2997 = vxor.u32 %v2981, 2147483648
          %v2998 = vxor.u32 %v2982, 2147483648
          %v2999 = vxor.u32 %v2983, 2147483648
          %v3000 = vxor.u32 %v2984, 2147483648
          %v3001 = vxor.u32 %v2985, 2147483648
          %v3002 = vxor.u32 %v2986, 2147483648
          %v3003 = vxor.u32 %v2987, 2147483648
          %v3004 = vxor.u32 %v2988, 2147483648
          %v3005 = vxor.u32 %v2989, 2147483648
          %v3006 = vxor.u32 %v2990, 2147483648
          %v3007 = vxor.u32 %v2991, 2147483648
          %v3008 = vxor.u32 %v2992, 2147483648
          %v3009 = vxor.u32 %v2993, 2147483648
          %v3010 = vxor.u32 %v2994, 2147483648
          %v3011 = vmul.f32 %v2995, 1.442695
          %v3012 = vpow.pop %v3011
          %v3013 = vmul.f32 %v2996, 1.442695
          %v3014 = vpow.pop %v3013
          %v3015 = vmul.f32 %v2997, 1.442695
          %v3016 = vpow.pop %v3015
          %v3017 = vmul.f32 %v2998, 1.442695
          %v3018 = vpow.pop %v3017
          %v3019 = vmul.f32 %v2999, 1.442695
          %v3020 = vpow.pop %v3019
          %v3021 = vmul.f32 %v3000, 1.442695
          %v3022 = vpow.pop %v3021
          %v3023 = vmul.f32 %v3001, 1.442695
          %v3024 = vpow.pop %v3023
          %v3025 = vmul.f32 %v3002, 1.442695
          %v3026 = vpow.pop %v3025
          %v3027 = vmul.f32 %v3003, 1.442695
          %v3028 = vpow.pop %v3027
          %v3029 = vmul.f32 %v3004, 1.442695
          %v3030 = vpow.pop %v3029
          %v3031 = vmul.f32 %v3005, 1.442695
          %v3032 = vpow.pop %v3031
          %v3033 = vmul.f32 %v3006, 1.442695
          %v3034 = vpow.pop %v3033
          %v3035 = vmul.f32 %v3007, 1.442695
          %v3036 = vpow.pop %v3035
          %v3037 = vmul.f32 %v3008, 1.442695
          %v3038 = vpow.pop %v3037
          %v3039 = vmul.f32 %v3009, 1.442695
          %v3040 = vpow.pop %v3039
          %v3041 = vmul.f32 %v3010, 1.442695
          %v3042 = vpow.pop %v3041
          %v3043 = vadd.f32 %v3012, 1.0
          %v3044 = vadd.f32 %v3014, 1.0
          %v3045 = vadd.f32 %v3016, 1.0
          %v3046 = vadd.f32 %v3018, 1.0
          %v3047 = vadd.f32 %v3020, 1.0
          %v3048 = vadd.f32 %v3022, 1.0
          %v3049 = vadd.f32 %v3024, 1.0
          %v3050 = vadd.f32 %v3026, 1.0
          %v3051 = vadd.f32 %v3028, 1.0
          %v3052 = vadd.f32 %v3030, 1.0
          %v3053 = vadd.f32 %v3032, 1.0
          %v3054 = vadd.f32 %v3034, 1.0
          %v3055 = vadd.f32 %v3036, 1.0
          %v3056 = vadd.f32 %v3038, 1.0
          %v3057 = vadd.f32 %v3040, 1.0
          %v3058 = vadd.f32 %v3042, 1.0
          %v3059 = vrcp.pop %v3043
          %v3060 = vmul.f32 1.0, %v3059
          %v3061 = vrcp.pop %v3044
          %v3062 = vmul.f32 1.0, %v3061
          %v3063 = vrcp.pop %v3045
          %v3064 = vmul.f32 1.0, %v3063
          %v3065 = vrcp.pop %v3046
          %v3066 = vmul.f32 1.0, %v3065
          %v3067 = vrcp.pop %v3047
          %v3068 = vmul.f32 1.0, %v3067
          %v3069 = vrcp.pop %v3048
          %v3070 = vmul.f32 1.0, %v3069
          %v3071 = vrcp.pop %v3049
          %v3072 = vmul.f32 1.0, %v3071
          %v3073 = vrcp.pop %v3050
          %v3074 = vmul.f32 1.0, %v3073
          %v3075 = vrcp.pop %v3051
          %v3076 = vmul.f32 1.0, %v3075
          %v3077 = vrcp.pop %v3052
          %v3078 = vmul.f32 1.0, %v3077
          %v3079 = vrcp.pop %v3053
          %v3080 = vmul.f32 1.0, %v3079
          %v3081 = vrcp.pop %v3054
          %v3082 = vmul.f32 1.0, %v3081
          %v3083 = vrcp.pop %v3055
          %v3084 = vmul.f32 1.0, %v3083
          %v3085 = vrcp.pop %v3056
          %v3086 = vmul.f32 1.0, %v3085
          %v3087 = vrcp.pop %v3057
          %v3088 = vmul.f32 1.0, %v3087
          %v3089 = vrcp.pop %v3058
          %v3090 = vmul.f32 1.0, %v3089
          %v3091 = vadd.f32 %v2371, %v2742
          %v3092 = vadd.f32 %v2377, %v2748
          %v3093 = vadd.f32 %v2383, %v2754
          %v3094 = vadd.f32 %v2389, %v2760
          %v3095 = vadd.f32 %v2395, %v2766
          %v3096 = vadd.f32 %v2401, %v2772
          %v3097 = vadd.f32 %v2407, %v2778
          %v3098 = vadd.f32 %v2413, %v2784
          %v3099 = vadd.f32 %v2419, %v2790
          %v3100 = vadd.f32 %v2425, %v2796
          %v3101 = vadd.f32 %v2431, %v2802
          %v3102 = vadd.f32 %v2437, %v2808
          %v3103 = vadd.f32 %v2443, %v2814
          %v3104 = vadd.f32 %v2449, %v2820
          %v3105 = vadd.f32 %v2455, %v2826
          %v3106 = vadd.f32 %v2461, %v2832
          %v3107 = vxor.u32 %v3091, 2147483648
          %v3108 = vxor.u32 %v3092, 2147483648
          %v3109 = vxor.u32 %v3093, 2147483648
          %v3110 = vxor.u32 %v3094, 2147483648
          %v3111 = vxor.u32 %v3095, 2147483648
          %v3112 = vxor.u32 %v3096, 2147483648
          %v3113 = vxor.u32 %v3097, 2147483648
          %v3114 = vxor.u32 %v3098, 2147483648
          %v3115 = vxor.u32 %v3099, 2147483648
          %v3116 = vxor.u32 %v3100, 2147483648
          %v3117 = vxor.u32 %v3101, 2147483648
          %v3118 = vxor.u32 %v3102, 2147483648
          %v3119 = vxor.u32 %v3103, 2147483648
          %v3120 = vxor.u32 %v3104, 2147483648
          %v3121 = vxor.u32 %v3105, 2147483648
          %v3122 = vxor.u32 %v3106, 2147483648
          %v3123 = vmul.f32 %v3107, 1.442695
          %v3124 = vpow.pop %v3123
          %v3125 = vmul.f32 %v3108, 1.442695
          %v3126 = vpow.pop %v3125
          %v3127 = vmul.f32 %v3109, 1.442695
          %v3128 = vpow.pop %v3127
          %v3129 = vmul.f32 %v3110, 1.442695
          %v3130 = vpow.pop %v3129
          %v3131 = vmul.f32 %v3111, 1.442695
          %v3132 = vpow.pop %v3131
          %v3133 = vmul.f32 %v3112, 1.442695
          %v3134 = vpow.pop %v3133
          %v3135 = vmul.f32 %v3113, 1.442695
          %v3136 = vpow.pop %v3135
          %v3137 = vmul.f32 %v3114, 1.442695
          %v3138 = vpow.pop %v3137
          %v3139 = vmul.f32 %v3115, 1.442695
          %v3140 = vpow.pop %v3139
          %v3141 = vmul.f32 %v3116, 1.442695
          %v3142 = vpow.pop %v3141
          %v3143 = vmul.f32 %v3117, 1.442695
          %v3144 = vpow.pop %v3143
          %v3145 = vmul.f32 %v3118, 1.442695
          %v3146 = vpow.pop %v3145
          %v3147 = vmul.f32 %v3119, 1.442695
          %v3148 = vpow.pop %v3147
          %v3149 = vmul.f32 %v3120, 1.442695
          %v3150 = vpow.pop %v3149
          %v3151 = vmul.f32 %v3121, 1.442695
          %v3152 = vpow.pop %v3151
          %v3153 = vmul.f32 %v3122, 1.442695
          %v3154 = vpow.pop %v3153
          %v3155 = vadd.f32 %v3124, 1.0
          %v3156 = vadd.f32 %v3126, 1.0
          %v3157 = vadd.f32 %v3128, 1.0
          %v3158 = vadd.f32 %v3130, 1.0
          %v3159 = vadd.f32 %v3132, 1.0
          %v3160 = vadd.f32 %v3134, 1.0
          %v3161 = vadd.f32 %v3136, 1.0
          %v3162 = vadd.f32 %v3138, 1.0
          %v3163 = vadd.f32 %v3140, 1.0
          %v3164 = vadd.f32 %v3142, 1.0
          %v3165 = vadd.f32 %v3144, 1.0
          %v3166 = vadd.f32 %v3146, 1.0
          %v3167 = vadd.f32 %v3148, 1.0
          %v3168 = vadd.f32 %v3150, 1.0
          %v3169 = vadd.f32 %v3152, 1.0
          %v3170 = vadd.f32 %v3154, 1.0
          %v3171 = vrcp.pop %v3155
          %v3172 = vmul.f32 1.0, %v3171
          %v3173 = vrcp.pop %v3156
          %v3174 = vmul.f32 1.0, %v3173
          %v3175 = vrcp.pop %v3157
          %v3176 = vmul.f32 1.0, %v3175
          %v3177 = vrcp.pop %v3158
          %v3178 = vmul.f32 1.0, %v3177
          %v3179 = vrcp.pop %v3159
          %v3180 = vmul.f32 1.0, %v3179
          %v3181 = vrcp.pop %v3160
          %v3182 = vmul.f32 1.0, %v3181
          %v3183 = vrcp.pop %v3161
          %v3184 = vmul.f32 1.0, %v3183
          %v3185 = vrcp.pop %v3162
          %v3186 = vmul.f32 1.0, %v3185
          %v3187 = vrcp.pop %v3163
          %v3188 = vmul.f32 1.0, %v3187
          %v3189 = vrcp.pop %v3164
          %v3190 = vmul.f32 1.0, %v3189
          %v3191 = vrcp.pop %v3165
          %v3192 = vmul.f32 1.0, %v3191
          %v3193 = vrcp.pop %v3166
          %v3194 = vmul.f32 1.0, %v3193
          %v3195 = vrcp.pop %v3167
          %v3196 = vmul.f32 1.0, %v3195
          %v3197 = vrcp.pop %v3168
          %v3198 = vmul.f32 1.0, %v3197
          %v3199 = vrcp.pop %v3169
          %v3200 = vmul.f32 1.0, %v3199
          %v3201 = vrcp.pop %v3170
          %v3202 = vmul.f32 1.0, %v3201
          %v3203 = vmul.f32 %v3060, %v2901
          %v3204 = vmul.f32 %v3062, %v2906
          %v3205 = vmul.f32 %v3064, %v2911
          %v3206 = vmul.f32 %v3066, %v2916
          %v3207 = vmul.f32 %v3068, %v2921
          %v3208 = vmul.f32 %v3070, %v2926
          %v3209 = vmul.f32 %v3072, %v2931
          %v3210 = vmul.f32 %v3074, %v2936
          %v3211 = vmul.f32 %v3076, %v2941
          %v3212 = vmul.f32 %v3078, %v2946
          %v3213 = vmul.f32 %v3080, %v2951
          %v3214 = vmul.f32 %v3082, %v2956
          %v3215 = vmul.f32 %v3084, %v2961
          %v3216 = vmul.f32 %v3086, %v2966
          %v3217 = vmul.f32 %v3088, %v2971
          %v3218 = vmul.f32 %v3090, %v2976
          %v3219 = vadd.f32 %v2530, %v3203
          %v3220 = vadd.f32 %v2535, %v3204
          %v3221 = vadd.f32 %v2540, %v3205
          %v3222 = vadd.f32 %v2545, %v3206
          %v3223 = vadd.f32 %v2550, %v3207
          %v3224 = vadd.f32 %v2555, %v3208
          %v3225 = vadd.f32 %v2560, %v3209
          %v3226 = vadd.f32 %v2565, %v3210
          %v3227 = vadd.f32 %v2570, %v3211
          %v3228 = vadd.f32 %v2575, %v3212
          %v3229 = vadd.f32 %v2580, %v3213
          %v3230 = vadd.f32 %v2585, %v3214
          %v3231 = vadd.f32 %v2590, %v3215
          %v3232 = vadd.f32 %v2595, %v3216
          %v3233 = vadd.f32 %v2600, %v3217
          %v3234 = vadd.f32 %v2605, %v3218
          %v3235 = vtanh.pop %v3219
          %v3236 = vtanh.pop %v3220
          %v3237 = vtanh.pop %v3221
          %v3238 = vtanh.pop %v3222
          %v3239 = vtanh.pop %v3223
          %v3240 = vtanh.pop %v3224
          %v3241 = vtanh.pop %v3225
          %v3242 = vtanh.pop %v3226
          %v3243 = vtanh.pop %v3227
          %v3244 = vtanh.pop %v3228
          %v3245 = vtanh.pop %v3229
          %v3246 = vtanh.pop %v3230
          %v3247 = vtanh.pop %v3231
          %v3248 = vtanh.pop %v3232
          %v3249 = vtanh.pop %v3233
          %v3250 = vtanh.pop %v3234
          %v3251 = vsub.f32 1.0, %v3172
          %v3252 = vsub.f32 1.0, %v3174
          %v3253 = vsub.f32 1.0, %v3176
          %v3254 = vsub.f32 1.0, %v3178
          %v3255 = vsub.f32 1.0, %v3180
          %v3256 = vsub.f32 1.0, %v3182
          %v3257 = vsub.f32 1.0, %v3184
          %v3258 = vsub.f32 1.0, %v3186
          %v3259 = vsub.f32 1.0, %v3188
          %v3260 = vsub.f32 1.0, %v3190
          %v3261 = vsub.f32 1.0, %v3192
          %v3262 = vsub.f32 1.0, %v3194
          %v3263 = vsub.f32 1.0, %v3196
          %v3264 = vsub.f32 1.0, %v3198
          %v3265 = vsub.f32 1.0, %v3200
          %v3266 = vsub.f32 1.0, %v3202
          %v3267 = vmul.f32 %v3251, %v3235
          %v3268 = vmul.f32 %v3252, %v3236
          %v3269 = vmul.f32 %v3253, %v3237
          %v3270 = vmul.f32 %v3254, %v3238
          %v3271 = vmul.f32 %v3255, %v3239
          %v3272 = vmul.f32 %v3256, %v3240
          %v3273 = vmul.f32 %v3257, %v3241
          %v3274 = vmul.f32 %v3258, %v3242
          %v3275 = vmul.f32 %v3259, %v3243
          %v3276 = vmul.f32 %v3260, %v3244
          %v3277 = vmul.f32 %v3261, %v3245
          %v3278 = vmul.f32 %v3262, %v3246
          %v3279 = vmul.f32 %v3263, %v3247
          %v3280 = vmul.f32 %v3264, %v3248
          %v3281 = vmul.f32 %v3265, %v3249
          %v3282 = vmul.f32 %v3266, %v3250
          %v3283 = vmul.f32 %v3172, %v2076
          %v3284 = vmul.f32 %v3174, %v2077
          %v3285 = vmul.f32 %v3176, %v2078
          %v3286 = vmul.f32 %v3178, %v2079
          %v3287 = vmul.f32 %v3180, %v2080
          %v3288 = vmul.f32 %v3182, %v2081
          %v3289 = vmul.f32 %v3184, %v2082
          %v3290 = vmul.f32 %v3186, %v2083
          %v3291 = vmul.f32 %v3188, %v2084
          %v3292 = vmul.f32 %v3190, %v2085
          %v3293 = vmul.f32 %v3192, %v2086
          %v3294 = vmul.f32 %v3194, %v2087
          %v3295 = vmul.f32 %v3196, %v2088
          %v3296 = vmul.f32 %v3198, %v2089
          %v3297 = vmul.f32 %v3200, %v2090
          %v3298 = vmul.f32 %v3202, %v2091
          %v3299 = vadd.f32 %v3267, %v3283
          %v3300 = vadd.f32 %v3268, %v3284
          %v3301 = vadd.f32 %v3269, %v3285
          %v3302 = vadd.f32 %v3270, %v3286
          %v3303 = vadd.f32 %v3271, %v3287
          %v3304 = vadd.f32 %v3272, %v3288
          %v3305 = vadd.f32 %v3273, %v3289
          %v3306 = vadd.f32 %v3274, %v3290
          %v3307 = vadd.f32 %v3275, %v3291
          %v3308 = vadd.f32 %v3276, %v3292
          %v3309 = vadd.f32 %v3277, %v3293
          %v3310 = vadd.f32 %v3278, %v3294
          %v3311 = vadd.f32 %v3279, %v3295
          %v3312 = vadd.f32 %v3280, %v3296
          %v3313 = vadd.f32 %v3281, %v3297
          %v3314 = vadd.f32 %v3282, %v3298
          %s3315 = scalar_lea.vmem [#allocation2], %s356
          %3316 = vst [vmem:[%s3315] sm:$0xff] %v3299
          %3317 = vst [vmem:[%s3315 + $0x8] sm:$0xff] %v3300
          %3318 = vst [vmem:[%s3315 + $0x10] sm:$0xff] %v3301
          %3319 = vst [vmem:[%s3315 + $0x18] sm:$0xff] %v3302
          %3320 = vst [vmem:[%s3315 + $0x20] sm:$0xff] %v3303
          %3321 = vst [vmem:[%s3315 + $0x28] sm:$0xff] %v3304
          %3322 = vst [vmem:[%s3315 + $0x30] sm:$0xff] %v3305
          %3323 = vst [vmem:[%s3315 + $0x38] sm:$0xff] %v3306
          %3324 = vst [vmem:[%s3315 + $0x40] sm:$0xff] %v3307
          %3325 = vst [vmem:[%s3315 + $0x48] sm:$0xff] %v3308
          %3326 = vst [vmem:[%s3315 + $0x50] sm:$0xff] %v3309
          %3327 = vst [vmem:[%s3315 + $0x58] sm:$0xff] %v3310
          %3328 = vst [vmem:[%s3315 + $0x60] sm:$0xff] %v3311
          %3329 = vst [vmem:[%s3315 + $0x68] sm:$0xff] %v3312
          %3330 = vst [vmem:[%s3315 + $0x70] sm:$0xff] %v3313
          %3331 = vst [vmem:[%s3315 + $0x78] sm:$0xff] %v3314
          %p3332 = scmp.eq.s32.totalorder %s30, 2
          // Predicated region
          $region81: #{tpu_custom_call.1} parent=79 // pred_check
            %p3333 = pneg %p3332
          $region82: #{tpu_custom_call.1} parent=79 // pred_check_branch
            %3335 = sbr.rel (%p3333) target = $region84
          $region83: #{tpu_custom_call.1} parent=79 // pred_region
            %v3336 = vld [vmem:[#allocation10] sm:$0xff]
            %v3337 = vld [vmem:[#allocation10 + $0x8] sm:$0xff]
            %v3338 = vld [vmem:[#allocation10 + $0x10] sm:$0xff]
            %v3339 = vld [vmem:[#allocation10 + $0x18] sm:$0xff]
            %v3340 = vld [vmem:[#allocation10 + $0x20] sm:$0xff]
            %v3341 = vld [vmem:[#allocation10 + $0x28] sm:$0xff]
            %v3342 = vld [vmem:[#allocation10 + $0x30] sm:$0xff]
            %v3343 = vld [vmem:[#allocation10 + $0x38] sm:$0xff]
            %v3344 = vld [vmem:[#allocation10 + $0x40] sm:$0xff]
            %v3345 = vld [vmem:[#allocation10 + $0x48] sm:$0xff]
            %v3346 = vld [vmem:[#allocation10 + $0x50] sm:$0xff]
            %v3347 = vld [vmem:[#allocation10 + $0x58] sm:$0xff]
            %v3348 = vld [vmem:[#allocation10 + $0x60] sm:$0xff]
            %v3349 = vld [vmem:[#allocation10 + $0x68] sm:$0xff]
            %v3350 = vld [vmem:[#allocation10 + $0x70] sm:$0xff]
            %v3351 = vld [vmem:[#allocation10 + $0x78] sm:$0xff]
            %v3352 = vld [vmem:[%s7] sm:$0x1]
            %v3354 = vlaneseq
            %v3355 = vshrl.u32 %v3354, 7
            %v3356 = vsub.s32 0, %v3355
            %v3357 = vrot.slane %v3352, %v3356
            %3359 = vmatprep.subr.mxu0 0.0
            %3360 = vmatpush1.msra.mxu0 %v3336
            %3361 = vmatprep.subr.mxu0 0.0
            %3362 = vmatpush1.msra.mxu0 %v3337
            %3363 = vmatprep.subr.mxu0 0.0
            %3364 = vmatpush1.msra.mxu0 %v3338
            %3365 = vmatprep.subr.mxu0 0.0
            %3366 = vmatpush1.msra.mxu0 %v3339
            %3367 = vmatprep.subr.mxu0 0.0
            %3368 = vmatpush1.msra.mxu0 %v3340
            %3369 = vmatprep.subr.mxu0 0.0
            %3370 = vmatpush1.msra.mxu0 %v3341
            %3371 = vmatprep.subr.mxu0 0.0
            %3372 = vmatpush1.msra.mxu0 %v3342
            %3373 = vmatprep.subr.mxu0 0.0
            %3374 = vmatpush1.msra.mxu0 %v3343
            %3375 = vmatprep.subr.mxu0 0.0
            %3376 = vmatpush1.msra.mxu0 %v3344
            %3377 = vmatprep.subr.mxu0 0.0
            %3378 = vmatpush1.msra.mxu0 %v3345
            %3379 = vmatprep.subr.mxu0 0.0
            %3380 = vmatpush1.msra.mxu0 %v3346
            %3381 = vmatprep.subr.mxu0 0.0
            %3382 = vmatpush1.msra.mxu0 %v3347
            %3383 = vmatprep.subr.mxu0 0.0
            %3384 = vmatpush1.msra.mxu0 %v3348
            %3385 = vmatprep.subr.mxu0 0.0
            %3386 = vmatpush1.msra.mxu0 %v3349
            %3387 = vmatprep.subr.mxu0 0.0
            %3388 = vmatpush1.msra.mxu0 %v3350
            %3389 = vmatprep.subr.mxu0 0.0
            %3390 = vmatpush1.msra.mxu0 %v3351
            %3391 = vmatprep.subr.mxu0 0.0
            %3392 = vmatpush1.msra.mxu0 0.0
            %3393 = vmatprep.subr.mxu0 0.0
            %3394 = vmatpush1.msra.mxu0 0.0
            %3395 = vmatprep.subr.mxu0 0.0
            %3396 = vmatpush1.msra.mxu0 0.0
            %3397 = vmatprep.subr.mxu0 0.0
            %3398 = vmatpush1.msra.mxu0 0.0
            %3399 = vmatprep.subr.mxu0 0.0
            %3400 = vmatpush1.msra.mxu0 0.0
            %3401 = vmatprep.subr.mxu0 0.0
            %3402 = vmatpush1.msra.mxu0 0.0
            %3403 = vmatprep.subr.mxu0 0.0
            %3404 = vmatpush1.msra.mxu0 0.0
            %3405 = vmatprep.subr.mxu0 0.0
            %3406 = vmatpush1.msra.mxu0 0.0
            %3407 = vmatprep.subr.mxu0 0.0
            %3408 = vmatpush1.msra.mxu0 0.0
            %3409 = vmatprep.subr.mxu0 0.0
            %3410 = vmatpush1.msra.mxu0 0.0
            %3411 = vmatprep.subr.mxu0 0.0
            %3412 = vmatpush1.msra.mxu0 0.0
            %3413 = vmatprep.subr.mxu0 0.0
            %3414 = vmatpush1.msra.mxu0 0.0
            %3415 = vmatprep.subr.mxu0 0.0
            %3416 = vmatpush1.msra.mxu0 0.0
            %3417 = vmatprep.subr.mxu0 0.0
            %3418 = vmatpush1.msra.mxu0 0.0
            %3419 = vmatprep.subr.mxu0 0.0
            %3420 = vmatpush1.msra.mxu0 0.0
            %3421 = vmatprep.subr.mxu0 0.0
            %3422 = vmatpush1.msra.mxu0 0.0
            %3423 = vmatprep.mubr.f32.mxu0 0.0
            %3424 = vmatmul.mubr.f32.gmra.mrb[0].mxu0 %v3299
            %v3425 = vpop.f32.mrb[0].mxu0
            %v3426 = vadd.f32 %v3357, %v3425
            %v3427 = vpop.f32.mrb[0].mxu0
            %3428 = vmatprep.mubr.f32.mxu0 0.0
            %3429 = vmatmul.mubr.f32.gmra.mrb[0].mxu0 %v3300
            %v3430 = vpop.f32.mrb[0].mxu0
            %v3431 = vadd.f32 %v3357, %v3430
            %v3432 = vpop.f32.mrb[0].mxu0
            %3433 = vmatprep.mubr.f32.mxu0 0.0
            %3434 = vmatmul.mubr.f32.gmra.mrb[0].mxu0 %v3301
            %v3435 = vpop.f32.mrb[0].mxu0
            %v3436 = vadd.f32 %v3357, %v3435
            %v3437 = vpop.f32.mrb[0].mxu0
            %3438 = vmatprep.mubr.f32.mxu0 0.0
            %3439 = vmatmul.mubr.f32.gmra.mrb[0].mxu0 %v3302
            %v3440 = vpop.f32.mrb[0].mxu0
            %v3441 = vadd.f32 %v3357, %v3440
            %v3442 = vpop.f32.mrb[0].mxu0
            %3443 = vmatprep.mubr.f32.mxu0 0.0
            %3444 = vmatmul.mubr.f32.gmra.mrb[0].mxu0 %v3303
            %v3445 = vpop.f32.mrb[0].mxu0
            %v3446 = vadd.f32 %v3357, %v3445
            %v3447 = vpop.f32.mrb[0].mxu0
            %3448 = vmatprep.mubr.f32.mxu0 0.0
            %3449 = vmatmul.mubr.f32.gmra.mrb[0].mxu0 %v3304
            %v3450 = vpop.f32.mrb[0].mxu0
            %v3451 = vadd.f32 %v3357, %v3450
            %v3452 = vpop.f32.mrb[0].mxu0
            %3453 = vmatprep.mubr.f32.mxu0 0.0
            %3454 = vmatmul.mubr.f32.gmra.mrb[0].mxu0 %v3305
            %v3455 = vpop.f32.mrb[0].mxu0
            %v3456 = vadd.f32 %v3357, %v3455
            %v3457 = vpop.f32.mrb[0].mxu0
            %3458 = vmatprep.mubr.f32.mxu0 0.0
            %3459 = vmatmul.mubr.f32.gmra.mrb[0].mxu0 %v3306
            %v3460 = vpop.f32.mrb[0].mxu0
            %v3461 = vadd.f32 %v3357, %v3460
            %v3462 = vpop.f32.mrb[0].mxu0
            %3463 = vmatprep.mubr.f32.mxu0 0.0
            %3464 = vmatmul.mubr.f32.gmra.mrb[0].mxu0 %v3307
            %v3465 = vpop.f32.mrb[0].mxu0
            %v3466 = vadd.f32 %v3357, %v3465
            %v3467 = vpop.f32.mrb[0].mxu0
            %3468 = vmatprep.mubr.f32.mxu0 0.0
            %3469 = vmatmul.mubr.f32.gmra.mrb[0].mxu0 %v3308
            %v3470 = vpop.f32.mrb[0].mxu0
            %v3471 = vadd.f32 %v3357, %v3470
            %v3472 = vpop.f32.mrb[0].mxu0
            %3473 = vmatprep.mubr.f32.mxu0 0.0
            %3474 = vmatmul.mubr.f32.gmra.mrb[0].mxu0 %v3309
            %v3475 = vpop.f32.mrb[0].mxu0
            %v3476 = vadd.f32 %v3357, %v3475
            %v3477 = vpop.f32.mrb[0].mxu0
            %3478 = vmatprep.mubr.f32.mxu0 0.0
            %3479 = vmatmul.mubr.f32.gmra.mrb[0].mxu0 %v3310
            %v3480 = vpop.f32.mrb[0].mxu0
            %v3481 = vadd.f32 %v3357, %v3480
            %v3482 = vpop.f32.mrb[0].mxu0
            %3483 = vmatprep.mubr.f32.mxu0 0.0
            %3484 = vmatmul.mubr.f32.gmra.mrb[0].mxu0 %v3311
            %v3485 = vpop.f32.mrb[0].mxu0
            %v3486 = vadd.f32 %v3357, %v3485
            %v3487 = vpop.f32.mrb[0].mxu0
            %3488 = vmatprep.mubr.f32.mxu0 0.0
            %3489 = vmatmul.mubr.f32.gmra.mrb[0].mxu0 %v3312
            %v3490 = vpop.f32.mrb[0].mxu0
            %v3491 = vadd.f32 %v3357, %v3490
            %v3492 = vpop.f32.mrb[0].mxu0
            %3493 = vmatprep.mubr.f32.mxu0 0.0
            %3494 = vmatmul.mubr.f32.gmra.mrb[0].mxu0 %v3313
            %v3495 = vpop.f32.mrb[0].mxu0
            %v3496 = vadd.f32 %v3357, %v3495
            %v3497 = vpop.f32.mrb[0].mxu0
            %3498 = vmatprep.mubr.f32.mxu0 0.0
            %3499 = vmatmul.mubr.f32.gmra.mrb[0].mxu0 %v3314
            %v3500 = vpop.f32.mrb[0].mxu0
            %v3501 = vadd.f32 %v3357, %v3500
            %v3502 = vpop.f32.mrb[0].mxu0
            %3503 = vdwg.mxu0
            %v3504 = vmax.f32 %v3426, 0.01
            %v3505 = vmax.f32 %v3431, 0.01
            %v3506 = vmax.f32 %v3436, 0.01
            %v3507 = vmax.f32 %v3441, 0.01
            %v3508 = vmax.f32 %v3446, 0.01
            %v3509 = vmax.f32 %v3451, 0.01
            %v3510 = vmax.f32 %v3456, 0.01
            %v3511 = vmax.f32 %v3461, 0.01
            %v3512 = vmax.f32 %v3466, 0.01
            %v3513 = vmax.f32 %v3471, 0.01
            %v3514 = vmax.f32 %v3476, 0.01
            %v3515 = vmax.f32 %v3481, 0.01
            %v3516 = vmax.f32 %v3486, 0.01
            %v3517 = vmax.f32 %v3491, 0.01
            %v3518 = vmax.f32 %v3496, 0.01
            %v3519 = vmax.f32 %v3501, 0.01
            %v3520 = vmin.f32 %v3504, 1.0
            %v3521 = vmin.f32 %v3505, 1.0
            %v3522 = vmin.f32 %v3506, 1.0
            %v3523 = vmin.f32 %v3507, 1.0
            %v3524 = vmin.f32 %v3508, 1.0
            %v3525 = vmin.f32 %v3509, 1.0
            %v3526 = vmin.f32 %v3510, 1.0
            %v3527 = vmin.f32 %v3511, 1.0
            %v3528 = vmin.f32 %v3512, 1.0
            %v3529 = vmin.f32 %v3513, 1.0
            %v3530 = vmin.f32 %v3514, 1.0
            %v3531 = vmin.f32 %v3515, 1.0
            %v3532 = vmin.f32 %v3516, 1.0
            %v3533 = vmin.f32 %v3517, 1.0
            %v3534 = vmin.f32 %v3518, 1.0
            %v3535 = vmin.f32 %v3519, 1.0
            %3536 = vst [vmem:[%s316] sm:$0xff] %v3520
            %3537 = vst [vmem:[%s316 + $0x8] sm:$0xff] %v3521
            %3538 = vst [vmem:[%s316 + $0x10] sm:$0xff] %v3522
            %3539 = vst [vmem:[%s316 + $0x18] sm:$0xff] %v3523
            %3540 = vst [vmem:[%s316 + $0x20] sm:$0xff] %v3524
            %3541 = vst [vmem:[%s316 + $0x28] sm:$0xff] %v3525
            %3542 = vst [vmem:[%s316 + $0x30] sm:$0xff] %v3526
            %3543 = vst [vmem:[%s316 + $0x38] sm:$0xff] %v3527
            %3544 = vst [vmem:[%s316 + $0x40] sm:$0xff] %v3528
            %3545 = vst [vmem:[%s316 + $0x48] sm:$0xff] %v3529
            %3546 = vst [vmem:[%s316 + $0x50] sm:$0xff] %v3530
            %3547 = vst [vmem:[%s316 + $0x58] sm:$0xff] %v3531
            %3548 = vst [vmem:[%s316 + $0x60] sm:$0xff] %v3532
            %3549 = vst [vmem:[%s316 + $0x68] sm:$0xff] %v3533
            %3550 = vst [vmem:[%s316 + $0x70] sm:$0xff] %v3534
            %3551 = vst [vmem:[%s316 + $0x78] sm:$0xff] %v3535
          $region84: #{tpu_custom_call.1} parent=79 // pred_fallthru
            _
        $region80: #{tpu_custom_call.1} parent=43 // pred_fallthru
          _
        %s3552 = sand.u32 %s181, 1
        %s3553 = scalar_lea.sflag [#allocation7], %s3552
        %s3554 = sand.u32 %s181, 1
        %s3555 = smul.addr %s3554, 128
        %s3556 = scalar_lea.vmem [#allocation11], %s3555
        // Predicated region
        $region85: #{tpu_custom_call.1} parent=43 // pred_check
          %p3557 = pneg %p191
        $region86: #{tpu_custom_call.1} parent=43 // pred_check_branch
          %3559 = sbr.rel (%p3557) target = $region88
        $region87: #{tpu_custom_call.1} parent=43 // pred_region
          %p3560 = scmp.eq.s32.totalorder %s30, 2
          %s3561 = scalar_select %p3560, %s31, 0
          %s3562 = smul.u32 16, %s3561
          %s3564 = ssub.s32 2048, 2048
          %3565 = vsyncadd %s3553, %s3564
          %s3566 = smul.addr %s3562, 128
          %s3567 = scalar_lea.hbm %s8, %s3566
          %s3568 = sshll.u32 %s3556, 4
          %s3569 = int_to_ptr.vmem [resolvable:$true] %s3568
          %3574 = dma.vmem_to_hbm [thread:$0]  %s3569, 2048, %s3567, %s3553, 128, 128, 8
        $region88: #{tpu_custom_call.1} parent=43 // pred_fallthru
          _
      $region44: #{tpu_custom_call.1} parent=5 // pred_fallthru
        _
      %p3575 = scmp.le.s32.totalorder 2, %s21
      // Predicated region
      $region89: #{tpu_custom_call.1} parent=5 // pred_check
        %p3576 = pneg %p3575
      $region90: #{tpu_custom_call.1} parent=5 // pred_check_branch
        %3578 = sbr.rel (%p3576) target = $region92
      $region91: #{tpu_custom_call.1} parent=5 // pred_region
        %s3579 = ssub.s32 %s21, 2
        // Predicated region
        $region93: #{tpu_custom_call.1} parent=91 // pred_check
          %p3580 = pneg %p197
        $region94: #{tpu_custom_call.1} parent=91 // pred_check_branch
          %3582 = sbr.rel (%p3580) target = $region96
        $region95: #{tpu_custom_call.1} parent=91 // pred_region
          %s3583 = sand.u32 %s182, 1
          %s3584 = scalar_lea.sflag [#allocation7], %s3583
          %s3585 = sand.u32 %s182, 1
          %s3586 = smul.addr %s3585, 128
          %s3587 = scalar_lea.vmem [#allocation11], %s3586
          %3588 = dma.done %s3584, 2048
        $region96: #{tpu_custom_call.1} parent=91 // pred_fallthru
          _
      $region92: #{tpu_custom_call.1} parent=5 // pred_fallthru
        _
    $region6: #{tpu_custom_call.1} parent=1 // loop_footer
      %s25 = sadd.s32 1, %s21
    $region7: #{tpu_custom_call.1} parent=1 // loop_footer_branch
      %20 = sbr.rel target = $region3
    $region8: #{tpu_custom_call.1} parent=1 // loop_exit
      _
    %3589 = vsyncpa [#allocation6], 1
    %s3590 = scalar_lea.sflag [#allocation6], 1
    %3591 = vsyncpa %s3590, 1
    %3592 = vsyncpa [#allocation9], 1
    %3593 = vsyncpa [#allocation7], 1
    %s3594 = scalar_lea.sflag [#allocation7], 1
    %3595 = vsyncpa %s3594, 1
  %3596 = vsyncmov [#allocation3]
  %s3597 = vpop.sfrf %3596
  %p3598 = scmp.eq.s32.totalorder %s3597, 0
  %p3599 = pneg %p3598
  %3601 = shalt.err (%p3599)
  %s3602 = scalar_lea.sflag [#allocation3], 1
  %3603 = vsyncmov %s3602
  %s3604 = vpop.sfrf %3603
  %p3605 = scmp.eq.s32.totalorder %s3604, 0
  %p3606 = pneg %p3605
  %3608 = shalt.err (%p3606)

</llo_original>
